<compile_context>
chip_gen: v7x
topology: tpu7x:2x2x1
jax: 0.10.0
libtpu: 0.0.40
codegen_flags: <defaults>
</compile_context>

<pallas_src>
import jax
import jax.numpy as jnp
from jax.experimental import pallas as pl
from jax.experimental.pallas import tpu as pltpu

N_STATES = 1049
N_HIDDEN = 500
N_ACTIONS = 1049

# Lane-aligned (multiple-of-128) padded sizes.
D_IN = 1152    # 9 * 128
D_HID = 512    # 4 * 128
D_OUT = 1152   # 9 * 128


def _round_up(v, m):
    return ((v + m - 1) // m) * m


def _net_kernel(x_ref, w1_ref, b1_ref, w2_ref, b2_ref, out_ref):
    # fc1: bf16 MXU matmul with f32 accumulation; bias + sigmoid in f32.
    h = jnp.dot(x_ref[...], w1_ref[...], preferred_element_type=jnp.float32)
    h = jax.nn.sigmoid(h + b1_ref[...])            # b1 is (1, D_HID), broadcasts
    # dropout -> identity (eval mode).
    # out layer: cast activations to bf16 only as the matmul LHS.
    o = jnp.dot(h.astype(jnp.bfloat16), w2_ref[...],
                preferred_element_type=jnp.float32)
    # bf16 output (halves the dominant HBM output stream at large batch).
    out_ref[...] = jax.nn.sigmoid(o + b2_ref[...]).astype(out_ref.dtype)


def prepare_params(w1, b1, w2, b2):
    """Zero-pad to lane-aligned shapes and cast weights to bf16 (done once).

    w1: (N_STATES, N_HIDDEN) -> (D_IN, D_HID) bf16
    w2: (N_HIDDEN, N_ACTIONS) -> (D_HID, D_OUT) bf16
    Padded hidden rows of w2 are zero, so the sigmoid(0)=0.5 values appearing
    in the padded hidden lanes contribute nothing to the output.
    """
    w1p = jnp.pad(w1, ((0, D_IN - N_STATES), (0, D_HID - N_HIDDEN))
                  ).astype(jnp.bfloat16)
    w2p = jnp.pad(w2, ((0, D_HID - N_HIDDEN), (0, D_OUT - N_ACTIONS))
                  ).astype(jnp.bfloat16)
    b1p = jnp.pad(b1, (0, D_HID - N_HIDDEN)).reshape(1, D_HID).astype(jnp.float32)
    b2p = jnp.pad(b2, (0, D_OUT - N_ACTIONS)).reshape(1, D_OUT).astype(jnp.float32)
    return w1p, b1p, w2p, b2p


def net_forward(x, w1p, b1p, w2p, b2p):
    """x: (B, N_STATES) f32 or bf16; returns action_value: (B, N_ACTIONS) bf16.

    Pass x already in bf16 from the producer to halve the (single, fused)
    wrapper pad+cast pass at large batch.
    """
    B = x.shape[0]
    # Batch tile: 256 rows at large batch (fills the 256-wide MXU, amortizes
    # per-step overhead), else the smallest 16-row-aligned tile covering B
    # (full bf16 sublane packing even at tiny DQN batches).
    TB = 256 if B >= 256 else max(16, _round_up(B, 16))
    B_pad = _round_up(B, TB)

    # Single fused XLA pass (pad + cast). No-op padding when B is TB-aligned
    # and x is already bf16.
    x_p = jnp.pad(x, ((0, B_pad - B), (0, D_IN - N_STATES))).astype(jnp.bfloat16)

    out_p = pl.pallas_call(
        _net_kernel,
        out_shape=jax.ShapeDtypeStruct((B_pad, D_OUT), jnp.bfloat16),
        grid_spec=pltpu.PrefetchScalarGridSpec(
            num_scalar_prefetch=0,
            grid=(B_pad // TB,),
            in_specs=[
                pl.BlockSpec((TB, D_IN), lambda i: (i, 0)),      # x tile streams
                pl.BlockSpec((D_IN, D_HID), lambda i: (0, 0)),   # w1 resident
                pl.BlockSpec((1, D_HID), lambda i: (0, 0)),      # b1 resident
                pl.BlockSpec((D_HID, D_OUT), lambda i: (0, 0)),  # w2 resident
                pl.BlockSpec((1, D_OUT), lambda i: (0, 0)),      # b2 resident
            ],
            out_specs=pl.BlockSpec((TB, D_OUT), lambda i: (i, 0)),
        ),
        compiler_params=pltpu.CompilerParams(
            # Batch tiles are independent -> megacore split on v7x (2 TCs).
            dimension_semantics=("parallel",),
        ),
    )(x_p, w1p, b1p, w2p, b2p)

    return out_p[:B, :N_ACTIONS]


def init_params(key):
    """Matches the PyTorch __init__: weights ~ Normal(0, 0.1), biases = 0.
    Weights kept as (in_features, out_features) so the kernel does x @ W."""
    k1, k2 = jax.random.split(key)
    w1 = 0.1 * jax.random.normal(k1, (N_STATES, N_HIDDEN), dtype=jnp.float32)
    b1 = jnp.zeros((N_HIDDEN,), dtype=jnp.float32)
    w2 = 0.1 * jax.random.normal(k2, (N_HIDDEN, N_ACTIONS), dtype=jnp.float32)
    b2 = jnp.zeros((N_ACTIONS,), dtype=jnp.float32)
    return w1, b1, w2, b2


if __name__ == "__main__":
    key = jax.random.PRNGKey(0)
    kx, kp = jax.random.split(key)

    B = 2
    x = jax.random.normal(kx, (B, N_STATES), dtype=jnp.float32)
    w1, b1, w2, b2 = init_params(kp)
    w1p, b1p, w2p, b2p = prepare_params(w1, b1, w2, b2)   # one-time pad + bf16 cast

    action_value = jax.jit(net_forward)(x, w1p, b1p, w2p, b2p)
    jax.block_until_ready(action_value)

    # Sanity check against plain-JAX f32 reference.
    # bf16 weights + bf16 activations/output -> ~1e-2 absolute tolerance band.
    ref = jax.nn.sigmoid(jax.nn.sigmoid(x @ w1 + b1) @ w2 + b2)
    assert action_value.shape == (B, N_ACTIONS)
    assert action_value.dtype == jnp.bfloat16
    err = jnp.max(jnp.abs(action_value.astype(jnp.float32) - ref))
    assert err < 3e-2, err

    print("KERNEL_OK")
</pallas_src>

<mosaic_0001>
module attributes {stable_mosaic.version = 11 : i64} {
  func.func @_net_kernel(%arg0: i32, %arg1: memref<16x1152xbf16, #tpu.memory_space<vmem>>, %arg2: memref<1152x512xbf16, #tpu.memory_space<vmem>>, %arg3: memref<1x512xf32, #tpu.memory_space<vmem>>, %arg4: memref<512x1152xbf16, #tpu.memory_space<vmem>>, %arg5: memref<1x1152xf32, #tpu.memory_space<vmem>>, %arg6: memref<16x1152xbf16, #tpu.memory_space<vmem>>) attributes {dimension_semantics = [#tpu.dimension_semantics<parallel>], iteration_bounds = array<i64: 1>, scalar_prefetch = 0 : i64, scratch_operands = 0 : i64, tpu.core_type = #tpu.core_type<tc>, window_params = [{transform_indices = @transform_0, window_bounds = array<i64: 16, 1152>}, {pipeline_mode = #tpu.pipeline_mode<synchronous>, transform_indices = @transform_1, window_bounds = array<i64: 1152, 512>}, {pipeline_mode = #tpu.pipeline_mode<synchronous>, transform_indices = @transform_2, window_bounds = array<i64: 1, 512>}, {pipeline_mode = #tpu.pipeline_mode<synchronous>, transform_indices = @transform_3, window_bounds = array<i64: 512, 1152>}, {pipeline_mode = #tpu.pipeline_mode<synchronous>, transform_indices = @transform_4, window_bounds = array<i64: 1, 1152>}, {transform_indices = @transform_5, window_bounds = array<i64: 16, 1152>}]} {
    %c0 = arith.constant 0 : index
    %c0_0 = arith.constant 0 : index
    %0 = vector.load %arg1[%c0, %c0_0] : memref<16x1152xbf16, #tpu.memory_space<vmem>>, vector<16x1152xbf16>
    %c0_1 = arith.constant 0 : index
    %c0_2 = arith.constant 0 : index
    %1 = vector.load %arg2[%c0_1, %c0_2] : memref<1152x512xbf16, #tpu.memory_space<vmem>>, vector<1152x512xbf16>
    %cst = arith.constant dense<0.000000e+00> : vector<16x512xf32>
    %2 = tpu.matmul %0, %1, %cst {dimension_numbers = #tpu.dot_dimension_numbers<[1], [0], [0], [1], [0, 0, 1, 1], [], []>} : vector<16x1152xbf16>, vector<1152x512xbf16>, vector<16x512xf32> -> vector<16x512xf32>
    %c0_3 = arith.constant 0 : index
    %c0_4 = arith.constant 0 : index
    %3 = vector.load %arg3[%c0_3, %c0_4] : memref<1x512xf32, #tpu.memory_space<vmem>>, vector<1x512xf32>
    %4 = vector.broadcast %3 : vector<1x512xf32> to vector<16x512xf32>
    %5 = arith.addf %2, %4 : vector<16x512xf32>
    %6 = arith.negf %5 : vector<16x512xf32>
    %7 = math.exp %6 : vector<16x512xf32>
    %cst_5 = arith.constant 1.000000e+00 : f32
    %8 = vector.broadcast %cst_5 : f32 to vector<16x512xf32>
    %9 = arith.addf %8, %7 : vector<16x512xf32>
    %10 = arith.divf %8, %9 : vector<16x512xf32>
    %11 = arith.truncf %10 : vector<16x512xf32> to vector<16x512xbf16>
    %c0_6 = arith.constant 0 : index
    %c0_7 = arith.constant 0 : index
    %12 = vector.load %arg4[%c0_6, %c0_7] : memref<512x1152xbf16, #tpu.memory_space<vmem>>, vector<512x1152xbf16>
    %cst_8 = arith.constant dense<0.000000e+00> : vector<16x1152xf32>
    %13 = tpu.matmul %11, %12, %cst_8 {dimension_numbers = #tpu.dot_dimension_numbers<[1], [0], [0], [1], [0, 0, 1, 1], [], []>} : vector<16x512xbf16>, vector<512x1152xbf16>, vector<16x1152xf32> -> vector<16x1152xf32>
    %c0_9 = arith.constant 0 : index
    %c0_10 = arith.constant 0 : index
    %14 = vector.load %arg5[%c0_9, %c0_10] : memref<1x1152xf32, #tpu.memory_space<vmem>>, vector<1x1152xf32>
    %15 = vector.broadcast %14 : vector<1x1152xf32> to vector<16x1152xf32>
    %16 = arith.addf %13, %15 : vector<16x1152xf32>
    %17 = arith.negf %16 : vector<16x1152xf32>
    %18 = math.exp %17 : vector<16x1152xf32>
    %cst_11 = arith.constant 1.000000e+00 : f32
    %19 = vector.broadcast %cst_11 : f32 to vector<16x1152xf32>
    %20 = arith.addf %19, %18 : vector<16x1152xf32>
    %21 = arith.divf %19, %20 : vector<16x1152xf32>
    %22 = arith.truncf %21 : vector<16x1152xf32> to vector<16x1152xbf16>
    %c0_12 = arith.constant 0 : index
    %c0_13 = arith.constant 0 : index
    %23 = vector.load %arg6[%c0_12, %c0_13] : memref<16x1152xbf16, #tpu.memory_space<vmem>>, vector<16x1152xbf16>
    tpu.vector_store %arg6[%c0_12, %c0_13], %22 {strides = array<i32>} : memref<16x1152xbf16, #tpu.memory_space<vmem>>, vector<16x1152xbf16>,
    return
  }
  func.func @transform_0(%arg0: i32) -> (i32, i32) {
    %c0_i32 = arith.constant 0 : i32
    %c0_i32_0 = arith.constant 0 : i32
    return %arg0, %c0_i32 : i32, i32
  }
  func.func @transform_1(%arg0: i32) -> (i32, i32) {
    %c0_i32 = arith.constant 0 : i32
    %c0_i32_0 = arith.constant 0 : i32
    %c0_i32_1 = arith.constant 0 : i32
    return %c0_i32, %c0_i32_0 : i32, i32
  }
  func.func @transform_2(%arg0: i32) -> (i32, i32) {
    %c0_i32 = arith.constant 0 : i32
    %c0_i32_0 = arith.constant 0 : i32
    %c0_i32_1 = arith.constant 0 : i32
    return %c0_i32, %c0_i32_0 : i32, i32
  }
  func.func @transform_3(%arg0: i32) -> (i32, i32) {
    %c0_i32 = arith.constant 0 : i32
    %c0_i32_0 = arith.constant 0 : i32
    %c0_i32_1 = arith.constant 0 : i32
    return %c0_i32, %c0_i32_0 : i32, i32
  }
  func.func @transform_4(%arg0: i32) -> (i32, i32) {
    %c0_i32 = arith.constant 0 : i32
    %c0_i32_0 = arith.constant 0 : i32
    %c0_i32_1 = arith.constant 0 : i32
    return %c0_i32, %c0_i32_0 : i32, i32
  }
  func.func @transform_5(%arg0: i32) -> (i32, i32) {
    %c0_i32 = arith.constant 0 : i32
    %c0_i32_0 = arith.constant 0 : i32
    return %arg0, %c0_i32 : i32, i32
  }
}

</mosaic_0001>

<llo_original>
// kernel: net_forward.1
$region0: #{net_forward.1}
  #allocation0 [shape = 'u32[]', space=smem, size = 0x4, offset = 0x4, fixed_abs, tag = 'smem constant byte address 0x4 - core index']
  #allocation1 [shape = 'u32[144,128]{1,0:T(1,128)}', space=vmem, size = 0x12000, scoped, tag = 'internal scratch']
  %s0 = inlined_call_operand.vmem [shape: bf16[16,1152], index: 0, kind: input, shape index: {}]
  %s1 = inlined_call_operand.hbm [shape: bf16[1152,512], index: 1, kind: input, shape index: {}]
  %s2 = inlined_call_operand.hbm [shape: f32[1,512], index: 2, kind: input, shape index: {}]
  %s3 = inlined_call_operand.hbm [shape: bf16[512,1152], index: 3, kind: input, shape index: {}]
  %s4 = inlined_call_operand.hbm [shape: f32[1,1152], index: 4, kind: input, shape index: {}]
  %s5 = inlined_call_operand.vmem [shape: bf16[16,1152], index: 5, kind: output, shape index: {}]
  %s6 = sld [smem:[#allocation0]]
  $region46: #{net_forward.1} parent=0
    _
  %s8 = ssub.s32 1, %s6
  %s9 = scalar_select 0, %s8, %s6
  $region1: #{net_forward.1} parent=0
    #allocation2 [shape = 'u8[1179648]{0}', space=vmem, size = 0x120000, scoped, tag = 'input window, operand 1, single buffered']
    #allocation3 [shape = 's32[1]{0}', space=sflag, size = 0x4, scoped, tag = 'scoped memory for net_forward.1']
    #allocation4 [shape = 'u8[2048]{0}', space=vmem, size = 0x800, scoped, tag = 'input window, operand 2, single buffered']
    #allocation5 [shape = 's32[1]{0}', space=sflag, size = 0x4, scoped, tag = 'scoped memory for net_forward.1']
    #allocation6 [shape = 'u8[1179648]{0}', space=vmem, size = 0x120000, scoped, tag = 'input window, operand 3, single buffered']
    #allocation7 [shape = 'u8[4608]{0}', space=vmem, size = 0x1400, scoped, tag = 'input window, operand 4, single buffered']
    #allocation8 [shape = 's32[1]{0}', space=sflag, size = 0x4, scoped, tag = 'scoped memory for net_forward.1']
    %10 = vsyncpa [#allocation3], 0
    %11 = vsyncpa [#allocation5], 0
    %12 = vsyncpa [#allocation8], 0
    // Predicated region
    $region2: #{net_forward.1} parent=1 // pred_check
      _
    $region3: #{net_forward.1} parent=1 // pred_check_branch
      %14 = sbr.rel (0) target = $region5
    $region4: #{net_forward.1} parent=1 // pred_region
      _
    $region5: #{net_forward.1} parent=1 // pred_fallthru
      _
    // Predicated region
    $region6: #{net_forward.1} parent=1 // pred_check
      _
    $region7: #{net_forward.1} parent=1 // pred_check_branch
      %16 = sbr.rel (0) target = $region9
    $region8: #{net_forward.1} parent=1 // pred_region
      %s18 = ssub.s32 36864, 36864
      %19 = vsyncadd [#allocation3], %s18
      %s20 = sshll.u32 [#allocation2], 4
      %s21 = int_to_ptr.vmem [resolvable:$true] %s20
      %26 = dma.hbm_to_vmem [thread:$0]  %s1, 36864, %s21, [#allocation3], 256, 256, 16
    $region9: #{net_forward.1} parent=1 // pred_fallthru
      _
    // Predicated region
    $region10: #{net_forward.1} parent=1 // pred_check
      _
    $region11: #{net_forward.1} parent=1 // pred_check_branch
      %28 = sbr.rel (0) target = $region13
    $region12: #{net_forward.1} parent=1 // pred_region
      %s30 = ssub.s32 64, 64
      %31 = vsyncadd [#allocation5], %s30
      %s33 = sshll.u32 [#allocation4], 4
      %s34 = int_to_ptr.vmem [resolvable:$true] %s33
      %36 = dma.hbm_to_vmem [thread:$0]  %s2, 64, %s34, [#allocation5]
    $region13: #{net_forward.1} parent=1 // pred_fallthru
      _
    // Predicated region
    $region14: #{net_forward.1} parent=1 // pred_check
      _
    $region15: #{net_forward.1} parent=1 // pred_check_branch
      %38 = sbr.rel (0) target = $region17
    $region16: #{net_forward.1} parent=1 // pred_region
      %s40 = ssub.s32 36864, 36864
      %41 = vsyncadd [#allocation5], %s40
      %s42 = sshll.u32 [#allocation6], 4
      %s43 = int_to_ptr.vmem [resolvable:$true] %s42
      %48 = dma.hbm_to_vmem [thread:$0]  %s3, 36864, %s43, [#allocation5], 576, 576, 36
    $region17: #{net_forward.1} parent=1 // pred_fallthru
      _
    // Predicated region
    $region18: #{net_forward.1} parent=1 // pred_check
      _
    $region19: #{net_forward.1} parent=1 // pred_check_branch
      %50 = sbr.rel (0) target = $region21
    $region20: #{net_forward.1} parent=1 // pred_region
      %s52 = ssub.s32 144, 144
      %53 = vsyncadd [#allocation8], %s52
      %s55 = sshll.u32 [#allocation7], 4
      %s56 = int_to_ptr.vmem [resolvable:$true] %s55
      %58 = dma.hbm_to_vmem [thread:$0]  %s4, 144, %s56, [#allocation8]
    $region21: #{net_forward.1} parent=1 // pred_fallthru
      _
    // Predicated region
    $region22: #{net_forward.1} parent=1 // pred_check
      _
    $region23: #{net_forward.1} parent=1 // pred_check_branch
      %60 = sbr.rel (0) target = $region25
    $region24: #{net_forward.1} parent=1 // pred_region
      %61 = dma.done [#allocation3], 36864
    $region25: #{net_forward.1} parent=1 // pred_fallthru
      _
    // Predicated region
    $region26: #{net_forward.1} parent=1 // pred_check
      _
    $region27: #{net_forward.1} parent=1 // pred_check_branch
      %63 = sbr.rel (0) target = $region29
    $region28: #{net_forward.1} parent=1 // pred_region
      %64 = dma.done [#allocation5], 64
    $region29: #{net_forward.1} parent=1 // pred_fallthru
      _
    // Predicated region
    $region30: #{net_forward.1} parent=1 // pred_check
      _
    $region31: #{net_forward.1} parent=1 // pred_check_branch
      %66 = sbr.rel (0) target = $region33
    $region32: #{net_forward.1} parent=1 // pred_region
      %67 = dma.done [#allocation5], 36864
    $region33: #{net_forward.1} parent=1 // pred_fallthru
      _
    // Predicated region
    $region34: #{net_forward.1} parent=1 // pred_check
      _
    $region35: #{net_forward.1} parent=1 // pred_check_branch
      %69 = sbr.rel (0) target = $region37
    $region36: #{net_forward.1} parent=1 // pred_region
      %70 = dma.done [#allocation8], 144
    $region37: #{net_forward.1} parent=1 // pred_fallthru
      _
    %v72 = vld [vmem:[%s0] sm:$0xff]
    %v73 = vld [vmem:[%s0 + $0x8] sm:$0xff]
    %v74 = vld [vmem:[%s0 + $0x10] sm:$0xff]
    %v75 = vld [vmem:[%s0 + $0x18] sm:$0xff]
    %v76 = vld [vmem:[%s0 + $0x20] sm:$0xf]
    %v77 = vld [vmem:[%s0 + $0x24] sm:$0xff]
    %v78 = vld [vmem:[%s0 + $0x2c] sm:$0xff]
    %v79 = vld [vmem:[%s0 + $0x34] sm:$0xff]
    %v80 = vld [vmem:[%s0 + $0x3c] sm:$0xff]
    %v81 = vld [vmem:[%s0 + $0x44] sm:$0xf]
    %v82 = vld [vmem:[#allocation2] sm:$0xff]
    %v83 = vld [vmem:[#allocation2 + $0x8] sm:$0xff]
    %v84 = vld [vmem:[#allocation2 + $0x10] sm:$0xff]
    %v85 = vld [vmem:[#allocation2 + $0x18] sm:$0xff]
    %v86 = vld [vmem:[#allocation2 + $0x20] sm:$0xff]
    %v87 = vld [vmem:[#allocation2 + $0x28] sm:$0xff]
    %v88 = vld [vmem:[#allocation2 + $0x30] sm:$0xff]
    %v89 = vld [vmem:[#allocation2 + $0x38] sm:$0xff]
    %v90 = vld [vmem:[#allocation2 + $0x40] sm:$0xff]
    %v91 = vld [vmem:[#allocation2 + $0x48] sm:$0xff]
    %v92 = vld [vmem:[#allocation2 + $0x50] sm:$0xff]
    %v93 = vld [vmem:[#allocation2 + $0x58] sm:$0xff]
    %v94 = vld [vmem:[#allocation2 + $0x60] sm:$0xff]
    %v95 = vld [vmem:[#allocation2 + $0x68] sm:$0xff]
    %v96 = vld [vmem:[#allocation2 + $0x70] sm:$0xff]
    %v97 = vld [vmem:[#allocation2 + $0x78] sm:$0xff]
    %v98 = vld [vmem:[#allocation2 + $0x80] sm:$0xff]
    %v99 = vld [vmem:[#allocation2 + $0x88] sm:$0xff]
    %v100 = vld [vmem:[#allocation2 + $0x90] sm:$0xff]
    %v101 = vld [vmem:[#allocation2 + $0x98] sm:$0xff]
    %v102 = vld [vmem:[#allocation2 + $0xa0] sm:$0xff]
    %v103 = vld [vmem:[#allocation2 + $0xa8] sm:$0xff]
    %v104 = vld [vmem:[#allocation2 + $0xb0] sm:$0xff]
    %v105 = vld [vmem:[#allocation2 + $0xb8] sm:$0xff]
    %v106 = vld [vmem:[#allocation2 + $0xc0] sm:$0xff]
    %v107 = vld [vmem:[#allocation2 + $0xc8] sm:$0xff]
    %v108 = vld [vmem:[#allocation2 + $0xd0] sm:$0xff]
    %v109 = vld [vmem:[#allocation2 + $0xd8] sm:$0xff]
    %v110 = vld [vmem:[#allocation2 + $0xe0] sm:$0xff]
    %v111 = vld [vmem:[#allocation2 + $0xe8] sm:$0xff]
    %v112 = vld [vmem:[#allocation2 + $0xf0] sm:$0xff]
    %v113 = vld [vmem:[#allocation2 + $0xf8] sm:$0xff]
    %v114 = vld [vmem:[#allocation2 + $0x100] sm:$0xff]
    %v115 = vld [vmem:[#allocation2 + $0x108] sm:$0xff]
    %v116 = vld [vmem:[#allocation2 + $0x110] sm:$0xff]
    %v117 = vld [vmem:[#allocation2 + $0x118] sm:$0xff]
    %v118 = vld [vmem:[#allocation2 + $0x120] sm:$0xff]
    %v119 = vld [vmem:[#allocation2 + $0x128] sm:$0xff]
    %v120 = vld [vmem:[#allocation2 + $0x130] sm:$0xff]
    %v121 = vld [vmem:[#allocation2 + $0x138] sm:$0xff]
    %v122 = vld [vmem:[#allocation2 + $0x140] sm:$0xff]
    %v123 = vld [vmem:[#allocation2 + $0x148] sm:$0xff]
    %v124 = vld [vmem:[#allocation2 + $0x150] sm:$0xff]
    %v125 = vld [vmem:[#allocation2 + $0x158] sm:$0xff]
    %v126 = vld [vmem:[#allocation2 + $0x160] sm:$0xff]
    %v127 = vld [vmem:[#allocation2 + $0x168] sm:$0xff]
    %v128 = vld [vmem:[#allocation2 + $0x170] sm:$0xff]
    %v129 = vld [vmem:[#allocation2 + $0x178] sm:$0xff]
    %v130 = vld [vmem:[#allocation2 + $0x180] sm:$0xff]
    %v131 = vld [vmem:[#allocation2 + $0x188] sm:$0xff]
    %v132 = vld [vmem:[#allocation2 + $0x190] sm:$0xff]
    %v133 = vld [vmem:[#allocation2 + $0x198] sm:$0xff]
    %v134 = vld [vmem:[#allocation2 + $0x1a0] sm:$0xff]
    %v135 = vld [vmem:[#allocation2 + $0x1a8] sm:$0xff]
    %v136 = vld [vmem:[#allocation2 + $0x1b0] sm:$0xff]
    %v137 = vld [vmem:[#allocation2 + $0x1b8] sm:$0xff]
    %v138 = vld [vmem:[#allocation2 + $0x1c0] sm:$0xff]
    %v139 = vld [vmem:[#allocation2 + $0x1c8] sm:$0xff]
    %v140 = vld [vmem:[#allocation2 + $0x1d0] sm:$0xff]
    %v141 = vld [vmem:[#allocation2 + $0x1d8] sm:$0xff]
    %v142 = vld [vmem:[#allocation2 + $0x1e0] sm:$0xff]
    %v143 = vld [vmem:[#allocation2 + $0x1e8] sm:$0xff]
    %v144 = vld [vmem:[#allocation2 + $0x1f0] sm:$0xff]
    %v145 = vld [vmem:[#allocation2 + $0x1f8] sm:$0xff]
    %v146 = vld [vmem:[#allocation2 + $0x200] sm:$0xff]
    %v147 = vld [vmem:[#allocation2 + $0x208] sm:$0xff]
    %v148 = vld [vmem:[#allocation2 + $0x210] sm:$0xff]
    %v149 = vld [vmem:[#allocation2 + $0x218] sm:$0xff]
    %v150 = vld [vmem:[#allocation2 + $0x220] sm:$0xff]
    %v151 = vld [vmem:[#allocation2 + $0x228] sm:$0xff]
    %v152 = vld [vmem:[#allocation2 + $0x230] sm:$0xff]
    %v153 = vld [vmem:[#allocation2 + $0x238] sm:$0xff]
    %v154 = vld [vmem:[#allocation2 + $0x240] sm:$0xff]
    %v155 = vld [vmem:[#allocation2 + $0x248] sm:$0xff]
    %v156 = vld [vmem:[#allocation2 + $0x250] sm:$0xff]
    %v157 = vld [vmem:[#allocation2 + $0x258] sm:$0xff]
    %v158 = vld [vmem:[#allocation2 + $0x260] sm:$0xff]
    %v159 = vld [vmem:[#allocation2 + $0x268] sm:$0xff]
    %v160 = vld [vmem:[#allocation2 + $0x270] sm:$0xff]
    %v161 = vld [vmem:[#allocation2 + $0x278] sm:$0xff]
    %v162 = vld [vmem:[#allocation2 + $0x280] sm:$0xff]
    %v163 = vld [vmem:[#allocation2 + $0x288] sm:$0xff]
    %v164 = vld [vmem:[#allocation2 + $0x290] sm:$0xff]
    %v165 = vld [vmem:[#allocation2 + $0x298] sm:$0xff]
    %v166 = vld [vmem:[#allocation2 + $0x2a0] sm:$0xff]
    %v167 = vld [vmem:[#allocation2 + $0x2a8] sm:$0xff]
    %v168 = vld [vmem:[#allocation2 + $0x2b0] sm:$0xff]
    %v169 = vld [vmem:[#allocation2 + $0x2b8] sm:$0xff]
    %v170 = vld [vmem:[#allocation2 + $0x2c0] sm:$0xff]
    %v171 = vld [vmem:[#allocation2 + $0x2c8] sm:$0xff]
    %v172 = vld [vmem:[#allocation2 + $0x2d0] sm:$0xff]
    %v173 = vld [vmem:[#allocation2 + $0x2d8] sm:$0xff]
    %v174 = vld [vmem:[#allocation2 + $0x2e0] sm:$0xff]
    %v175 = vld [vmem:[#allocation2 + $0x2e8] sm:$0xff]
    %v176 = vld [vmem:[#allocation2 + $0x2f0] sm:$0xff]
    %v177 = vld [vmem:[#allocation2 + $0x2f8] sm:$0xff]
    %v178 = vld [vmem:[#allocation2 + $0x300] sm:$0xff]
    %v179 = vld [vmem:[#allocation2 + $0x308] sm:$0xff]
    %v180 = vld [vmem:[#allocation2 + $0x310] sm:$0xff]
    %v181 = vld [vmem:[#allocation2 + $0x318] sm:$0xff]
    %v182 = vld [vmem:[#allocation2 + $0x320] sm:$0xff]
    %v183 = vld [vmem:[#allocation2 + $0x328] sm:$0xff]
    %v184 = vld [vmem:[#allocation2 + $0x330] sm:$0xff]
    %v185 = vld [vmem:[#allocation2 + $0x338] sm:$0xff]
    %v186 = vld [vmem:[#allocation2 + $0x340] sm:$0xff]
    %v187 = vld [vmem:[#allocation2 + $0x348] sm:$0xff]
    %v188 = vld [vmem:[#allocation2 + $0x350] sm:$0xff]
    %v189 = vld [vmem:[#allocation2 + $0x358] sm:$0xff]
    %v190 = vld [vmem:[#allocation2 + $0x360] sm:$0xff]
    %v191 = vld [vmem:[#allocation2 + $0x368] sm:$0xff]
    %v192 = vld [vmem:[#allocation2 + $0x370] sm:$0xff]
    %v193 = vld [vmem:[#allocation2 + $0x378] sm:$0xff]
    %v194 = vld [vmem:[#allocation2 + $0x380] sm:$0xff]
    %v195 = vld [vmem:[#allocation2 + $0x388] sm:$0xff]
    %v196 = vld [vmem:[#allocation2 + $0x390] sm:$0xff]
    %v197 = vld [vmem:[#allocation2 + $0x398] sm:$0xff]
    %v198 = vld [vmem:[#allocation2 + $0x3a0] sm:$0xff]
    %v199 = vld [vmem:[#allocation2 + $0x3a8] sm:$0xff]
    %v200 = vld [vmem:[#allocation2 + $0x3b0] sm:$0xff]
    %v201 = vld [vmem:[#allocation2 + $0x3b8] sm:$0xff]
    %v202 = vld [vmem:[#allocation2 + $0x3c0] sm:$0xff]
    %v203 = vld [vmem:[#allocation2 + $0x3c8] sm:$0xff]
    %v204 = vld [vmem:[#allocation2 + $0x3d0] sm:$0xff]
    %v205 = vld [vmem:[#allocation2 + $0x3d8] sm:$0xff]
    %v206 = vld [vmem:[#allocation2 + $0x3e0] sm:$0xff]
    %v207 = vld [vmem:[#allocation2 + $0x3e8] sm:$0xff]
    %v208 = vld [vmem:[#allocation2 + $0x3f0] sm:$0xff]
    %v209 = vld [vmem:[#allocation2 + $0x3f8] sm:$0xff]
    %v210 = vld [vmem:[#allocation2 + $0x400] sm:$0xff]
    %v211 = vld [vmem:[#allocation2 + $0x408] sm:$0xff]
    %v212 = vld [vmem:[#allocation2 + $0x410] sm:$0xff]
    %v213 = vld [vmem:[#allocation2 + $0x418] sm:$0xff]
    %v214 = vld [vmem:[#allocation2 + $0x420] sm:$0xff]
    %v215 = vld [vmem:[#allocation2 + $0x428] sm:$0xff]
    %v216 = vld [vmem:[#allocation2 + $0x430] sm:$0xff]
    %v217 = vld [vmem:[#allocation2 + $0x438] sm:$0xff]
    %v218 = vld [vmem:[#allocation2 + $0x440] sm:$0xff]
    %v219 = vld [vmem:[#allocation2 + $0x448] sm:$0xff]
    %v220 = vld [vmem:[#allocation2 + $0x450] sm:$0xff]
    %v221 = vld [vmem:[#allocation2 + $0x458] sm:$0xff]
    %v222 = vld [vmem:[#allocation2 + $0x460] sm:$0xff]
    %v223 = vld [vmem:[#allocation2 + $0x468] sm:$0xff]
    %v224 = vld [vmem:[#allocation2 + $0x470] sm:$0xff]
    %v225 = vld [vmem:[#allocation2 + $0x478] sm:$0xff]
    %v226 = vld [vmem:[#allocation2 + $0x480] sm:$0xff]
    %v227 = vld [vmem:[#allocation2 + $0x488] sm:$0xff]
    %v228 = vld [vmem:[#allocation2 + $0x490] sm:$0xff]
    %v229 = vld [vmem:[#allocation2 + $0x498] sm:$0xff]
    %v230 = vld [vmem:[#allocation2 + $0x4a0] sm:$0xff]
    %v231 = vld [vmem:[#allocation2 + $0x4a8] sm:$0xff]
    %v232 = vld [vmem:[#allocation2 + $0x4b0] sm:$0xff]
    %v233 = vld [vmem:[#allocation2 + $0x4b8] sm:$0xff]
    %v234 = vld [vmem:[#allocation2 + $0x4c0] sm:$0xff]
    %v235 = vld [vmem:[#allocation2 + $0x4c8] sm:$0xff]
    %v236 = vld [vmem:[#allocation2 + $0x4d0] sm:$0xff]
    %v237 = vld [vmem:[#allocation2 + $0x4d8] sm:$0xff]
    %v238 = vld [vmem:[#allocation2 + $0x4e0] sm:$0xff]
    %v239 = vld [vmem:[#allocation2 + $0x4e8] sm:$0xff]
    %v240 = vld [vmem:[#allocation2 + $0x4f0] sm:$0xff]
    %v241 = vld [vmem:[#allocation2 + $0x4f8] sm:$0xff]
    %v242 = vld [vmem:[#allocation2 + $0x500] sm:$0xff]
    %v243 = vld [vmem:[#allocation2 + $0x508] sm:$0xff]
    %v244 = vld [vmem:[#allocation2 + $0x510] sm:$0xff]
    %v245 = vld [vmem:[#allocation2 + $0x518] sm:$0xff]
    %v246 = vld [vmem:[#allocation2 + $0x520] sm:$0xff]
    %v247 = vld [vmem:[#allocation2 + $0x528] sm:$0xff]
    %v248 = vld [vmem:[#allocation2 + $0x530] sm:$0xff]
    %v249 = vld [vmem:[#allocation2 + $0x538] sm:$0xff]
    %v250 = vld [vmem:[#allocation2 + $0x540] sm:$0xff]
    %v251 = vld [vmem:[#allocation2 + $0x548] sm:$0xff]
    %v252 = vld [vmem:[#allocation2 + $0x550] sm:$0xff]
    %v253 = vld [vmem:[#allocation2 + $0x558] sm:$0xff]
    %v254 = vld [vmem:[#allocation2 + $0x560] sm:$0xff]
    %v255 = vld [vmem:[#allocation2 + $0x568] sm:$0xff]
    %v256 = vld [vmem:[#allocation2 + $0x570] sm:$0xff]
    %v257 = vld [vmem:[#allocation2 + $0x578] sm:$0xff]
    %v258 = vld [vmem:[#allocation2 + $0x580] sm:$0xff]
    %v259 = vld [vmem:[#allocation2 + $0x588] sm:$0xff]
    %v260 = vld [vmem:[#allocation2 + $0x590] sm:$0xff]
    %v261 = vld [vmem:[#allocation2 + $0x598] sm:$0xff]
    %v262 = vld [vmem:[#allocation2 + $0x5a0] sm:$0xff]
    %v263 = vld [vmem:[#allocation2 + $0x5a8] sm:$0xff]
    %v264 = vld [vmem:[#allocation2 + $0x5b0] sm:$0xff]
    %v265 = vld [vmem:[#allocation2 + $0x5b8] sm:$0xff]
    %v266 = vld [vmem:[#allocation2 + $0x5c0] sm:$0xff]
    %v267 = vld [vmem:[#allocation2 + $0x5c8] sm:$0xff]
    %v268 = vld [vmem:[#allocation2 + $0x5d0] sm:$0xff]
    %v269 = vld [vmem:[#allocation2 + $0x5d8] sm:$0xff]
    %v270 = vld [vmem:[#allocation2 + $0x5e0] sm:$0xff]
    %v271 = vld [vmem:[#allocation2 + $0x5e8] sm:$0xff]
    %v272 = vld [vmem:[#allocation2 + $0x5f0] sm:$0xff]
    %v273 = vld [vmem:[#allocation2 + $0x5f8] sm:$0xff]
    %v274 = vld [vmem:[#allocation2 + $0x600] sm:$0xff]
    %v275 = vld [vmem:[#allocation2 + $0x608] sm:$0xff]
    %v276 = vld [vmem:[#allocation2 + $0x610] sm:$0xff]
    %v277 = vld [vmem:[#allocation2 + $0x618] sm:$0xff]
    %v278 = vld [vmem:[#allocation2 + $0x620] sm:$0xff]
    %v279 = vld [vmem:[#allocation2 + $0x628] sm:$0xff]
    %v280 = vld [vmem:[#allocation2 + $0x630] sm:$0xff]
    %v281 = vld [vmem:[#allocation2 + $0x638] sm:$0xff]
    %v282 = vld [vmem:[#allocation2 + $0x640] sm:$0xff]
    %v283 = vld [vmem:[#allocation2 + $0x648] sm:$0xff]
    %v284 = vld [vmem:[#allocation2 + $0x650] sm:$0xff]
    %v285 = vld [vmem:[#allocation2 + $0x658] sm:$0xff]
    %v286 = vld [vmem:[#allocation2 + $0x660] sm:$0xff]
    %v287 = vld [vmem:[#allocation2 + $0x668] sm:$0xff]
    %v288 = vld [vmem:[#allocation2 + $0x670] sm:$0xff]
    %v289 = vld [vmem:[#allocation2 + $0x678] sm:$0xff]
    %v290 = vld [vmem:[#allocation2 + $0x680] sm:$0xff]
    %v291 = vld [vmem:[#allocation2 + $0x688] sm:$0xff]
    %v292 = vld [vmem:[#allocation2 + $0x690] sm:$0xff]
    %v293 = vld [vmem:[#allocation2 + $0x698] sm:$0xff]
    %v294 = vld [vmem:[#allocation2 + $0x6a0] sm:$0xff]
    %v295 = vld [vmem:[#allocation2 + $0x6a8] sm:$0xff]
    %v296 = vld [vmem:[#allocation2 + $0x6b0] sm:$0xff]
    %v297 = vld [vmem:[#allocation2 + $0x6b8] sm:$0xff]
    %v298 = vld [vmem:[#allocation2 + $0x6c0] sm:$0xff]
    %v299 = vld [vmem:[#allocation2 + $0x6c8] sm:$0xff]
    %v300 = vld [vmem:[#allocation2 + $0x6d0] sm:$0xff]
    %v301 = vld [vmem:[#allocation2 + $0x6d8] sm:$0xff]
    %v302 = vld [vmem:[#allocation2 + $0x6e0] sm:$0xff]
    %v303 = vld [vmem:[#allocation2 + $0x6e8] sm:$0xff]
    %v304 = vld [vmem:[#allocation2 + $0x6f0] sm:$0xff]
    %v305 = vld [vmem:[#allocation2 + $0x6f8] sm:$0xff]
    %v306 = vld [vmem:[#allocation2 + $0x700] sm:$0xff]
    %v307 = vld [vmem:[#allocation2 + $0x708] sm:$0xff]
    %v308 = vld [vmem:[#allocation2 + $0x710] sm:$0xff]
    %v309 = vld [vmem:[#allocation2 + $0x718] sm:$0xff]
    %v310 = vld [vmem:[#allocation2 + $0x720] sm:$0xff]
    %v311 = vld [vmem:[#allocation2 + $0x728] sm:$0xff]
    %v312 = vld [vmem:[#allocation2 + $0x730] sm:$0xff]
    %v313 = vld [vmem:[#allocation2 + $0x738] sm:$0xff]
    %v314 = vld [vmem:[#allocation2 + $0x740] sm:$0xff]
    %v315 = vld [vmem:[#allocation2 + $0x748] sm:$0xff]
    %v316 = vld [vmem:[#allocation2 + $0x750] sm:$0xff]
    %v317 = vld [vmem:[#allocation2 + $0x758] sm:$0xff]
    %v318 = vld [vmem:[#allocation2 + $0x760] sm:$0xff]
    %v319 = vld [vmem:[#allocation2 + $0x768] sm:$0xff]
    %v320 = vld [vmem:[#allocation2 + $0x770] sm:$0xff]
    %v321 = vld [vmem:[#allocation2 + $0x778] sm:$0xff]
    %v322 = vld [vmem:[#allocation2 + $0x780] sm:$0xff]
    %v323 = vld [vmem:[#allocation2 + $0x788] sm:$0xff]
    %v324 = vld [vmem:[#allocation2 + $0x790] sm:$0xff]
    %v325 = vld [vmem:[#allocation2 + $0x798] sm:$0xff]
    %v326 = vld [vmem:[#allocation2 + $0x7a0] sm:$0xff]
    %v327 = vld [vmem:[#allocation2 + $0x7a8] sm:$0xff]
    %v328 = vld [vmem:[#allocation2 + $0x7b0] sm:$0xff]
    %v329 = vld [vmem:[#allocation2 + $0x7b8] sm:$0xff]
    %v330 = vld [vmem:[#allocation2 + $0x7c0] sm:$0xff]
    %v331 = vld [vmem:[#allocation2 + $0x7c8] sm:$0xff]
    %v332 = vld [vmem:[#allocation2 + $0x7d0] sm:$0xff]
    %v333 = vld [vmem:[#allocation2 + $0x7d8] sm:$0xff]
    %v334 = vld [vmem:[#allocation2 + $0x7e0] sm:$0xff]
    %v335 = vld [vmem:[#allocation2 + $0x7e8] sm:$0xff]
    %v336 = vld [vmem:[#allocation2 + $0x7f0] sm:$0xff]
    %v337 = vld [vmem:[#allocation2 + $0x7f8] sm:$0xff]
    %v338 = vld [vmem:[#allocation2 + $0x800] sm:$0xff]
    %v339 = vld [vmem:[#allocation2 + $0x808] sm:$0xff]
    %v340 = vld [vmem:[#allocation2 + $0x810] sm:$0xff]
    %v341 = vld [vmem:[#allocation2 + $0x818] sm:$0xff]
    %v342 = vld [vmem:[#allocation2 + $0x820] sm:$0xff]
    %v343 = vld [vmem:[#allocation2 + $0x828] sm:$0xff]
    %v344 = vld [vmem:[#allocation2 + $0x830] sm:$0xff]
    %v345 = vld [vmem:[#allocation2 + $0x838] sm:$0xff]
    %v346 = vld [vmem:[#allocation2 + $0x840] sm:$0xff]
    %v347 = vld [vmem:[#allocation2 + $0x848] sm:$0xff]
    %v348 = vld [vmem:[#allocation2 + $0x850] sm:$0xff]
    %v349 = vld [vmem:[#allocation2 + $0x858] sm:$0xff]
    %v350 = vld [vmem:[#allocation2 + $0x860] sm:$0xff]
    %v351 = vld [vmem:[#allocation2 + $0x868] sm:$0xff]
    %v352 = vld [vmem:[#allocation2 + $0x870] sm:$0xff]
    %v353 = vld [vmem:[#allocation2 + $0x878] sm:$0xff]
    %v354 = vld [vmem:[#allocation2 + $0x880] sm:$0xff]
    %v355 = vld [vmem:[#allocation2 + $0x888] sm:$0xff]
    %v356 = vld [vmem:[#allocation2 + $0x890] sm:$0xff]
    %v357 = vld [vmem:[#allocation2 + $0x898] sm:$0xff]
    %v358 = vld [vmem:[#allocation2 + $0x8a0] sm:$0xff]
    %v359 = vld [vmem:[#allocation2 + $0x8a8] sm:$0xff]
    %v360 = vld [vmem:[#allocation2 + $0x8b0] sm:$0xff]
    %v361 = vld [vmem:[#allocation2 + $0x8b8] sm:$0xff]
    %v362 = vld [vmem:[#allocation2 + $0x8c0] sm:$0xff]
    %v363 = vld [vmem:[#allocation2 + $0x8c8] sm:$0xff]
    %v364 = vld [vmem:[#allocation2 + $0x8d0] sm:$0xff]
    %v365 = vld [vmem:[#allocation2 + $0x8d8] sm:$0xff]
    %v366 = vld [vmem:[#allocation2 + $0x8e0] sm:$0xff]
    %v367 = vld [vmem:[#allocation2 + $0x8e8] sm:$0xff]
    %v368 = vld [vmem:[#allocation2 + $0x8f0] sm:$0xff]
    %v369 = vld [vmem:[#allocation2 + $0x8f8] sm:$0xff]
    %v370 = vld [vmem:[#allocation4] sm:$0xf]
    %v372 = vlaneseq
    %v373 = vshrl.u32 %v372, 7
    %v374 = vsub.s32 0, %v373
    %v375 = vrot.slane %v370, %v374
    %v376 = vlaneseq
    %v377 = vshrl.u32 %v376, 7
    %v378 = vsub.s32 1, %v377
    %v379 = vrot.slane %v370, %v378
    %v380 = vlaneseq
    %v381 = vshrl.u32 %v380, 7
    %v382 = vsub.s32 2, %v381
    %v383 = vrot.slane %v370, %v382
    %v384 = vlaneseq
    %v385 = vshrl.u32 %v384, 7
    %v386 = vsub.s32 3, %v385
    %v387 = vrot.slane %v370, %v386
    %v402 = vunpack.c.l.b16 %v72
    %v403 = vunpack.c.h.b16 %v72
    %v404 = vunpack.c.l.b16 %v73
    %v405 = vunpack.c.h.b16 %v73
    %v406 = vunpack.c.l.b16 %v74
    %v407 = vunpack.c.h.b16 %v74
    %v408 = vunpack.c.l.b16 %v75
    %v409 = vunpack.c.h.b16 %v75
    %v410 = vunpack.c.l.b16 %v76
    %v411 = vunpack.c.l.b16 %v77
    %v412 = vunpack.c.h.b16 %v77
    %v413 = vunpack.c.l.b16 %v78
    %v414 = vunpack.c.h.b16 %v78
    %v415 = vunpack.c.l.b16 %v79
    %v416 = vunpack.c.h.b16 %v79
    %v417 = vunpack.c.l.b16 %v80
    %v418 = vunpack.c.h.b16 %v80
    %v419 = vunpack.c.l.b16 %v81
    %v420 = vpack.c.b16 %v411, %v402
    %v421 = vpack.c.b16 %v412, %v403
    %v422 = vpack.c.b16 %v413, %v404
    %v423 = vpack.c.b16 %v414, %v405
    %v424 = vpack.c.b16 %v415, %v406
    %v425 = vpack.c.b16 %v416, %v407
    %v426 = vpack.c.b16 %v417, %v408
    %v427 = vpack.c.b16 %v418, %v409
    %v428 = vpack.c.b16 %v419, %v410
    %v726 = vunpack.c.l.b16 %v82
    %v727 = vunpack.c.h.b16 %v82
    %v728 = vunpack.c.l.b16 %v83
    %v729 = vunpack.c.h.b16 %v83
    %v730 = vunpack.c.l.b16 %v84
    %v731 = vunpack.c.h.b16 %v84
    %v732 = vunpack.c.l.b16 %v85
    %v733 = vunpack.c.h.b16 %v85
    %v734 = vunpack.c.l.b16 %v86
    %v735 = vunpack.c.h.b16 %v86
    %v736 = vunpack.c.l.b16 %v87
    %v737 = vunpack.c.h.b16 %v87
    %v738 = vunpack.c.l.b16 %v88
    %v739 = vunpack.c.h.b16 %v88
    %v740 = vunpack.c.l.b16 %v89
    %v741 = vunpack.c.h.b16 %v89
    %v742 = vunpack.c.l.b16 %v90
    %v743 = vunpack.c.h.b16 %v90
    %v744 = vunpack.c.l.b16 %v91
    %v745 = vunpack.c.h.b16 %v91
    %v746 = vunpack.c.l.b16 %v92
    %v747 = vunpack.c.h.b16 %v92
    %v748 = vunpack.c.l.b16 %v93
    %v749 = vunpack.c.h.b16 %v93
    %v750 = vunpack.c.l.b16 %v94
    %v751 = vunpack.c.h.b16 %v94
    %v752 = vunpack.c.l.b16 %v95
    %v753 = vunpack.c.h.b16 %v95
    %v754 = vunpack.c.l.b16 %v96
    %v755 = vunpack.c.h.b16 %v96
    %v756 = vunpack.c.l.b16 %v97
    %v757 = vunpack.c.h.b16 %v97
    %v758 = vunpack.c.l.b16 %v98
    %v759 = vunpack.c.h.b16 %v98
    %v760 = vunpack.c.l.b16 %v99
    %v761 = vunpack.c.h.b16 %v99
    %v762 = vunpack.c.l.b16 %v100
    %v763 = vunpack.c.h.b16 %v100
    %v764 = vunpack.c.l.b16 %v101
    %v765 = vunpack.c.h.b16 %v101
    %v766 = vunpack.c.l.b16 %v102
    %v767 = vunpack.c.h.b16 %v102
    %v768 = vunpack.c.l.b16 %v103
    %v769 = vunpack.c.h.b16 %v103
    %v770 = vunpack.c.l.b16 %v104
    %v771 = vunpack.c.h.b16 %v104
    %v772 = vunpack.c.l.b16 %v105
    %v773 = vunpack.c.h.b16 %v105
    %v774 = vunpack.c.l.b16 %v106
    %v775 = vunpack.c.h.b16 %v106
    %v776 = vunpack.c.l.b16 %v107
    %v777 = vunpack.c.h.b16 %v107
    %v778 = vunpack.c.l.b16 %v108
    %v779 = vunpack.c.h.b16 %v108
    %v780 = vunpack.c.l.b16 %v109
    %v781 = vunpack.c.h.b16 %v109
    %v782 = vunpack.c.l.b16 %v110
    %v783 = vunpack.c.h.b16 %v110
    %v784 = vunpack.c.l.b16 %v111
    %v785 = vunpack.c.h.b16 %v111
    %v786 = vunpack.c.l.b16 %v112
    %v787 = vunpack.c.h.b16 %v112
    %v788 = vunpack.c.l.b16 %v113
    %v789 = vunpack.c.h.b16 %v113
    %v790 = vunpack.c.l.b16 %v114
    %v791 = vunpack.c.h.b16 %v114
    %v792 = vunpack.c.l.b16 %v115
    %v793 = vunpack.c.h.b16 %v115
    %v794 = vunpack.c.l.b16 %v116
    %v795 = vunpack.c.h.b16 %v116
    %v796 = vunpack.c.l.b16 %v117
    %v797 = vunpack.c.h.b16 %v117
    %v798 = vunpack.c.l.b16 %v118
    %v799 = vunpack.c.h.b16 %v118
    %v800 = vunpack.c.l.b16 %v119
    %v801 = vunpack.c.h.b16 %v119
    %v802 = vunpack.c.l.b16 %v120
    %v803 = vunpack.c.h.b16 %v120
    %v804 = vunpack.c.l.b16 %v121
    %v805 = vunpack.c.h.b16 %v121
    %v806 = vunpack.c.l.b16 %v122
    %v807 = vunpack.c.h.b16 %v122
    %v808 = vunpack.c.l.b16 %v123
    %v809 = vunpack.c.h.b16 %v123
    %v810 = vunpack.c.l.b16 %v124
    %v811 = vunpack.c.h.b16 %v124
    %v812 = vunpack.c.l.b16 %v125
    %v813 = vunpack.c.h.b16 %v125
    %v814 = vunpack.c.l.b16 %v126
    %v815 = vunpack.c.h.b16 %v126
    %v816 = vunpack.c.l.b16 %v127
    %v817 = vunpack.c.h.b16 %v127
    %v818 = vunpack.c.l.b16 %v128
    %v819 = vunpack.c.h.b16 %v128
    %v820 = vunpack.c.l.b16 %v129
    %v821 = vunpack.c.h.b16 %v129
    %v822 = vunpack.c.l.b16 %v130
    %v823 = vunpack.c.h.b16 %v130
    %v824 = vunpack.c.l.b16 %v131
    %v825 = vunpack.c.h.b16 %v131
    %v826 = vunpack.c.l.b16 %v132
    %v827 = vunpack.c.h.b16 %v132
    %v828 = vunpack.c.l.b16 %v133
    %v829 = vunpack.c.h.b16 %v133
    %v830 = vunpack.c.l.b16 %v134
    %v831 = vunpack.c.h.b16 %v134
    %v832 = vunpack.c.l.b16 %v135
    %v833 = vunpack.c.h.b16 %v135
    %v834 = vunpack.c.l.b16 %v136
    %v835 = vunpack.c.h.b16 %v136
    %v836 = vunpack.c.l.b16 %v137
    %v837 = vunpack.c.h.b16 %v137
    %v838 = vunpack.c.l.b16 %v138
    %v839 = vunpack.c.h.b16 %v138
    %v840 = vunpack.c.l.b16 %v139
    %v841 = vunpack.c.h.b16 %v139
    %v842 = vunpack.c.l.b16 %v140
    %v843 = vunpack.c.h.b16 %v140
    %v844 = vunpack.c.l.b16 %v141
    %v845 = vunpack.c.h.b16 %v141
    %v846 = vunpack.c.l.b16 %v142
    %v847 = vunpack.c.h.b16 %v142
    %v848 = vunpack.c.l.b16 %v143
    %v849 = vunpack.c.h.b16 %v143
    %v850 = vunpack.c.l.b16 %v144
    %v851 = vunpack.c.h.b16 %v144
    %v852 = vunpack.c.l.b16 %v145
    %v853 = vunpack.c.h.b16 %v145
    %v854 = vunpack.c.l.b16 %v146
    %v855 = vunpack.c.h.b16 %v146
    %v856 = vunpack.c.l.b16 %v147
    %v857 = vunpack.c.h.b16 %v147
    %v858 = vunpack.c.l.b16 %v148
    %v859 = vunpack.c.h.b16 %v148
    %v860 = vunpack.c.l.b16 %v149
    %v861 = vunpack.c.h.b16 %v149
    %v862 = vunpack.c.l.b16 %v150
    %v863 = vunpack.c.h.b16 %v150
    %v864 = vunpack.c.l.b16 %v151
    %v865 = vunpack.c.h.b16 %v151
    %v866 = vunpack.c.l.b16 %v152
    %v867 = vunpack.c.h.b16 %v152
    %v868 = vunpack.c.l.b16 %v153
    %v869 = vunpack.c.h.b16 %v153
    %v870 = vunpack.c.l.b16 %v154
    %v871 = vunpack.c.h.b16 %v154
    %v872 = vunpack.c.l.b16 %v155
    %v873 = vunpack.c.h.b16 %v155
    %v874 = vunpack.c.l.b16 %v156
    %v875 = vunpack.c.h.b16 %v156
    %v876 = vunpack.c.l.b16 %v157
    %v877 = vunpack.c.h.b16 %v157
    %v878 = vunpack.c.l.b16 %v158
    %v879 = vunpack.c.h.b16 %v158
    %v880 = vunpack.c.l.b16 %v159
    %v881 = vunpack.c.h.b16 %v159
    %v882 = vunpack.c.l.b16 %v160
    %v883 = vunpack.c.h.b16 %v160
    %v884 = vunpack.c.l.b16 %v161
    %v885 = vunpack.c.h.b16 %v161
    %v886 = vunpack.c.l.b16 %v162
    %v887 = vunpack.c.h.b16 %v162
    %v888 = vunpack.c.l.b16 %v163
    %v889 = vunpack.c.h.b16 %v163
    %v890 = vunpack.c.l.b16 %v164
    %v891 = vunpack.c.h.b16 %v164
    %v892 = vunpack.c.l.b16 %v165
    %v893 = vunpack.c.h.b16 %v165
    %v894 = vunpack.c.l.b16 %v166
    %v895 = vunpack.c.h.b16 %v166
    %v896 = vunpack.c.l.b16 %v167
    %v897 = vunpack.c.h.b16 %v167
    %v898 = vunpack.c.l.b16 %v168
    %v899 = vunpack.c.h.b16 %v168
    %v900 = vunpack.c.l.b16 %v169
    %v901 = vunpack.c.h.b16 %v169
    %v902 = vunpack.c.l.b16 %v170
    %v903 = vunpack.c.h.b16 %v170
    %v904 = vunpack.c.l.b16 %v171
    %v905 = vunpack.c.h.b16 %v171
    %v906 = vunpack.c.l.b16 %v172
    %v907 = vunpack.c.h.b16 %v172
    %v908 = vunpack.c.l.b16 %v173
    %v909 = vunpack.c.h.b16 %v173
    %v910 = vunpack.c.l.b16 %v174
    %v911 = vunpack.c.h.b16 %v174
    %v912 = vunpack.c.l.b16 %v175
    %v913 = vunpack.c.h.b16 %v175
    %v914 = vunpack.c.l.b16 %v176
    %v915 = vunpack.c.h.b16 %v176
    %v916 = vunpack.c.l.b16 %v177
    %v917 = vunpack.c.h.b16 %v177
    %v918 = vunpack.c.l.b16 %v178
    %v919 = vunpack.c.h.b16 %v178
    %v920 = vunpack.c.l.b16 %v179
    %v921 = vunpack.c.h.b16 %v179
    %v922 = vunpack.c.l.b16 %v180
    %v923 = vunpack.c.h.b16 %v180
    %v924 = vunpack.c.l.b16 %v181
    %v925 = vunpack.c.h.b16 %v181
    %v926 = vunpack.c.l.b16 %v182
    %v927 = vunpack.c.h.b16 %v182
    %v928 = vunpack.c.l.b16 %v183
    %v929 = vunpack.c.h.b16 %v183
    %v930 = vunpack.c.l.b16 %v184
    %v931 = vunpack.c.h.b16 %v184
    %v932 = vunpack.c.l.b16 %v185
    %v933 = vunpack.c.h.b16 %v185
    %v934 = vunpack.c.l.b16 %v186
    %v935 = vunpack.c.h.b16 %v186
    %v936 = vunpack.c.l.b16 %v187
    %v937 = vunpack.c.h.b16 %v187
    %v938 = vunpack.c.l.b16 %v188
    %v939 = vunpack.c.h.b16 %v188
    %v940 = vunpack.c.l.b16 %v189
    %v941 = vunpack.c.h.b16 %v189
    %v942 = vunpack.c.l.b16 %v190
    %v943 = vunpack.c.h.b16 %v190
    %v944 = vunpack.c.l.b16 %v191
    %v945 = vunpack.c.h.b16 %v191
    %v946 = vunpack.c.l.b16 %v192
    %v947 = vunpack.c.h.b16 %v192
    %v948 = vunpack.c.l.b16 %v193
    %v949 = vunpack.c.h.b16 %v193
    %v950 = vunpack.c.l.b16 %v194
    %v951 = vunpack.c.h.b16 %v194
    %v952 = vunpack.c.l.b16 %v195
    %v953 = vunpack.c.h.b16 %v195
    %v954 = vunpack.c.l.b16 %v196
    %v955 = vunpack.c.h.b16 %v196
    %v956 = vunpack.c.l.b16 %v197
    %v957 = vunpack.c.h.b16 %v197
    %v958 = vunpack.c.l.b16 %v198
    %v959 = vunpack.c.h.b16 %v198
    %v960 = vunpack.c.l.b16 %v199
    %v961 = vunpack.c.h.b16 %v199
    %v962 = vunpack.c.l.b16 %v200
    %v963 = vunpack.c.h.b16 %v200
    %v964 = vunpack.c.l.b16 %v201
    %v965 = vunpack.c.h.b16 %v201
    %v966 = vunpack.c.l.b16 %v202
    %v967 = vunpack.c.h.b16 %v202
    %v968 = vunpack.c.l.b16 %v203
    %v969 = vunpack.c.h.b16 %v203
    %v970 = vunpack.c.l.b16 %v204
    %v971 = vunpack.c.h.b16 %v204
    %v972 = vunpack.c.l.b16 %v205
    %v973 = vunpack.c.h.b16 %v205
    %v974 = vunpack.c.l.b16 %v206
    %v975 = vunpack.c.h.b16 %v206
    %v976 = vunpack.c.l.b16 %v207
    %v977 = vunpack.c.h.b16 %v207
    %v978 = vunpack.c.l.b16 %v208
    %v979 = vunpack.c.h.b16 %v208
    %v980 = vunpack.c.l.b16 %v209
    %v981 = vunpack.c.h.b16 %v209
    %v982 = vunpack.c.l.b16 %v210
    %v983 = vunpack.c.h.b16 %v210
    %v984 = vunpack.c.l.b16 %v211
    %v985 = vunpack.c.h.b16 %v211
    %v986 = vunpack.c.l.b16 %v212
    %v987 = vunpack.c.h.b16 %v212
    %v988 = vunpack.c.l.b16 %v213
    %v989 = vunpack.c.h.b16 %v213
    %v990 = vunpack.c.l.b16 %v214
    %v991 = vunpack.c.h.b16 %v214
    %v992 = vunpack.c.l.b16 %v215
    %v993 = vunpack.c.h.b16 %v215
    %v994 = vunpack.c.l.b16 %v216
    %v995 = vunpack.c.h.b16 %v216
    %v996 = vunpack.c.l.b16 %v217
    %v997 = vunpack.c.h.b16 %v217
    %v998 = vunpack.c.l.b16 %v218
    %v999 = vunpack.c.h.b16 %v218
    %v1000 = vunpack.c.l.b16 %v219
    %v1001 = vunpack.c.h.b16 %v219
    %v1002 = vunpack.c.l.b16 %v220
    %v1003 = vunpack.c.h.b16 %v220
    %v1004 = vunpack.c.l.b16 %v221
    %v1005 = vunpack.c.h.b16 %v221
    %v1006 = vunpack.c.l.b16 %v222
    %v1007 = vunpack.c.h.b16 %v222
    %v1008 = vunpack.c.l.b16 %v223
    %v1009 = vunpack.c.h.b16 %v223
    %v1010 = vunpack.c.l.b16 %v224
    %v1011 = vunpack.c.h.b16 %v224
    %v1012 = vunpack.c.l.b16 %v225
    %v1013 = vunpack.c.h.b16 %v225
    %v1014 = vunpack.c.l.b16 %v226
    %v1015 = vunpack.c.h.b16 %v226
    %v1016 = vunpack.c.l.b16 %v227
    %v1017 = vunpack.c.h.b16 %v227
    %v1018 = vunpack.c.l.b16 %v228
    %v1019 = vunpack.c.h.b16 %v228
    %v1020 = vunpack.c.l.b16 %v229
    %v1021 = vunpack.c.h.b16 %v229
    %v1022 = vunpack.c.l.b16 %v230
    %v1023 = vunpack.c.h.b16 %v230
    %v1024 = vunpack.c.l.b16 %v231
    %v1025 = vunpack.c.h.b16 %v231
    %v1026 = vunpack.c.l.b16 %v232
    %v1027 = vunpack.c.h.b16 %v232
    %v1028 = vunpack.c.l.b16 %v233
    %v1029 = vunpack.c.h.b16 %v233
    %v1030 = vunpack.c.l.b16 %v234
    %v1031 = vunpack.c.h.b16 %v234
    %v1032 = vunpack.c.l.b16 %v235
    %v1033 = vunpack.c.h.b16 %v235
    %v1034 = vunpack.c.l.b16 %v236
    %v1035 = vunpack.c.h.b16 %v236
    %v1036 = vunpack.c.l.b16 %v237
    %v1037 = vunpack.c.h.b16 %v237
    %v1038 = vunpack.c.l.b16 %v238
    %v1039 = vunpack.c.h.b16 %v238
    %v1040 = vunpack.c.l.b16 %v239
    %v1041 = vunpack.c.h.b16 %v239
    %v1042 = vunpack.c.l.b16 %v240
    %v1043 = vunpack.c.h.b16 %v240
    %v1044 = vunpack.c.l.b16 %v241
    %v1045 = vunpack.c.h.b16 %v241
    %v1046 = vunpack.c.l.b16 %v242
    %v1047 = vunpack.c.h.b16 %v242
    %v1048 = vunpack.c.l.b16 %v243
    %v1049 = vunpack.c.h.b16 %v243
    %v1050 = vunpack.c.l.b16 %v244
    %v1051 = vunpack.c.h.b16 %v244
    %v1052 = vunpack.c.l.b16 %v245
    %v1053 = vunpack.c.h.b16 %v245
    %v1054 = vunpack.c.l.b16 %v246
    %v1055 = vunpack.c.h.b16 %v246
    %v1056 = vunpack.c.l.b16 %v247
    %v1057 = vunpack.c.h.b16 %v247
    %v1058 = vunpack.c.l.b16 %v248
    %v1059 = vunpack.c.h.b16 %v248
    %v1060 = vunpack.c.l.b16 %v249
    %v1061 = vunpack.c.h.b16 %v249
    %v1062 = vunpack.c.l.b16 %v250
    %v1063 = vunpack.c.h.b16 %v250
    %v1064 = vunpack.c.l.b16 %v251
    %v1065 = vunpack.c.h.b16 %v251
    %v1066 = vunpack.c.l.b16 %v252
    %v1067 = vunpack.c.h.b16 %v252
    %v1068 = vunpack.c.l.b16 %v253
    %v1069 = vunpack.c.h.b16 %v253
    %v1070 = vunpack.c.l.b16 %v254
    %v1071 = vunpack.c.h.b16 %v254
    %v1072 = vunpack.c.l.b16 %v255
    %v1073 = vunpack.c.h.b16 %v255
    %v1074 = vunpack.c.l.b16 %v256
    %v1075 = vunpack.c.h.b16 %v256
    %v1076 = vunpack.c.l.b16 %v257
    %v1077 = vunpack.c.h.b16 %v257
    %v1078 = vunpack.c.l.b16 %v258
    %v1079 = vunpack.c.h.b16 %v258
    %v1080 = vunpack.c.l.b16 %v259
    %v1081 = vunpack.c.h.b16 %v259
    %v1082 = vunpack.c.l.b16 %v260
    %v1083 = vunpack.c.h.b16 %v260
    %v1084 = vunpack.c.l.b16 %v261
    %v1085 = vunpack.c.h.b16 %v261
    %v1086 = vunpack.c.l.b16 %v262
    %v1087 = vunpack.c.h.b16 %v262
    %v1088 = vunpack.c.l.b16 %v263
    %v1089 = vunpack.c.h.b16 %v263
    %v1090 = vunpack.c.l.b16 %v264
    %v1091 = vunpack.c.h.b16 %v264
    %v1092 = vunpack.c.l.b16 %v265
    %v1093 = vunpack.c.h.b16 %v265
    %v1094 = vunpack.c.l.b16 %v266
    %v1095 = vunpack.c.h.b16 %v266
    %v1096 = vunpack.c.l.b16 %v267
    %v1097 = vunpack.c.h.b16 %v267
    %v1098 = vunpack.c.l.b16 %v268
    %v1099 = vunpack.c.h.b16 %v268
    %v1100 = vunpack.c.l.b16 %v269
    %v1101 = vunpack.c.h.b16 %v269
    %v1102 = vunpack.c.l.b16 %v270
    %v1103 = vunpack.c.h.b16 %v270
    %v1104 = vunpack.c.l.b16 %v271
    %v1105 = vunpack.c.h.b16 %v271
    %v1106 = vunpack.c.l.b16 %v272
    %v1107 = vunpack.c.h.b16 %v272
    %v1108 = vunpack.c.l.b16 %v273
    %v1109 = vunpack.c.h.b16 %v273
    %v1110 = vunpack.c.l.b16 %v274
    %v1111 = vunpack.c.h.b16 %v274
    %v1112 = vunpack.c.l.b16 %v275
    %v1113 = vunpack.c.h.b16 %v275
    %v1114 = vunpack.c.l.b16 %v276
    %v1115 = vunpack.c.h.b16 %v276
    %v1116 = vunpack.c.l.b16 %v277
    %v1117 = vunpack.c.h.b16 %v277
    %v1118 = vunpack.c.l.b16 %v278
    %v1119 = vunpack.c.h.b16 %v278
    %v1120 = vunpack.c.l.b16 %v279
    %v1121 = vunpack.c.h.b16 %v279
    %v1122 = vunpack.c.l.b16 %v280
    %v1123 = vunpack.c.h.b16 %v280
    %v1124 = vunpack.c.l.b16 %v281
    %v1125 = vunpack.c.h.b16 %v281
    %v1126 = vunpack.c.l.b16 %v282
    %v1127 = vunpack.c.h.b16 %v282
    %v1128 = vunpack.c.l.b16 %v283
    %v1129 = vunpack.c.h.b16 %v283
    %v1130 = vunpack.c.l.b16 %v284
    %v1131 = vunpack.c.h.b16 %v284
    %v1132 = vunpack.c.l.b16 %v285
    %v1133 = vunpack.c.h.b16 %v285
    %v1134 = vunpack.c.l.b16 %v286
    %v1135 = vunpack.c.h.b16 %v286
    %v1136 = vunpack.c.l.b16 %v287
    %v1137 = vunpack.c.h.b16 %v287
    %v1138 = vunpack.c.l.b16 %v288
    %v1139 = vunpack.c.h.b16 %v288
    %v1140 = vunpack.c.l.b16 %v289
    %v1141 = vunpack.c.h.b16 %v289
    %v1142 = vunpack.c.l.b16 %v290
    %v1143 = vunpack.c.h.b16 %v290
    %v1144 = vunpack.c.l.b16 %v291
    %v1145 = vunpack.c.h.b16 %v291
    %v1146 = vunpack.c.l.b16 %v292
    %v1147 = vunpack.c.h.b16 %v292
    %v1148 = vunpack.c.l.b16 %v293
    %v1149 = vunpack.c.h.b16 %v293
    %v1150 = vunpack.c.l.b16 %v294
    %v1151 = vunpack.c.h.b16 %v294
    %v1152 = vunpack.c.l.b16 %v295
    %v1153 = vunpack.c.h.b16 %v295
    %v1154 = vunpack.c.l.b16 %v296
    %v1155 = vunpack.c.h.b16 %v296
    %v1156 = vunpack.c.l.b16 %v297
    %v1157 = vunpack.c.h.b16 %v297
    %v1158 = vunpack.c.l.b16 %v298
    %v1159 = vunpack.c.h.b16 %v298
    %v1160 = vunpack.c.l.b16 %v299
    %v1161 = vunpack.c.h.b16 %v299
    %v1162 = vunpack.c.l.b16 %v300
    %v1163 = vunpack.c.h.b16 %v300
    %v1164 = vunpack.c.l.b16 %v301
    %v1165 = vunpack.c.h.b16 %v301
    %v1166 = vunpack.c.l.b16 %v302
    %v1167 = vunpack.c.h.b16 %v302
    %v1168 = vunpack.c.l.b16 %v303
    %v1169 = vunpack.c.h.b16 %v303
    %v1170 = vunpack.c.l.b16 %v304
    %v1171 = vunpack.c.h.b16 %v304
    %v1172 = vunpack.c.l.b16 %v305
    %v1173 = vunpack.c.h.b16 %v305
    %v1174 = vunpack.c.l.b16 %v306
    %v1175 = vunpack.c.h.b16 %v306
    %v1176 = vunpack.c.l.b16 %v307
    %v1177 = vunpack.c.h.b16 %v307
    %v1178 = vunpack.c.l.b16 %v308
    %v1179 = vunpack.c.h.b16 %v308
    %v1180 = vunpack.c.l.b16 %v309
    %v1181 = vunpack.c.h.b16 %v309
    %v1182 = vunpack.c.l.b16 %v310
    %v1183 = vunpack.c.h.b16 %v310
    %v1184 = vunpack.c.l.b16 %v311
    %v1185 = vunpack.c.h.b16 %v311
    %v1186 = vunpack.c.l.b16 %v312
    %v1187 = vunpack.c.h.b16 %v312
    %v1188 = vunpack.c.l.b16 %v313
    %v1189 = vunpack.c.h.b16 %v313
    %v1190 = vunpack.c.l.b16 %v314
    %v1191 = vunpack.c.h.b16 %v314
    %v1192 = vunpack.c.l.b16 %v315
    %v1193 = vunpack.c.h.b16 %v315
    %v1194 = vunpack.c.l.b16 %v316
    %v1195 = vunpack.c.h.b16 %v316
    %v1196 = vunpack.c.l.b16 %v317
    %v1197 = vunpack.c.h.b16 %v317
    %v1198 = vunpack.c.l.b16 %v318
    %v1199 = vunpack.c.h.b16 %v318
    %v1200 = vunpack.c.l.b16 %v319
    %v1201 = vunpack.c.h.b16 %v319
    %v1202 = vunpack.c.l.b16 %v320
    %v1203 = vunpack.c.h.b16 %v320
    %v1204 = vunpack.c.l.b16 %v321
    %v1205 = vunpack.c.h.b16 %v321
    %v1206 = vunpack.c.l.b16 %v322
    %v1207 = vunpack.c.h.b16 %v322
    %v1208 = vunpack.c.l.b16 %v323
    %v1209 = vunpack.c.h.b16 %v323
    %v1210 = vunpack.c.l.b16 %v324
    %v1211 = vunpack.c.h.b16 %v324
    %v1212 = vunpack.c.l.b16 %v325
    %v1213 = vunpack.c.h.b16 %v325
    %v1214 = vunpack.c.l.b16 %v326
    %v1215 = vunpack.c.h.b16 %v326
    %v1216 = vunpack.c.l.b16 %v327
    %v1217 = vunpack.c.h.b16 %v327
    %v1218 = vunpack.c.l.b16 %v328
    %v1219 = vunpack.c.h.b16 %v328
    %v1220 = vunpack.c.l.b16 %v329
    %v1221 = vunpack.c.h.b16 %v329
    %v1222 = vunpack.c.l.b16 %v330
    %v1223 = vunpack.c.h.b16 %v330
    %v1224 = vunpack.c.l.b16 %v331
    %v1225 = vunpack.c.h.b16 %v331
    %v1226 = vunpack.c.l.b16 %v332
    %v1227 = vunpack.c.h.b16 %v332
    %v1228 = vunpack.c.l.b16 %v333
    %v1229 = vunpack.c.h.b16 %v333
    %v1230 = vunpack.c.l.b16 %v334
    %v1231 = vunpack.c.h.b16 %v334
    %v1232 = vunpack.c.l.b16 %v335
    %v1233 = vunpack.c.h.b16 %v335
    %v1234 = vunpack.c.l.b16 %v336
    %v1235 = vunpack.c.h.b16 %v336
    %v1236 = vunpack.c.l.b16 %v337
    %v1237 = vunpack.c.h.b16 %v337
    %v1238 = vunpack.c.l.b16 %v338
    %v1239 = vunpack.c.h.b16 %v338
    %v1240 = vunpack.c.l.b16 %v339
    %v1241 = vunpack.c.h.b16 %v339
    %v1242 = vunpack.c.l.b16 %v340
    %v1243 = vunpack.c.h.b16 %v340
    %v1244 = vunpack.c.l.b16 %v341
    %v1245 = vunpack.c.h.b16 %v341
    %v1246 = vunpack.c.l.b16 %v342
    %v1247 = vunpack.c.h.b16 %v342
    %v1248 = vunpack.c.l.b16 %v343
    %v1249 = vunpack.c.h.b16 %v343
    %v1250 = vunpack.c.l.b16 %v344
    %v1251 = vunpack.c.h.b16 %v344
    %v1252 = vunpack.c.l.b16 %v345
    %v1253 = vunpack.c.h.b16 %v345
    %v1254 = vunpack.c.l.b16 %v346
    %v1255 = vunpack.c.h.b16 %v346
    %v1256 = vunpack.c.l.b16 %v347
    %v1257 = vunpack.c.h.b16 %v347
    %v1258 = vunpack.c.l.b16 %v348
    %v1259 = vunpack.c.h.b16 %v348
    %v1260 = vunpack.c.l.b16 %v349
    %v1261 = vunpack.c.h.b16 %v349
    %v1262 = vunpack.c.l.b16 %v350
    %v1263 = vunpack.c.h.b16 %v350
    %v1264 = vunpack.c.l.b16 %v351
    %v1265 = vunpack.c.h.b16 %v351
    %v1266 = vunpack.c.l.b16 %v352
    %v1267 = vunpack.c.h.b16 %v352
    %v1268 = vunpack.c.l.b16 %v353
    %v1269 = vunpack.c.h.b16 %v353
    %v1270 = vunpack.c.l.b16 %v354
    %v1271 = vunpack.c.h.b16 %v354
    %v1272 = vunpack.c.l.b16 %v355
    %v1273 = vunpack.c.h.b16 %v355
    %v1274 = vunpack.c.l.b16 %v356
    %v1275 = vunpack.c.h.b16 %v356
    %v1276 = vunpack.c.l.b16 %v357
    %v1277 = vunpack.c.h.b16 %v357
    %v1278 = vunpack.c.l.b16 %v358
    %v1279 = vunpack.c.h.b16 %v358
    %v1280 = vunpack.c.l.b16 %v359
    %v1281 = vunpack.c.h.b16 %v359
    %v1282 = vunpack.c.l.b16 %v360
    %v1283 = vunpack.c.h.b16 %v360
    %v1284 = vunpack.c.l.b16 %v361
    %v1285 = vunpack.c.h.b16 %v361
    %v1286 = vunpack.c.l.b16 %v362
    %v1287 = vunpack.c.h.b16 %v362
    %v1288 = vunpack.c.l.b16 %v363
    %v1289 = vunpack.c.h.b16 %v363
    %v1290 = vunpack.c.l.b16 %v364
    %v1291 = vunpack.c.h.b16 %v364
    %v1292 = vunpack.c.l.b16 %v365
    %v1293 = vunpack.c.h.b16 %v365
    %v1294 = vunpack.c.l.b16 %v366
    %v1295 = vunpack.c.h.b16 %v366
    %v1296 = vunpack.c.l.b16 %v367
    %v1297 = vunpack.c.h.b16 %v367
    %v1298 = vunpack.c.l.b16 %v368
    %v1299 = vunpack.c.h.b16 %v368
    %v1300 = vunpack.c.l.b16 %v369
    %v1301 = vunpack.c.h.b16 %v369
    %v1302 = vpack.c.b16 %v730, %v726
    %v1303 = vpack.c.b16 %v731, %v727
    %v1304 = vpack.c.b16 %v732, %v728
    %v1305 = vpack.c.b16 %v733, %v729
    %v1306 = vpack.c.b16 %v738, %v734
    %v1307 = vpack.c.b16 %v739, %v735
    %v1308 = vpack.c.b16 %v740, %v736
    %v1309 = vpack.c.b16 %v741, %v737
    %v1310 = vpack.c.b16 %v746, %v742
    %v1311 = vpack.c.b16 %v747, %v743
    %v1312 = vpack.c.b16 %v748, %v744
    %v1313 = vpack.c.b16 %v749, %v745
    %v1314 = vpack.c.b16 %v754, %v750
    %v1315 = vpack.c.b16 %v755, %v751
    %v1316 = vpack.c.b16 %v756, %v752
    %v1317 = vpack.c.b16 %v757, %v753
    %v1318 = vpack.c.b16 %v762, %v758
    %v1319 = vpack.c.b16 %v763, %v759
    %v1320 = vpack.c.b16 %v764, %v760
    %v1321 = vpack.c.b16 %v765, %v761
    %v1322 = vpack.c.b16 %v770, %v766
    %v1323 = vpack.c.b16 %v771, %v767
    %v1324 = vpack.c.b16 %v772, %v768
    %v1325 = vpack.c.b16 %v773, %v769
    %v1326 = vpack.c.b16 %v778, %v774
    %v1327 = vpack.c.b16 %v779, %v775
    %v1328 = vpack.c.b16 %v780, %v776
    %v1329 = vpack.c.b16 %v781, %v777
    %v1330 = vpack.c.b16 %v786, %v782
    %v1331 = vpack.c.b16 %v787, %v783
    %v1332 = vpack.c.b16 %v788, %v784
    %v1333 = vpack.c.b16 %v789, %v785
    %v1334 = vpack.c.b16 %v794, %v790
    %v1335 = vpack.c.b16 %v795, %v791
    %v1336 = vpack.c.b16 %v796, %v792
    %v1337 = vpack.c.b16 %v797, %v793
    %v1338 = vpack.c.b16 %v802, %v798
    %v1339 = vpack.c.b16 %v803, %v799
    %v1340 = vpack.c.b16 %v804, %v800
    %v1341 = vpack.c.b16 %v805, %v801
    %v1342 = vpack.c.b16 %v810, %v806
    %v1343 = vpack.c.b16 %v811, %v807
    %v1344 = vpack.c.b16 %v812, %v808
    %v1345 = vpack.c.b16 %v813, %v809
    %v1346 = vpack.c.b16 %v818, %v814
    %v1347 = vpack.c.b16 %v819, %v815
    %v1348 = vpack.c.b16 %v820, %v816
    %v1349 = vpack.c.b16 %v821, %v817
    %v1350 = vpack.c.b16 %v826, %v822
    %v1351 = vpack.c.b16 %v827, %v823
    %v1352 = vpack.c.b16 %v828, %v824
    %v1353 = vpack.c.b16 %v829, %v825
    %v1354 = vpack.c.b16 %v834, %v830
    %v1355 = vpack.c.b16 %v835, %v831
    %v1356 = vpack.c.b16 %v836, %v832
    %v1357 = vpack.c.b16 %v837, %v833
    %v1358 = vpack.c.b16 %v842, %v838
    %v1359 = vpack.c.b16 %v843, %v839
    %v1360 = vpack.c.b16 %v844, %v840
    %v1361 = vpack.c.b16 %v845, %v841
    %v1362 = vpack.c.b16 %v850, %v846
    %v1363 = vpack.c.b16 %v851, %v847
    %v1364 = vpack.c.b16 %v852, %v848
    %v1365 = vpack.c.b16 %v853, %v849
    %v1366 = vpack.c.b16 %v858, %v854
    %v1367 = vpack.c.b16 %v859, %v855
    %v1368 = vpack.c.b16 %v860, %v856
    %v1369 = vpack.c.b16 %v861, %v857
    %v1370 = vpack.c.b16 %v866, %v862
    %v1371 = vpack.c.b16 %v867, %v863
    %v1372 = vpack.c.b16 %v868, %v864
    %v1373 = vpack.c.b16 %v869, %v865
    %v1374 = vpack.c.b16 %v874, %v870
    %v1375 = vpack.c.b16 %v875, %v871
    %v1376 = vpack.c.b16 %v876, %v872
    %v1377 = vpack.c.b16 %v877, %v873
    %v1378 = vpack.c.b16 %v882, %v878
    %v1379 = vpack.c.b16 %v883, %v879
    %v1380 = vpack.c.b16 %v884, %v880
    %v1381 = vpack.c.b16 %v885, %v881
    %v1382 = vpack.c.b16 %v890, %v886
    %v1383 = vpack.c.b16 %v891, %v887
    %v1384 = vpack.c.b16 %v892, %v888
    %v1385 = vpack.c.b16 %v893, %v889
    %v1386 = vpack.c.b16 %v898, %v894
    %v1387 = vpack.c.b16 %v899, %v895
    %v1388 = vpack.c.b16 %v900, %v896
    %v1389 = vpack.c.b16 %v901, %v897
    %v1390 = vpack.c.b16 %v906, %v902
    %v1391 = vpack.c.b16 %v907, %v903
    %v1392 = vpack.c.b16 %v908, %v904
    %v1393 = vpack.c.b16 %v909, %v905
    %v1394 = vpack.c.b16 %v914, %v910
    %v1395 = vpack.c.b16 %v915, %v911
    %v1396 = vpack.c.b16 %v916, %v912
    %v1397 = vpack.c.b16 %v917, %v913
    %v1398 = vpack.c.b16 %v922, %v918
    %v1399 = vpack.c.b16 %v923, %v919
    %v1400 = vpack.c.b16 %v924, %v920
    %v1401 = vpack.c.b16 %v925, %v921
    %v1402 = vpack.c.b16 %v930, %v926
    %v1403 = vpack.c.b16 %v931, %v927
    %v1404 = vpack.c.b16 %v932, %v928
    %v1405 = vpack.c.b16 %v933, %v929
    %v1406 = vpack.c.b16 %v938, %v934
    %v1407 = vpack.c.b16 %v939, %v935
    %v1408 = vpack.c.b16 %v940, %v936
    %v1409 = vpack.c.b16 %v941, %v937
    %v1410 = vpack.c.b16 %v946, %v942
    %v1411 = vpack.c.b16 %v947, %v943
    %v1412 = vpack.c.b16 %v948, %v944
    %v1413 = vpack.c.b16 %v949, %v945
    %v1414 = vpack.c.b16 %v954, %v950
    %v1415 = vpack.c.b16 %v955, %v951
    %v1416 = vpack.c.b16 %v956, %v952
    %v1417 = vpack.c.b16 %v957, %v953
    %v1418 = vpack.c.b16 %v962, %v958
    %v1419 = vpack.c.b16 %v963, %v959
    %v1420 = vpack.c.b16 %v964, %v960
    %v1421 = vpack.c.b16 %v965, %v961
    %v1422 = vpack.c.b16 %v970, %v966
    %v1423 = vpack.c.b16 %v971, %v967
    %v1424 = vpack.c.b16 %v972, %v968
    %v1425 = vpack.c.b16 %v973, %v969
    %v1426 = vpack.c.b16 %v978, %v974
    %v1427 = vpack.c.b16 %v979, %v975
    %v1428 = vpack.c.b16 %v980, %v976
    %v1429 = vpack.c.b16 %v981, %v977
    %v1430 = vpack.c.b16 %v986, %v982
    %v1431 = vpack.c.b16 %v987, %v983
    %v1432 = vpack.c.b16 %v988, %v984
    %v1433 = vpack.c.b16 %v989, %v985
    %v1434 = vpack.c.b16 %v994, %v990
    %v1435 = vpack.c.b16 %v995, %v991
    %v1436 = vpack.c.b16 %v996, %v992
    %v1437 = vpack.c.b16 %v997, %v993
    %v1438 = vpack.c.b16 %v1002, %v998
    %v1439 = vpack.c.b16 %v1003, %v999
    %v1440 = vpack.c.b16 %v1004, %v1000
    %v1441 = vpack.c.b16 %v1005, %v1001
    %v1442 = vpack.c.b16 %v1010, %v1006
    %v1443 = vpack.c.b16 %v1011, %v1007
    %v1444 = vpack.c.b16 %v1012, %v1008
    %v1445 = vpack.c.b16 %v1013, %v1009
    %v1446 = vpack.c.b16 %v1018, %v1014
    %v1447 = vpack.c.b16 %v1019, %v1015
    %v1448 = vpack.c.b16 %v1020, %v1016
    %v1449 = vpack.c.b16 %v1021, %v1017
    %v1450 = vpack.c.b16 %v1026, %v1022
    %v1451 = vpack.c.b16 %v1027, %v1023
    %v1452 = vpack.c.b16 %v1028, %v1024
    %v1453 = vpack.c.b16 %v1029, %v1025
    %v1454 = vpack.c.b16 %v1034, %v1030
    %v1455 = vpack.c.b16 %v1035, %v1031
    %v1456 = vpack.c.b16 %v1036, %v1032
    %v1457 = vpack.c.b16 %v1037, %v1033
    %v1458 = vpack.c.b16 %v1042, %v1038
    %v1459 = vpack.c.b16 %v1043, %v1039
    %v1460 = vpack.c.b16 %v1044, %v1040
    %v1461 = vpack.c.b16 %v1045, %v1041
    %v1462 = vpack.c.b16 %v1050, %v1046
    %v1463 = vpack.c.b16 %v1051, %v1047
    %v1464 = vpack.c.b16 %v1052, %v1048
    %v1465 = vpack.c.b16 %v1053, %v1049
    %v1466 = vpack.c.b16 %v1058, %v1054
    %v1467 = vpack.c.b16 %v1059, %v1055
    %v1468 = vpack.c.b16 %v1060, %v1056
    %v1469 = vpack.c.b16 %v1061, %v1057
    %v1470 = vpack.c.b16 %v1066, %v1062
    %v1471 = vpack.c.b16 %v1067, %v1063
    %v1472 = vpack.c.b16 %v1068, %v1064
    %v1473 = vpack.c.b16 %v1069, %v1065
    %v1474 = vpack.c.b16 %v1074, %v1070
    %v1475 = vpack.c.b16 %v1075, %v1071
    %v1476 = vpack.c.b16 %v1076, %v1072
    %v1477 = vpack.c.b16 %v1077, %v1073
    %v1478 = vpack.c.b16 %v1082, %v1078
    %v1479 = vpack.c.b16 %v1083, %v1079
    %v1480 = vpack.c.b16 %v1084, %v1080
    %v1481 = vpack.c.b16 %v1085, %v1081
    %v1482 = vpack.c.b16 %v1090, %v1086
    %v1483 = vpack.c.b16 %v1091, %v1087
    %v1484 = vpack.c.b16 %v1092, %v1088
    %v1485 = vpack.c.b16 %v1093, %v1089
    %v1486 = vpack.c.b16 %v1098, %v1094
    %v1487 = vpack.c.b16 %v1099, %v1095
    %v1488 = vpack.c.b16 %v1100, %v1096
    %v1489 = vpack.c.b16 %v1101, %v1097
    %v1490 = vpack.c.b16 %v1106, %v1102
    %v1491 = vpack.c.b16 %v1107, %v1103
    %v1492 = vpack.c.b16 %v1108, %v1104
    %v1493 = vpack.c.b16 %v1109, %v1105
    %v1494 = vpack.c.b16 %v1114, %v1110
    %v1495 = vpack.c.b16 %v1115, %v1111
    %v1496 = vpack.c.b16 %v1116, %v1112
    %v1497 = vpack.c.b16 %v1117, %v1113
    %v1498 = vpack.c.b16 %v1122, %v1118
    %v1499 = vpack.c.b16 %v1123, %v1119
    %v1500 = vpack.c.b16 %v1124, %v1120
    %v1501 = vpack.c.b16 %v1125, %v1121
    %v1502 = vpack.c.b16 %v1130, %v1126
    %v1503 = vpack.c.b16 %v1131, %v1127
    %v1504 = vpack.c.b16 %v1132, %v1128
    %v1505 = vpack.c.b16 %v1133, %v1129
    %v1506 = vpack.c.b16 %v1138, %v1134
    %v1507 = vpack.c.b16 %v1139, %v1135
    %v1508 = vpack.c.b16 %v1140, %v1136
    %v1509 = vpack.c.b16 %v1141, %v1137
    %v1510 = vpack.c.b16 %v1146, %v1142
    %v1511 = vpack.c.b16 %v1147, %v1143
    %v1512 = vpack.c.b16 %v1148, %v1144
    %v1513 = vpack.c.b16 %v1149, %v1145
    %v1514 = vpack.c.b16 %v1154, %v1150
    %v1515 = vpack.c.b16 %v1155, %v1151
    %v1516 = vpack.c.b16 %v1156, %v1152
    %v1517 = vpack.c.b16 %v1157, %v1153
    %v1518 = vpack.c.b16 %v1162, %v1158
    %v1519 = vpack.c.b16 %v1163, %v1159
    %v1520 = vpack.c.b16 %v1164, %v1160
    %v1521 = vpack.c.b16 %v1165, %v1161
    %v1522 = vpack.c.b16 %v1170, %v1166
    %v1523 = vpack.c.b16 %v1171, %v1167
    %v1524 = vpack.c.b16 %v1172, %v1168
    %v1525 = vpack.c.b16 %v1173, %v1169
    %v1526 = vpack.c.b16 %v1178, %v1174
    %v1527 = vpack.c.b16 %v1179, %v1175
    %v1528 = vpack.c.b16 %v1180, %v1176
    %v1529 = vpack.c.b16 %v1181, %v1177
    %v1530 = vpack.c.b16 %v1186, %v1182
    %v1531 = vpack.c.b16 %v1187, %v1183
    %v1532 = vpack.c.b16 %v1188, %v1184
    %v1533 = vpack.c.b16 %v1189, %v1185
    %v1534 = vpack.c.b16 %v1194, %v1190
    %v1535 = vpack.c.b16 %v1195, %v1191
    %v1536 = vpack.c.b16 %v1196, %v1192
    %v1537 = vpack.c.b16 %v1197, %v1193
    %v1538 = vpack.c.b16 %v1202, %v1198
    %v1539 = vpack.c.b16 %v1203, %v1199
    %v1540 = vpack.c.b16 %v1204, %v1200
    %v1541 = vpack.c.b16 %v1205, %v1201
    %v1542 = vpack.c.b16 %v1210, %v1206
    %v1543 = vpack.c.b16 %v1211, %v1207
    %v1544 = vpack.c.b16 %v1212, %v1208
    %v1545 = vpack.c.b16 %v1213, %v1209
    %v1546 = vpack.c.b16 %v1218, %v1214
    %v1547 = vpack.c.b16 %v1219, %v1215
    %v1548 = vpack.c.b16 %v1220, %v1216
    %v1549 = vpack.c.b16 %v1221, %v1217
    %v1550 = vpack.c.b16 %v1226, %v1222
    %v1551 = vpack.c.b16 %v1227, %v1223
    %v1552 = vpack.c.b16 %v1228, %v1224
    %v1553 = vpack.c.b16 %v1229, %v1225
    %v1554 = vpack.c.b16 %v1234, %v1230
    %v1555 = vpack.c.b16 %v1235, %v1231
    %v1556 = vpack.c.b16 %v1236, %v1232
    %v1557 = vpack.c.b16 %v1237, %v1233
    %v1558 = vpack.c.b16 %v1242, %v1238
    %v1559 = vpack.c.b16 %v1243, %v1239
    %v1560 = vpack.c.b16 %v1244, %v1240
    %v1561 = vpack.c.b16 %v1245, %v1241
    %v1562 = vpack.c.b16 %v1250, %v1246
    %v1563 = vpack.c.b16 %v1251, %v1247
    %v1564 = vpack.c.b16 %v1252, %v1248
    %v1565 = vpack.c.b16 %v1253, %v1249
    %v1566 = vpack.c.b16 %v1258, %v1254
    %v1567 = vpack.c.b16 %v1259, %v1255
    %v1568 = vpack.c.b16 %v1260, %v1256
    %v1569 = vpack.c.b16 %v1261, %v1257
    %v1570 = vpack.c.b16 %v1266, %v1262
    %v1571 = vpack.c.b16 %v1267, %v1263
    %v1572 = vpack.c.b16 %v1268, %v1264
    %v1573 = vpack.c.b16 %v1269, %v1265
    %v1574 = vpack.c.b16 %v1274, %v1270
    %v1575 = vpack.c.b16 %v1275, %v1271
    %v1576 = vpack.c.b16 %v1276, %v1272
    %v1577 = vpack.c.b16 %v1277, %v1273
    %v1578 = vpack.c.b16 %v1282, %v1278
    %v1579 = vpack.c.b16 %v1283, %v1279
    %v1580 = vpack.c.b16 %v1284, %v1280
    %v1581 = vpack.c.b16 %v1285, %v1281
    %v1582 = vpack.c.b16 %v1290, %v1286
    %v1583 = vpack.c.b16 %v1291, %v1287
    %v1584 = vpack.c.b16 %v1292, %v1288
    %v1585 = vpack.c.b16 %v1293, %v1289
    %v1586 = vpack.c.b16 %v1298, %v1294
    %v1587 = vpack.c.b16 %v1299, %v1295
    %v1588 = vpack.c.b16 %v1300, %v1296
    %v1589 = vpack.c.b16 %v1301, %v1297
    %1878 = vmatprep.subr.bf16.mxu0 %v1303
    %1879 = vmatpush1.bf16.msra.mxu0 %v1302
    %1880 = vmatprep.subr.bf16.mxu0 %v1307
    %1881 = vmatpush1.bf16.msra.mxu0 %v1306
    %1882 = vmatprep.subr.bf16.mxu0 %v1311
    %1883 = vmatpush1.bf16.msra.mxu0 %v1310
    %1884 = vmatprep.subr.bf16.mxu0 %v1315
    %1885 = vmatpush1.bf16.msra.mxu0 %v1314
    %1886 = vmatprep.subr.bf16.mxu0 %v1319
    %1887 = vmatpush1.bf16.msra.mxu0 %v1318
    %1888 = vmatprep.subr.bf16.mxu0 %v1323
    %1889 = vmatpush1.bf16.msra.mxu0 %v1322
    %1890 = vmatprep.subr.bf16.mxu0 %v1327
    %1891 = vmatpush1.bf16.msra.mxu0 %v1326
    %1892 = vmatprep.subr.bf16.mxu0 %v1331
    %1893 = vmatpush1.bf16.msra.mxu0 %v1330
    %1894 = vmatprep.subr.bf16.mxu0 %v1335
    %1895 = vmatpush1.bf16.msra.mxu0 %v1334
    %1896 = vmatprep.subr.bf16.mxu0 %v1339
    %1897 = vmatpush1.bf16.msra.mxu0 %v1338
    %1898 = vmatprep.subr.bf16.mxu0 %v1343
    %1899 = vmatpush1.bf16.msra.mxu0 %v1342
    %1900 = vmatprep.subr.bf16.mxu0 %v1347
    %1901 = vmatpush1.bf16.msra.mxu0 %v1346
    %1902 = vmatprep.subr.bf16.mxu0 %v1351
    %1903 = vmatpush1.bf16.msra.mxu0 %v1350
    %1904 = vmatprep.subr.bf16.mxu0 %v1355
    %1905 = vmatpush1.bf16.msra.mxu0 %v1354
    %1906 = vmatprep.subr.bf16.mxu0 %v1359
    %1907 = vmatpush1.bf16.msra.mxu0 %v1358
    %1908 = vmatprep.subr.bf16.mxu0 %v1363
    %1909 = vmatpush1.bf16.msra.mxu0 %v1362
    %1910 = vmatprep.mubr.bf16.mxu0 %v421
    %1911 = vmatmul.mubr.bf16.gmra.mrb[0].mxu0 %v420
    %v1912 = vpop.f32.mrb[0].mxu0
    %v1913 = vadd.f32 %v375, %v1912
    %v1914 = vpop.f32.mrb[0].mxu0
    %v1915 = vadd.f32 %v379, %v1914
    %v1916 = vpop.f32.mrb[0].mxu0
    %v1917 = vadd.f32 %v375, %v1916
    %v1918 = vpop.f32.mrb[0].mxu0
    %v1919 = vadd.f32 %v379, %v1918
    %1920 = vdwg.mxu0
    %1921 = vmatprep.subr.bf16.mxu0 %v1367
    %1922 = vmatpush1.bf16.msra.mxu0 %v1366
    %1923 = vmatprep.subr.bf16.mxu0 %v1371
    %1924 = vmatpush1.bf16.msra.mxu0 %v1370
    %1925 = vmatprep.subr.bf16.mxu0 %v1375
    %1926 = vmatpush1.bf16.msra.mxu0 %v1374
    %1927 = vmatprep.subr.bf16.mxu0 %v1379
    %1928 = vmatpush1.bf16.msra.mxu0 %v1378
    %1929 = vmatprep.subr.bf16.mxu0 %v1383
    %1930 = vmatpush1.bf16.msra.mxu0 %v1382
    %1931 = vmatprep.subr.bf16.mxu0 %v1387
    %1932 = vmatpush1.bf16.msra.mxu0 %v1386
    %1933 = vmatprep.subr.bf16.mxu0 %v1391
    %1934 = vmatpush1.bf16.msra.mxu0 %v1390
    %1935 = vmatprep.subr.bf16.mxu0 %v1395
    %1936 = vmatpush1.bf16.msra.mxu0 %v1394
    %1937 = vmatprep.subr.bf16.mxu0 %v1399
    %1938 = vmatpush1.bf16.msra.mxu0 %v1398
    %1939 = vmatprep.subr.bf16.mxu0 %v1403
    %1940 = vmatpush1.bf16.msra.mxu0 %v1402
    %1941 = vmatprep.subr.bf16.mxu0 %v1407
    %1942 = vmatpush1.bf16.msra.mxu0 %v1406
    %1943 = vmatprep.subr.bf16.mxu0 %v1411
    %1944 = vmatpush1.bf16.msra.mxu0 %v1410
    %1945 = vmatprep.subr.bf16.mxu0 %v1415
    %1946 = vmatpush1.bf16.msra.mxu0 %v1414
    %1947 = vmatprep.subr.bf16.mxu0 %v1419
    %1948 = vmatpush1.bf16.msra.mxu0 %v1418
    %1949 = vmatprep.subr.bf16.mxu0 %v1423
    %1950 = vmatpush1.bf16.msra.mxu0 %v1422
    %1951 = vmatprep.subr.bf16.mxu0 %v1427
    %1952 = vmatpush1.bf16.msra.mxu0 %v1426
    %1953 = vmatprep.mubr.bf16.mxu0 %v423
    %1954 = vmatmul.mubr.bf16.gmra.mrb[0].mxu0 %v422
    %v1955 = vpop.f32.mrb[0].mxu0
    %v1956 = vadd.f32 %v1913, %v1955
    %v1957 = vpop.f32.mrb[0].mxu0
    %v1958 = vadd.f32 %v1915, %v1957
    %v1959 = vpop.f32.mrb[0].mxu0
    %v1960 = vadd.f32 %v1917, %v1959
    %v1961 = vpop.f32.mrb[0].mxu0
    %v1962 = vadd.f32 %v1919, %v1961
    %1963 = vdwg.mxu0
    %1964 = vmatprep.subr.bf16.mxu0 %v1431
    %1965 = vmatpush1.bf16.msra.mxu0 %v1430
    %1966 = vmatprep.subr.bf16.mxu0 %v1435
    %1967 = vmatpush1.bf16.msra.mxu0 %v1434
    %1968 = vmatprep.subr.bf16.mxu0 %v1439
    %1969 = vmatpush1.bf16.msra.mxu0 %v1438
    %1970 = vmatprep.subr.bf16.mxu0 %v1443
    %1971 = vmatpush1.bf16.msra.mxu0 %v1442
    %1972 = vmatprep.subr.bf16.mxu0 %v1447
    %1973 = vmatpush1.bf16.msra.mxu0 %v1446
    %1974 = vmatprep.subr.bf16.mxu0 %v1451
    %1975 = vmatpush1.bf16.msra.mxu0 %v1450
    %1976 = vmatprep.subr.bf16.mxu0 %v1455
    %1977 = vmatpush1.bf16.msra.mxu0 %v1454
    %1978 = vmatprep.subr.bf16.mxu0 %v1459
    %1979 = vmatpush1.bf16.msra.mxu0 %v1458
    %1980 = vmatprep.subr.bf16.mxu0 %v1463
    %1981 = vmatpush1.bf16.msra.mxu0 %v1462
    %1982 = vmatprep.subr.bf16.mxu0 %v1467
    %1983 = vmatpush1.bf16.msra.mxu0 %v1466
    %1984 = vmatprep.subr.bf16.mxu0 %v1471
    %1985 = vmatpush1.bf16.msra.mxu0 %v1470
    %1986 = vmatprep.subr.bf16.mxu0 %v1475
    %1987 = vmatpush1.bf16.msra.mxu0 %v1474
    %1988 = vmatprep.subr.bf16.mxu0 %v1479
    %1989 = vmatpush1.bf16.msra.mxu0 %v1478
    %1990 = vmatprep.subr.bf16.mxu0 %v1483
    %1991 = vmatpush1.bf16.msra.mxu0 %v1482
    %1992 = vmatprep.subr.bf16.mxu0 %v1487
    %1993 = vmatpush1.bf16.msra.mxu0 %v1486
    %1994 = vmatprep.subr.bf16.mxu0 %v1491
    %1995 = vmatpush1.bf16.msra.mxu0 %v1490
    %1996 = vmatprep.mubr.bf16.mxu0 %v425
    %1997 = vmatmul.mubr.bf16.gmra.mrb[0].mxu0 %v424
    %v1998 = vpop.f32.mrb[0].mxu0
    %v1999 = vadd.f32 %v1956, %v1998
    %v2000 = vpop.f32.mrb[0].mxu0
    %v2001 = vadd.f32 %v1958, %v2000
    %v2002 = vpop.f32.mrb[0].mxu0
    %v2003 = vadd.f32 %v1960, %v2002
    %v2004 = vpop.f32.mrb[0].mxu0
    %v2005 = vadd.f32 %v1962, %v2004
    %2006 = vdwg.mxu0
    %2007 = vmatprep.subr.bf16.mxu0 %v1495
    %2008 = vmatpush1.bf16.msra.mxu0 %v1494
    %2009 = vmatprep.subr.bf16.mxu0 %v1499
    %2010 = vmatpush1.bf16.msra.mxu0 %v1498
    %2011 = vmatprep.subr.bf16.mxu0 %v1503
    %2012 = vmatpush1.bf16.msra.mxu0 %v1502
    %2013 = vmatprep.subr.bf16.mxu0 %v1507
    %2014 = vmatpush1.bf16.msra.mxu0 %v1506
    %2015 = vmatprep.subr.bf16.mxu0 %v1511
    %2016 = vmatpush1.bf16.msra.mxu0 %v1510
    %2017 = vmatprep.subr.bf16.mxu0 %v1515
    %2018 = vmatpush1.bf16.msra.mxu0 %v1514
    %2019 = vmatprep.subr.bf16.mxu0 %v1519
    %2020 = vmatpush1.bf16.msra.mxu0 %v1518
    %2021 = vmatprep.subr.bf16.mxu0 %v1523
    %2022 = vmatpush1.bf16.msra.mxu0 %v1522
    %2023 = vmatprep.subr.bf16.mxu0 %v1527
    %2024 = vmatpush1.bf16.msra.mxu0 %v1526
    %2025 = vmatprep.subr.bf16.mxu0 %v1531
    %2026 = vmatpush1.bf16.msra.mxu0 %v1530
    %2027 = vmatprep.subr.bf16.mxu0 %v1535
    %2028 = vmatpush1.bf16.msra.mxu0 %v1534
    %2029 = vmatprep.subr.bf16.mxu0 %v1539
    %2030 = vmatpush1.bf16.msra.mxu0 %v1538
    %2031 = vmatprep.subr.bf16.mxu0 %v1543
    %2032 = vmatpush1.bf16.msra.mxu0 %v1542
    %2033 = vmatprep.subr.bf16.mxu0 %v1547
    %2034 = vmatpush1.bf16.msra.mxu0 %v1546
    %2035 = vmatprep.subr.bf16.mxu0 %v1551
    %2036 = vmatpush1.bf16.msra.mxu0 %v1550
    %2037 = vmatprep.subr.bf16.mxu0 %v1555
    %2038 = vmatpush1.bf16.msra.mxu0 %v1554
    %2039 = vmatprep.mubr.bf16.mxu0 %v427
    %2040 = vmatmul.mubr.bf16.gmra.mrb[0].mxu0 %v426
    %v2041 = vpop.f32.mrb[0].mxu0
    %v2042 = vadd.f32 %v1999, %v2041
    %v2043 = vpop.f32.mrb[0].mxu0
    %v2044 = vadd.f32 %v2001, %v2043
    %v2045 = vpop.f32.mrb[0].mxu0
    %v2046 = vadd.f32 %v2003, %v2045
    %v2047 = vpop.f32.mrb[0].mxu0
    %v2048 = vadd.f32 %v2005, %v2047
    %2049 = vdwg.mxu0
    %2050 = vmatprep.subr.bf16.mxu0 %v1559
    %2051 = vmatpush1.bf16.msra.mxu0 %v1558
    %2052 = vmatprep.subr.bf16.mxu0 %v1563
    %2053 = vmatpush1.bf16.msra.mxu0 %v1562
    %2054 = vmatprep.subr.bf16.mxu0 %v1567
    %2055 = vmatpush1.bf16.msra.mxu0 %v1566
    %2056 = vmatprep.subr.bf16.mxu0 %v1571
    %2057 = vmatpush1.bf16.msra.mxu0 %v1570
    %2058 = vmatprep.subr.bf16.mxu0 %v1575
    %2059 = vmatpush1.bf16.msra.mxu0 %v1574
    %2060 = vmatprep.subr.bf16.mxu0 %v1579
    %2061 = vmatpush1.bf16.msra.mxu0 %v1578
    %2062 = vmatprep.subr.bf16.mxu0 %v1583
    %2063 = vmatpush1.bf16.msra.mxu0 %v1582
    %2064 = vmatprep.subr.bf16.mxu0 %v1587
    %2065 = vmatpush1.bf16.msra.mxu0 %v1586
    %2066 = vmatprep.subr.bf16.mxu0 0
    %2067 = vmatpush1.bf16.msra.mxu0 0
    %2068 = vmatprep.subr.bf16.mxu0 0
    %2069 = vmatpush1.bf16.msra.mxu0 0
    %2070 = vmatprep.subr.bf16.mxu0 0
    %2071 = vmatpush1.bf16.msra.mxu0 0
    %2072 = vmatprep.subr.bf16.mxu0 0
    %2073 = vmatpush1.bf16.msra.mxu0 0
    %2074 = vmatprep.subr.bf16.mxu0 0
    %2075 = vmatpush1.bf16.msra.mxu0 0
    %2076 = vmatprep.subr.bf16.mxu0 0
    %2077 = vmatpush1.bf16.msra.mxu0 0
    %2078 = vmatprep.subr.bf16.mxu0 0
    %2079 = vmatpush1.bf16.msra.mxu0 0
    %2080 = vmatprep.subr.bf16.mxu0 0
    %2081 = vmatpush1.bf16.msra.mxu0 0
    %2082 = vmatprep.mubr.bf16.mxu0 0
    %2083 = vmatmul.mubr.bf16.gmra.mrb[0].mxu0 %v428
    %v2084 = vpop.f32.mrb[0].mxu0
    %v2085 = vadd.f32 %v2042, %v2084
    %v2086 = vpop.f32.mrb[0].mxu0
    %v2087 = vadd.f32 %v2044, %v2086
    %v2088 = vpop.f32.mrb[0].mxu0
    %v2089 = vadd.f32 %v2046, %v2088
    %v2090 = vpop.f32.mrb[0].mxu0
    %v2091 = vadd.f32 %v2048, %v2090
    %2092 = vdwg.mxu0
    %2093 = vmatprep.subr.bf16.mxu0 %v1305
    %2094 = vmatpush1.bf16.msra.mxu0 %v1304
    %2095 = vmatprep.subr.bf16.mxu0 %v1309
    %2096 = vmatpush1.bf16.msra.mxu0 %v1308
    %2097 = vmatprep.subr.bf16.mxu0 %v1313
    %2098 = vmatpush1.bf16.msra.mxu0 %v1312
    %2099 = vmatprep.subr.bf16.mxu0 %v1317
    %2100 = vmatpush1.bf16.msra.mxu0 %v1316
    %2101 = vmatprep.subr.bf16.mxu0 %v1321
    %2102 = vmatpush1.bf16.msra.mxu0 %v1320
    %2103 = vmatprep.subr.bf16.mxu0 %v1325
    %2104 = vmatpush1.bf16.msra.mxu0 %v1324
    %2105 = vmatprep.subr.bf16.mxu0 %v1329
    %2106 = vmatpush1.bf16.msra.mxu0 %v1328
    %2107 = vmatprep.subr.bf16.mxu0 %v1333
    %2108 = vmatpush1.bf16.msra.mxu0 %v1332
    %2109 = vmatprep.subr.bf16.mxu0 %v1337
    %2110 = vmatpush1.bf16.msra.mxu0 %v1336
    %2111 = vmatprep.subr.bf16.mxu0 %v1341
    %2112 = vmatpush1.bf16.msra.mxu0 %v1340
    %2113 = vmatprep.subr.bf16.mxu0 %v1345
    %2114 = vmatpush1.bf16.msra.mxu0 %v1344
    %2115 = vmatprep.subr.bf16.mxu0 %v1349
    %2116 = vmatpush1.bf16.msra.mxu0 %v1348
    %2117 = vmatprep.subr.bf16.mxu0 %v1353
    %2118 = vmatpush1.bf16.msra.mxu0 %v1352
    %2119 = vmatprep.subr.bf16.mxu0 %v1357
    %2120 = vmatpush1.bf16.msra.mxu0 %v1356
    %2121 = vmatprep.subr.bf16.mxu0 %v1361
    %2122 = vmatpush1.bf16.msra.mxu0 %v1360
    %2123 = vmatprep.subr.bf16.mxu0 %v1365
    %2124 = vmatpush1.bf16.msra.mxu0 %v1364
    %2125 = vmatprep.mubr.bf16.mxu0 %v421
    %2126 = vmatmul.mubr.bf16.gmra.mrb[0].mxu0 %v420
    %v2127 = vpop.f32.mrb[0].mxu0
    %v2128 = vadd.f32 %v383, %v2127
    %v2129 = vpop.f32.mrb[0].mxu0
    %v2130 = vadd.f32 %v387, %v2129
    %v2131 = vpop.f32.mrb[0].mxu0
    %v2132 = vadd.f32 %v383, %v2131
    %v2133 = vpop.f32.mrb[0].mxu0
    %v2134 = vadd.f32 %v387, %v2133
    %2135 = vdwg.mxu0
    %2136 = vmatprep.subr.bf16.mxu0 %v1369
    %2137 = vmatpush1.bf16.msra.mxu0 %v1368
    %2138 = vmatprep.subr.bf16.mxu0 %v1373
    %2139 = vmatpush1.bf16.msra.mxu0 %v1372
    %2140 = vmatprep.subr.bf16.mxu0 %v1377
    %2141 = vmatpush1.bf16.msra.mxu0 %v1376
    %2142 = vmatprep.subr.bf16.mxu0 %v1381
    %2143 = vmatpush1.bf16.msra.mxu0 %v1380
    %2144 = vmatprep.subr.bf16.mxu0 %v1385
    %2145 = vmatpush1.bf16.msra.mxu0 %v1384
    %2146 = vmatprep.subr.bf16.mxu0 %v1389
    %2147 = vmatpush1.bf16.msra.mxu0 %v1388
    %2148 = vmatprep.subr.bf16.mxu0 %v1393
    %2149 = vmatpush1.bf16.msra.mxu0 %v1392
    %2150 = vmatprep.subr.bf16.mxu0 %v1397
    %2151 = vmatpush1.bf16.msra.mxu0 %v1396
    %2152 = vmatprep.subr.bf16.mxu0 %v1401
    %2153 = vmatpush1.bf16.msra.mxu0 %v1400
    %2154 = vmatprep.subr.bf16.mxu0 %v1405
    %2155 = vmatpush1.bf16.msra.mxu0 %v1404
    %2156 = vmatprep.subr.bf16.mxu0 %v1409
    %2157 = vmatpush1.bf16.msra.mxu0 %v1408
    %2158 = vmatprep.subr.bf16.mxu0 %v1413
    %2159 = vmatpush1.bf16.msra.mxu0 %v1412
    %2160 = vmatprep.subr.bf16.mxu0 %v1417
    %2161 = vmatpush1.bf16.msra.mxu0 %v1416
    %2162 = vmatprep.subr.bf16.mxu0 %v1421
    %2163 = vmatpush1.bf16.msra.mxu0 %v1420
    %2164 = vmatprep.subr.bf16.mxu0 %v1425
    %2165 = vmatpush1.bf16.msra.mxu0 %v1424
    %2166 = vmatprep.subr.bf16.mxu0 %v1429
    %2167 = vmatpush1.bf16.msra.mxu0 %v1428
    %2168 = vmatprep.mubr.bf16.mxu0 %v423
    %2169 = vmatmul.mubr.bf16.gmra.mrb[0].mxu0 %v422
    %v2170 = vpop.f32.mrb[0].mxu0
    %v2171 = vadd.f32 %v2128, %v2170
    %v2172 = vpop.f32.mrb[0].mxu0
    %v2173 = vadd.f32 %v2130, %v2172
    %v2174 = vpop.f32.mrb[0].mxu0
    %v2175 = vadd.f32 %v2132, %v2174
    %v2176 = vpop.f32.mrb[0].mxu0
    %v2177 = vadd.f32 %v2134, %v2176
    %2178 = vdwg.mxu0
    %2179 = vmatprep.subr.bf16.mxu0 %v1433
    %2180 = vmatpush1.bf16.msra.mxu0 %v1432
    %2181 = vmatprep.subr.bf16.mxu0 %v1437
    %2182 = vmatpush1.bf16.msra.mxu0 %v1436
    %2183 = vmatprep.subr.bf16.mxu0 %v1441
    %2184 = vmatpush1.bf16.msra.mxu0 %v1440
    %2185 = vmatprep.subr.bf16.mxu0 %v1445
    %2186 = vmatpush1.bf16.msra.mxu0 %v1444
    %2187 = vmatprep.subr.bf16.mxu0 %v1449
    %2188 = vmatpush1.bf16.msra.mxu0 %v1448
    %2189 = vmatprep.subr.bf16.mxu0 %v1453
    %2190 = vmatpush1.bf16.msra.mxu0 %v1452
    %2191 = vmatprep.subr.bf16.mxu0 %v1457
    %2192 = vmatpush1.bf16.msra.mxu0 %v1456
    %2193 = vmatprep.subr.bf16.mxu0 %v1461
    %2194 = vmatpush1.bf16.msra.mxu0 %v1460
    %2195 = vmatprep.subr.bf16.mxu0 %v1465
    %2196 = vmatpush1.bf16.msra.mxu0 %v1464
    %2197 = vmatprep.subr.bf16.mxu0 %v1469
    %2198 = vmatpush1.bf16.msra.mxu0 %v1468
    %2199 = vmatprep.subr.bf16.mxu0 %v1473
    %2200 = vmatpush1.bf16.msra.mxu0 %v1472
    %2201 = vmatprep.subr.bf16.mxu0 %v1477
    %2202 = vmatpush1.bf16.msra.mxu0 %v1476
    %2203 = vmatprep.subr.bf16.mxu0 %v1481
    %2204 = vmatpush1.bf16.msra.mxu0 %v1480
    %2205 = vmatprep.subr.bf16.mxu0 %v1485
    %2206 = vmatpush1.bf16.msra.mxu0 %v1484
    %2207 = vmatprep.subr.bf16.mxu0 %v1489
    %2208 = vmatpush1.bf16.msra.mxu0 %v1488
    %2209 = vmatprep.subr.bf16.mxu0 %v1493
    %2210 = vmatpush1.bf16.msra.mxu0 %v1492
    %2211 = vmatprep.mubr.bf16.mxu0 %v425
    %2212 = vmatmul.mubr.bf16.gmra.mrb[0].mxu0 %v424
    %v2213 = vpop.f32.mrb[0].mxu0
    %v2214 = vadd.f32 %v2171, %v2213
    %v2215 = vpop.f32.mrb[0].mxu0
    %v2216 = vadd.f32 %v2173, %v2215
    %v2217 = vpop.f32.mrb[0].mxu0
    %v2218 = vadd.f32 %v2175, %v2217
    %v2219 = vpop.f32.mrb[0].mxu0
    %v2220 = vadd.f32 %v2177, %v2219
    %2221 = vdwg.mxu0
    %2222 = vmatprep.subr.bf16.mxu0 %v1497
    %2223 = vmatpush1.bf16.msra.mxu0 %v1496
    %2224 = vmatprep.subr.bf16.mxu0 %v1501
    %2225 = vmatpush1.bf16.msra.mxu0 %v1500
    %2226 = vmatprep.subr.bf16.mxu0 %v1505
    %2227 = vmatpush1.bf16.msra.mxu0 %v1504
    %2228 = vmatprep.subr.bf16.mxu0 %v1509
    %2229 = vmatpush1.bf16.msra.mxu0 %v1508
    %2230 = vmatprep.subr.bf16.mxu0 %v1513
    %2231 = vmatpush1.bf16.msra.mxu0 %v1512
    %2232 = vmatprep.subr.bf16.mxu0 %v1517
    %2233 = vmatpush1.bf16.msra.mxu0 %v1516
    %2234 = vmatprep.subr.bf16.mxu0 %v1521
    %2235 = vmatpush1.bf16.msra.mxu0 %v1520
    %2236 = vmatprep.subr.bf16.mxu0 %v1525
    %2237 = vmatpush1.bf16.msra.mxu0 %v1524
    %2238 = vmatprep.subr.bf16.mxu0 %v1529
    %2239 = vmatpush1.bf16.msra.mxu0 %v1528
    %2240 = vmatprep.subr.bf16.mxu0 %v1533
    %2241 = vmatpush1.bf16.msra.mxu0 %v1532
    %2242 = vmatprep.subr.bf16.mxu0 %v1537
    %2243 = vmatpush1.bf16.msra.mxu0 %v1536
    %2244 = vmatprep.subr.bf16.mxu0 %v1541
    %2245 = vmatpush1.bf16.msra.mxu0 %v1540
    %2246 = vmatprep.subr.bf16.mxu0 %v1545
    %2247 = vmatpush1.bf16.msra.mxu0 %v1544
    %2248 = vmatprep.subr.bf16.mxu0 %v1549
    %2249 = vmatpush1.bf16.msra.mxu0 %v1548
    %2250 = vmatprep.subr.bf16.mxu0 %v1553
    %2251 = vmatpush1.bf16.msra.mxu0 %v1552
    %2252 = vmatprep.subr.bf16.mxu0 %v1557
    %2253 = vmatpush1.bf16.msra.mxu0 %v1556
    %2254 = vmatprep.mubr.bf16.mxu0 %v427
    %2255 = vmatmul.mubr.bf16.gmra.mrb[0].mxu0 %v426
    %v2256 = vpop.f32.mrb[0].mxu0
    %v2257 = vadd.f32 %v2214, %v2256
    %v2258 = vpop.f32.mrb[0].mxu0
    %v2259 = vadd.f32 %v2216, %v2258
    %v2260 = vpop.f32.mrb[0].mxu0
    %v2261 = vadd.f32 %v2218, %v2260
    %v2262 = vpop.f32.mrb[0].mxu0
    %v2263 = vadd.f32 %v2220, %v2262
    %2264 = vdwg.mxu0
    %2265 = vmatprep.subr.bf16.mxu0 %v1561
    %2266 = vmatpush1.bf16.msra.mxu0 %v1560
    %2267 = vmatprep.subr.bf16.mxu0 %v1565
    %2268 = vmatpush1.bf16.msra.mxu0 %v1564
    %2269 = vmatprep.subr.bf16.mxu0 %v1569
    %2270 = vmatpush1.bf16.msra.mxu0 %v1568
    %2271 = vmatprep.subr.bf16.mxu0 %v1573
    %2272 = vmatpush1.bf16.msra.mxu0 %v1572
    %2273 = vmatprep.subr.bf16.mxu0 %v1577
    %2274 = vmatpush1.bf16.msra.mxu0 %v1576
    %2275 = vmatprep.subr.bf16.mxu0 %v1581
    %2276 = vmatpush1.bf16.msra.mxu0 %v1580
    %2277 = vmatprep.subr.bf16.mxu0 %v1585
    %2278 = vmatpush1.bf16.msra.mxu0 %v1584
    %2279 = vmatprep.subr.bf16.mxu0 %v1589
    %2280 = vmatpush1.bf16.msra.mxu0 %v1588
    %2281 = vmatprep.subr.bf16.mxu0 0
    %2282 = vmatpush1.bf16.msra.mxu0 0
    %2283 = vmatprep.subr.bf16.mxu0 0
    %2284 = vmatpush1.bf16.msra.mxu0 0
    %2285 = vmatprep.subr.bf16.mxu0 0
    %2286 = vmatpush1.bf16.msra.mxu0 0
    %2287 = vmatprep.subr.bf16.mxu0 0
    %2288 = vmatpush1.bf16.msra.mxu0 0
    %2289 = vmatprep.subr.bf16.mxu0 0
    %2290 = vmatpush1.bf16.msra.mxu0 0
    %2291 = vmatprep.subr.bf16.mxu0 0
    %2292 = vmatpush1.bf16.msra.mxu0 0
    %2293 = vmatprep.subr.bf16.mxu0 0
    %2294 = vmatpush1.bf16.msra.mxu0 0
    %2295 = vmatprep.subr.bf16.mxu0 0
    %2296 = vmatpush1.bf16.msra.mxu0 0
    %2297 = vmatprep.mubr.bf16.mxu0 0
    %2298 = vmatmul.mubr.bf16.gmra.mrb[0].mxu0 %v428
    %v2299 = vpop.f32.mrb[0].mxu0
    %v2300 = vadd.f32 %v2257, %v2299
    %v2301 = vpop.f32.mrb[0].mxu0
    %v2302 = vadd.f32 %v2259, %v2301
    %v2303 = vpop.f32.mrb[0].mxu0
    %v2304 = vadd.f32 %v2261, %v2303
    %v2305 = vpop.f32.mrb[0].mxu0
    %v2306 = vadd.f32 %v2263, %v2305
    %2307 = vdwg.mxu0
    %v2308 = vxor.u32 %v2085, 2147483648
    %v2309 = vxor.u32 %v2087, 2147483648
    %v2310 = vxor.u32 %v2300, 2147483648
    %v2311 = vxor.u32 %v2302, 2147483648
    %v2312 = vxor.u32 %v2089, 2147483648
    %v2313 = vxor.u32 %v2091, 2147483648
    %v2314 = vxor.u32 %v2304, 2147483648
    %v2315 = vxor.u32 %v2306, 2147483648
    %v2316 = vmul.f32 %v2308, 1.442695
    %v2317 = vpow.pop %v2316
    %v2318 = vmul.f32 %v2309, 1.442695
    %v2319 = vpow.pop %v2318
    %v2320 = vmul.f32 %v2310, 1.442695
    %v2321 = vpow.pop %v2320
    %v2322 = vmul.f32 %v2311, 1.442695
    %v2323 = vpow.pop %v2322
    %v2324 = vmul.f32 %v2312, 1.442695
    %v2325 = vpow.pop %v2324
    %v2326 = vmul.f32 %v2313, 1.442695
    %v2327 = vpow.pop %v2326
    %v2328 = vmul.f32 %v2314, 1.442695
    %v2329 = vpow.pop %v2328
    %v2330 = vmul.f32 %v2315, 1.442695
    %v2331 = vpow.pop %v2330
    %v2332 = vadd.f32 %v2317, 1.0
    %v2333 = vadd.f32 %v2319, 1.0
    %v2334 = vadd.f32 %v2321, 1.0
    %v2335 = vadd.f32 %v2323, 1.0
    %v2336 = vadd.f32 %v2325, 1.0
    %v2337 = vadd.f32 %v2327, 1.0
    %v2338 = vadd.f32 %v2329, 1.0
    %v2339 = vadd.f32 %v2331, 1.0
    %v2340 = vrcp.pop %v2332
    %v2341 = vmul.f32 1.0, %v2340
    %v2342 = vrcp.pop %v2333
    %v2343 = vmul.f32 1.0, %v2342
    %v2344 = vrcp.pop %v2334
    %v2345 = vmul.f32 1.0, %v2344
    %v2346 = vrcp.pop %v2335
    %v2347 = vmul.f32 1.0, %v2346
    %v2348 = vrcp.pop %v2336
    %v2349 = vmul.f32 1.0, %v2348
    %v2350 = vrcp.pop %v2337
    %v2351 = vmul.f32 1.0, %v2350
    %v2352 = vrcp.pop %v2338
    %v2353 = vmul.f32 1.0, %v2352
    %v2354 = vrcp.pop %v2339
    %v2355 = vmul.f32 1.0, %v2354
    %v2356 = vpack.c.bf16 %v2349, %v2341
    %v2357 = vpack.c.bf16 %v2351, %v2343
    %v2358 = vpack.c.bf16 %v2353, %v2345
    %v2359 = vpack.c.bf16 %v2355, %v2347
    %v2360 = vld [vmem:[#allocation6] sm:$0xff]
    %v2361 = vld [vmem:[#allocation6 + $0x8] sm:$0xff]
    %v2362 = vld [vmem:[#allocation6 + $0x10] sm:$0xff]
    %v2363 = vld [vmem:[#allocation6 + $0x18] sm:$0xff]
    %v2364 = vld [vmem:[#allocation6 + $0x20] sm:$0xf]
    %v2365 = vld [vmem:[#allocation6 + $0x24] sm:$0xff]
    %v2366 = vld [vmem:[#allocation6 + $0x2c] sm:$0xff]
    %v2367 = vld [vmem:[#allocation6 + $0x34] sm:$0xff]
    %v2368 = vld [vmem:[#allocation6 + $0x3c] sm:$0xff]
    %v2369 = vld [vmem:[#allocation6 + $0x44] sm:$0xf]
    %v2370 = vld [vmem:[#allocation6 + $0x48] sm:$0xff]
    %v2371 = vld [vmem:[#allocation6 + $0x50] sm:$0xff]
    %v2372 = vld [vmem:[#allocation6 + $0x58] sm:$0xff]
    %v2373 = vld [vmem:[#allocation6 + $0x60] sm:$0xff]
    %v2374 = vld [vmem:[#allocation6 + $0x68] sm:$0xf]
    %v2375 = vld [vmem:[#allocation6 + $0x6c] sm:$0xff]
    %v2376 = vld [vmem:[#allocation6 + $0x74] sm:$0xff]
    %v2377 = vld [vmem:[#allocation6 + $0x7c] sm:$0xff]
    %v2378 = vld [vmem:[#allocation6 + $0x84] sm:$0xff]
    %v2379 = vld [vmem:[#allocation6 + $0x8c] sm:$0xf]
    %v2380 = vld [vmem:[#allocation6 + $0x90] sm:$0xff]
    %v2381 = vld [vmem:[#allocation6 + $0x98] sm:$0xff]
    %v2382 = vld [vmem:[#allocation6 + $0xa0] sm:$0xff]
    %v2383 = vld [vmem:[#allocation6 + $0xa8] sm:$0xff]
    %v2384 = vld [vmem:[#allocation6 + $0xb0] sm:$0xf]
    %v2385 = vld [vmem:[#allocation6 + $0xb4] sm:$0xff]
    %v2386 = vld [vmem:[#allocation6 + $0xbc] sm:$0xff]
    %v2387 = vld [vmem:[#allocation6 + $0xc4] sm:$0xff]
    %v2388 = vld [vmem:[#allocation6 + $0xcc] sm:$0xff]
    %v2389 = vld [vmem:[#allocation6 + $0xd4] sm:$0xf]
    %v2390 = vld [vmem:[#allocation6 + $0xd8] sm:$0xff]
    %v2391 = vld [vmem:[#allocation6 + $0xe0] sm:$0xff]
    %v2392 = vld [vmem:[#allocation6 + $0xe8] sm:$0xff]
    %v2393 = vld [vmem:[#allocation6 + $0xf0] sm:$0xff]
    %v2394 = vld [vmem:[#allocation6 + $0xf8] sm:$0xf]
    %v2395 = vld [vmem:[#allocation6 + $0xfc] sm:$0xff]
    %v2396 = vld [vmem:[#allocation6 + $0x104] sm:$0xff]
    %v2397 = vld [vmem:[#allocation6 + $0x10c] sm:$0xff]
    %v2398 = vld [vmem:[#allocation6 + $0x114] sm:$0xff]
    %v2399 = vld [vmem:[#allocation6 + $0x11c] sm:$0xf]
    %v2400 = vld [vmem:[#allocation6 + $0x120] sm:$0xff]
    %v2401 = vld [vmem:[#allocation6 + $0x128] sm:$0xff]
    %v2402 = vld [vmem:[#allocation6 + $0x130] sm:$0xff]
    %v2403 = vld [vmem:[#allocation6 + $0x138] sm:$0xff]
    %v2404 = vld [vmem:[#allocation6 + $0x140] sm:$0xf]
    %v2405 = vld [vmem:[#allocation6 + $0x144] sm:$0xff]
    %v2406 = vld [vmem:[#allocation6 + $0x14c] sm:$0xff]
    %v2407 = vld [vmem:[#allocation6 + $0x154] sm:$0xff]
    %v2408 = vld [vmem:[#allocation6 + $0x15c] sm:$0xff]
    %v2409 = vld [vmem:[#allocation6 + $0x164] sm:$0xf]
    %v2410 = vld [vmem:[#allocation6 + $0x168] sm:$0xff]
    %v2411 = vld [vmem:[#allocation6 + $0x170] sm:$0xff]
    %v2412 = vld [vmem:[#allocation6 + $0x178] sm:$0xff]
    %v2413 = vld [vmem:[#allocation6 + $0x180] sm:$0xff]
    %v2414 = vld [vmem:[#allocation6 + $0x188] sm:$0xf]
    %v2415 = vld [vmem:[#allocation6 + $0x18c] sm:$0xff]
    %v2416 = vld [vmem:[#allocation6 + $0x194] sm:$0xff]
    %v2417 = vld [vmem:[#allocation6 + $0x19c] sm:$0xff]
    %v2418 = vld [vmem:[#allocation6 + $0x1a4] sm:$0xff]
    %v2419 = vld [vmem:[#allocation6 + $0x1ac] sm:$0xf]
    %v2420 = vld [vmem:[#allocation6 + $0x1b0] sm:$0xff]
    %v2421 = vld [vmem:[#allocation6 + $0x1b8] sm:$0xff]
    %v2422 = vld [vmem:[#allocation6 + $0x1c0] sm:$0xff]
    %v2423 = vld [vmem:[#allocation6 + $0x1c8] sm:$0xff]
    %v2424 = vld [vmem:[#allocation6 + $0x1d0] sm:$0xf]
    %v2425 = vld [vmem:[#allocation6 + $0x1d4] sm:$0xff]
    %v2426 = vld [vmem:[#allocation6 + $0x1dc] sm:$0xff]
    %v2427 = vld [vmem:[#allocation6 + $0x1e4] sm:$0xff]
    %v2428 = vld [vmem:[#allocation6 + $0x1ec] sm:$0xff]
    %v2429 = vld [vmem:[#allocation6 + $0x1f4] sm:$0xf]
    %v2430 = vld [vmem:[#allocation6 + $0x1f8] sm:$0xff]
    %v2431 = vld [vmem:[#allocation6 + $0x200] sm:$0xff]
    %v2432 = vld [vmem:[#allocation6 + $0x208] sm:$0xff]
    %v2433 = vld [vmem:[#allocation6 + $0x210] sm:$0xff]
    %v2434 = vld [vmem:[#allocation6 + $0x218] sm:$0xf]
    %v2435 = vld [vmem:[#allocation6 + $0x21c] sm:$0xff]
    %v2436 = vld [vmem:[#allocation6 + $0x224] sm:$0xff]
    %v2437 = vld [vmem:[#allocation6 + $0x22c] sm:$0xff]
    %v2438 = vld [vmem:[#allocation6 + $0x234] sm:$0xff]
    %v2439 = vld [vmem:[#allocation6 + $0x23c] sm:$0xf]
    %v2440 = vld [vmem:[#allocation6 + $0x240] sm:$0xff]
    %v2441 = vld [vmem:[#allocation6 + $0x248] sm:$0xff]
    %v2442 = vld [vmem:[#allocation6 + $0x250] sm:$0xff]
    %v2443 = vld [vmem:[#allocation6 + $0x258] sm:$0xff]
    %v2444 = vld [vmem:[#allocation6 + $0x260] sm:$0xf]
    %v2445 = vld [vmem:[#allocation6 + $0x264] sm:$0xff]
    %v2446 = vld [vmem:[#allocation6 + $0x26c] sm:$0xff]
    %v2447 = vld [vmem:[#allocation6 + $0x274] sm:$0xff]
    %v2448 = vld [vmem:[#allocation6 + $0x27c] sm:$0xff]
    %v2449 = vld [vmem:[#allocation6 + $0x284] sm:$0xf]
    %v2450 = vld [vmem:[#allocation6 + $0x288] sm:$0xff]
    %v2451 = vld [vmem:[#allocation6 + $0x290] sm:$0xff]
    %v2452 = vld [vmem:[#allocation6 + $0x298] sm:$0xff]
    %v2453 = vld [vmem:[#allocation6 + $0x2a0] sm:$0xff]
    %v2454 = vld [vmem:[#allocation6 + $0x2a8] sm:$0xf]
    %v2455 = vld [vmem:[#allocation6 + $0x2ac] sm:$0xff]
    %v2456 = vld [vmem:[#allocation6 + $0x2b4] sm:$0xff]
    %v2457 = vld [vmem:[#allocation6 + $0x2bc] sm:$0xff]
    %v2458 = vld [vmem:[#allocation6 + $0x2c4] sm:$0xff]
    %v2459 = vld [vmem:[#allocation6 + $0x2cc] sm:$0xf]
    %v2460 = vld [vmem:[#allocation6 + $0x2d0] sm:$0xff]
    %v2461 = vld [vmem:[#allocation6 + $0x2d8] sm:$0xff]
    %v2462 = vld [vmem:[#allocation6 + $0x2e0] sm:$0xff]
    %v2463 = vld [vmem:[#allocation6 + $0x2e8] sm:$0xff]
    %v2464 = vld [vmem:[#allocation6 + $0x2f0] sm:$0xf]
    %v2465 = vld [vmem:[#allocation6 + $0x2f4] sm:$0xff]
    %v2466 = vld [vmem:[#allocation6 + $0x2fc] sm:$0xff]
    %v2467 = vld [vmem:[#allocation6 + $0x304] sm:$0xff]
    %v2468 = vld [vmem:[#allocation6 + $0x30c] sm:$0xff]
    %v2469 = vld [vmem:[#allocation6 + $0x314] sm:$0xf]
    %v2470 = vld [vmem:[#allocation6 + $0x318] sm:$0xff]
    %v2471 = vld [vmem:[#allocation6 + $0x320] sm:$0xff]
    %v2472 = vld [vmem:[#allocation6 + $0x328] sm:$0xff]
    %v2473 = vld [vmem:[#allocation6 + $0x330] sm:$0xff]
    %v2474 = vld [vmem:[#allocation6 + $0x338] sm:$0xf]
    %v2475 = vld [vmem:[#allocation6 + $0x33c] sm:$0xff]
    %v2476 = vld [vmem:[#allocation6 + $0x344] sm:$0xff]
    %v2477 = vld [vmem:[#allocation6 + $0x34c] sm:$0xff]
    %v2478 = vld [vmem:[#allocation6 + $0x354] sm:$0xff]
    %v2479 = vld [vmem:[#allocation6 + $0x35c] sm:$0xf]
    %v2480 = vld [vmem:[#allocation6 + $0x360] sm:$0xff]
    %v2481 = vld [vmem:[#allocation6 + $0x368] sm:$0xff]
    %v2482 = vld [vmem:[#allocation6 + $0x370] sm:$0xff]
    %v2483 = vld [vmem:[#allocation6 + $0x378] sm:$0xff]
    %v2484 = vld [vmem:[#allocation6 + $0x380] sm:$0xf]
    %v2485 = vld [vmem:[#allocation6 + $0x384] sm:$0xff]
    %v2486 = vld [vmem:[#allocation6 + $0x38c] sm:$0xff]
    %v2487 = vld [vmem:[#allocation6 + $0x394] sm:$0xff]
    %v2488 = vld [vmem:[#allocation6 + $0x39c] sm:$0xff]
    %v2489 = vld [vmem:[#allocation6 + $0x3a4] sm:$0xf]
    %v2490 = vld [vmem:[#allocation6 + $0x3a8] sm:$0xff]
    %v2491 = vld [vmem:[#allocation6 + $0x3b0] sm:$0xff]
    %v2492 = vld [vmem:[#allocation6 + $0x3b8] sm:$0xff]
    %v2493 = vld [vmem:[#allocation6 + $0x3c0] sm:$0xff]
    %v2494 = vld [vmem:[#allocation6 + $0x3c8] sm:$0xf]
    %v2495 = vld [vmem:[#allocation6 + $0x3cc] sm:$0xff]
    %v2496 = vld [vmem:[#allocation6 + $0x3d4] sm:$0xff]
    %v2497 = vld [vmem:[#allocation6 + $0x3dc] sm:$0xff]
    %v2498 = vld [vmem:[#allocation6 + $0x3e4] sm:$0xff]
    %v2499 = vld [vmem:[#allocation6 + $0x3ec] sm:$0xf]
    %v2500 = vld [vmem:[#allocation6 + $0x3f0] sm:$0xff]
    %v2501 = vld [vmem:[#allocation6 + $0x3f8] sm:$0xff]
    %v2502 = vld [vmem:[#allocation6 + $0x400] sm:$0xff]
    %v2503 = vld [vmem:[#allocation6 + $0x408] sm:$0xff]
    %v2504 = vld [vmem:[#allocation6 + $0x410] sm:$0xf]
    %v2505 = vld [vmem:[#allocation6 + $0x414] sm:$0xff]
    %v2506 = vld [vmem:[#allocation6 + $0x41c] sm:$0xff]
    %v2507 = vld [vmem:[#allocation6 + $0x424] sm:$0xff]
    %v2508 = vld [vmem:[#allocation6 + $0x42c] sm:$0xff]
    %v2509 = vld [vmem:[#allocation6 + $0x434] sm:$0xf]
    %v2510 = vld [vmem:[#allocation6 + $0x438] sm:$0xff]
    %v2511 = vld [vmem:[#allocation6 + $0x440] sm:$0xff]
    %v2512 = vld [vmem:[#allocation6 + $0x448] sm:$0xff]
    %v2513 = vld [vmem:[#allocation6 + $0x450] sm:$0xff]
    %v2514 = vld [vmem:[#allocation6 + $0x458] sm:$0xf]
    %v2515 = vld [vmem:[#allocation6 + $0x45c] sm:$0xff]
    %v2516 = vld [vmem:[#allocation6 + $0x464] sm:$0xff]
    %v2517 = vld [vmem:[#allocation6 + $0x46c] sm:$0xff]
    %v2518 = vld [vmem:[#allocation6 + $0x474] sm:$0xff]
    %v2519 = vld [vmem:[#allocation6 + $0x47c] sm:$0xf]
    %v2520 = vld [vmem:[#allocation6 + $0x480] sm:$0xff]
    %v2521 = vld [vmem:[#allocation6 + $0x488] sm:$0xff]
    %v2522 = vld [vmem:[#allocation6 + $0x490] sm:$0xff]
    %v2523 = vld [vmem:[#allocation6 + $0x498] sm:$0xff]
    %v2524 = vld [vmem:[#allocation6 + $0x4a0] sm:$0xf]
    %v2525 = vld [vmem:[#allocation6 + $0x4a4] sm:$0xff]
    %v2526 = vld [vmem:[#allocation6 + $0x4ac] sm:$0xff]
    %v2527 = vld [vmem:[#allocation6 + $0x4b4] sm:$0xff]
    %v2528 = vld [vmem:[#allocation6 + $0x4bc] sm:$0xff]
    %v2529 = vld [vmem:[#allocation6 + $0x4c4] sm:$0xf]
    %v2530 = vld [vmem:[#allocation6 + $0x4c8] sm:$0xff]
    %v2531 = vld [vmem:[#allocation6 + $0x4d0] sm:$0xff]
    %v2532 = vld [vmem:[#allocation6 + $0x4d8] sm:$0xff]
    %v2533 = vld [vmem:[#allocation6 + $0x4e0] sm:$0xff]
    %v2534 = vld [vmem:[#allocation6 + $0x4e8] sm:$0xf]
    %v2535 = vld [vmem:[#allocation6 + $0x4ec] sm:$0xff]
    %v2536 = vld [vmem:[#allocation6 + $0x4f4] sm:$0xff]
    %v2537 = vld [vmem:[#allocation6 + $0x4fc] sm:$0xff]
    %v2538 = vld [vmem:[#allocation6 + $0x504] sm:$0xff]
    %v2539 = vld [vmem:[#allocation6 + $0x50c] sm:$0xf]
    %v2540 = vld [vmem:[#allocation6 + $0x510] sm:$0xff]
    %v2541 = vld [vmem:[#allocation6 + $0x518] sm:$0xff]
    %v2542 = vld [vmem:[#allocation6 + $0x520] sm:$0xff]
    %v2543 = vld [vmem:[#allocation6 + $0x528] sm:$0xff]
    %v2544 = vld [vmem:[#allocation6 + $0x530] sm:$0xf]
    %v2545 = vld [vmem:[#allocation6 + $0x534] sm:$0xff]
    %v2546 = vld [vmem:[#allocation6 + $0x53c] sm:$0xff]
    %v2547 = vld [vmem:[#allocation6 + $0x544] sm:$0xff]
    %v2548 = vld [vmem:[#allocation6 + $0x54c] sm:$0xff]
    %v2549 = vld [vmem:[#allocation6 + $0x554] sm:$0xf]
    %v2550 = vld [vmem:[#allocation6 + $0x558] sm:$0xff]
    %v2551 = vld [vmem:[#allocation6 + $0x560] sm:$0xff]
    %v2552 = vld [vmem:[#allocation6 + $0x568] sm:$0xff]
    %v2553 = vld [vmem:[#allocation6 + $0x570] sm:$0xff]
    %v2554 = vld [vmem:[#allocation6 + $0x578] sm:$0xf]
    %v2555 = vld [vmem:[#allocation6 + $0x57c] sm:$0xff]
    %v2556 = vld [vmem:[#allocation6 + $0x584] sm:$0xff]
    %v2557 = vld [vmem:[#allocation6 + $0x58c] sm:$0xff]
    %v2558 = vld [vmem:[#allocation6 + $0x594] sm:$0xff]
    %v2559 = vld [vmem:[#allocation6 + $0x59c] sm:$0xf]
    %v2560 = vld [vmem:[#allocation6 + $0x5a0] sm:$0xff]
    %v2561 = vld [vmem:[#allocation6 + $0x5a8] sm:$0xff]
    %v2562 = vld [vmem:[#allocation6 + $0x5b0] sm:$0xff]
    %v2563 = vld [vmem:[#allocation6 + $0x5b8] sm:$0xff]
    %v2564 = vld [vmem:[#allocation6 + $0x5c0] sm:$0xf]
    %v2565 = vld [vmem:[#allocation6 + $0x5c4] sm:$0xff]
    %v2566 = vld [vmem:[#allocation6 + $0x5cc] sm:$0xff]
    %v2567 = vld [vmem:[#allocation6 + $0x5d4] sm:$0xff]
    %v2568 = vld [vmem:[#allocation6 + $0x5dc] sm:$0xff]
    %v2569 = vld [vmem:[#allocation6 + $0x5e4] sm:$0xf]
    %v2570 = vld [vmem:[#allocation6 + $0x5e8] sm:$0xff]
    %v2571 = vld [vmem:[#allocation6 + $0x5f0] sm:$0xff]
    %v2572 = vld [vmem:[#allocation6 + $0x5f8] sm:$0xff]
    %v2573 = vld [vmem:[#allocation6 + $0x600] sm:$0xff]
    %v2574 = vld [vmem:[#allocation6 + $0x608] sm:$0xf]
    %v2575 = vld [vmem:[#allocation6 + $0x60c] sm:$0xff]
    %v2576 = vld [vmem:[#allocation6 + $0x614] sm:$0xff]
    %v2577 = vld [vmem:[#allocation6 + $0x61c] sm:$0xff]
    %v2578 = vld [vmem:[#allocation6 + $0x624] sm:$0xff]
    %v2579 = vld [vmem:[#allocation6 + $0x62c] sm:$0xf]
    %v2580 = vld [vmem:[#allocation6 + $0x630] sm:$0xff]
    %v2581 = vld [vmem:[#allocation6 + $0x638] sm:$0xff]
    %v2582 = vld [vmem:[#allocation6 + $0x640] sm:$0xff]
    %v2583 = vld [vmem:[#allocation6 + $0x648] sm:$0xff]
    %v2584 = vld [vmem:[#allocation6 + $0x650] sm:$0xf]
    %v2585 = vld [vmem:[#allocation6 + $0x654] sm:$0xff]
    %v2586 = vld [vmem:[#allocation6 + $0x65c] sm:$0xff]
    %v2587 = vld [vmem:[#allocation6 + $0x664] sm:$0xff]
    %v2588 = vld [vmem:[#allocation6 + $0x66c] sm:$0xff]
    %v2589 = vld [vmem:[#allocation6 + $0x674] sm:$0xf]
    %v2590 = vld [vmem:[#allocation6 + $0x678] sm:$0xff]
    %v2591 = vld [vmem:[#allocation6 + $0x680] sm:$0xff]
    %v2592 = vld [vmem:[#allocation6 + $0x688] sm:$0xff]
    %v2593 = vld [vmem:[#allocation6 + $0x690] sm:$0xff]
    %v2594 = vld [vmem:[#allocation6 + $0x698] sm:$0xf]
    %v2595 = vld [vmem:[#allocation6 + $0x69c] sm:$0xff]
    %v2596 = vld [vmem:[#allocation6 + $0x6a4] sm:$0xff]
    %v2597 = vld [vmem:[#allocation6 + $0x6ac] sm:$0xff]
    %v2598 = vld [vmem:[#allocation6 + $0x6b4] sm:$0xff]
    %v2599 = vld [vmem:[#allocation6 + $0x6bc] sm:$0xf]
    %v2600 = vld [vmem:[#allocation6 + $0x6c0] sm:$0xff]
    %v2601 = vld [vmem:[#allocation6 + $0x6c8] sm:$0xff]
    %v2602 = vld [vmem:[#allocation6 + $0x6d0] sm:$0xff]
    %v2603 = vld [vmem:[#allocation6 + $0x6d8] sm:$0xff]
    %v2604 = vld [vmem:[#allocation6 + $0x6e0] sm:$0xf]
    %v2605 = vld [vmem:[#allocation6 + $0x6e4] sm:$0xff]
    %v2606 = vld [vmem:[#allocation6 + $0x6ec] sm:$0xff]
    %v2607 = vld [vmem:[#allocation6 + $0x6f4] sm:$0xff]
    %v2608 = vld [vmem:[#allocation6 + $0x6fc] sm:$0xff]
    %v2609 = vld [vmem:[#allocation6 + $0x704] sm:$0xf]
    %v2610 = vld [vmem:[#allocation6 + $0x708] sm:$0xff]
    %v2611 = vld [vmem:[#allocation6 + $0x710] sm:$0xff]
    %v2612 = vld [vmem:[#allocation6 + $0x718] sm:$0xff]
    %v2613 = vld [vmem:[#allocation6 + $0x720] sm:$0xff]
    %v2614 = vld [vmem:[#allocation6 + $0x728] sm:$0xf]
    %v2615 = vld [vmem:[#allocation6 + $0x72c] sm:$0xff]
    %v2616 = vld [vmem:[#allocation6 + $0x734] sm:$0xff]
    %v2617 = vld [vmem:[#allocation6 + $0x73c] sm:$0xff]
    %v2618 = vld [vmem:[#allocation6 + $0x744] sm:$0xff]
    %v2619 = vld [vmem:[#allocation6 + $0x74c] sm:$0xf]
    %v2620 = vld [vmem:[#allocation6 + $0x750] sm:$0xff]
    %v2621 = vld [vmem:[#allocation6 + $0x758] sm:$0xff]
    %v2622 = vld [vmem:[#allocation6 + $0x760] sm:$0xff]
    %v2623 = vld [vmem:[#allocation6 + $0x768] sm:$0xff]
    %v2624 = vld [vmem:[#allocation6 + $0x770] sm:$0xf]
    %v2625 = vld [vmem:[#allocation6 + $0x774] sm:$0xff]
    %v2626 = vld [vmem:[#allocation6 + $0x77c] sm:$0xff]
    %v2627 = vld [vmem:[#allocation6 + $0x784] sm:$0xff]
    %v2628 = vld [vmem:[#allocation6 + $0x78c] sm:$0xff]
    %v2629 = vld [vmem:[#allocation6 + $0x794] sm:$0xf]
    %v2630 = vld [vmem:[#allocation6 + $0x798] sm:$0xff]
    %v2631 = vld [vmem:[#allocation6 + $0x7a0] sm:$0xff]
    %v2632 = vld [vmem:[#allocation6 + $0x7a8] sm:$0xff]
    %v2633 = vld [vmem:[#allocation6 + $0x7b0] sm:$0xff]
    %v2634 = vld [vmem:[#allocation6 + $0x7b8] sm:$0xf]
    %v2635 = vld [vmem:[#allocation6 + $0x7bc] sm:$0xff]
    %v2636 = vld [vmem:[#allocation6 + $0x7c4] sm:$0xff]
    %v2637 = vld [vmem:[#allocation6 + $0x7cc] sm:$0xff]
    %v2638 = vld [vmem:[#allocation6 + $0x7d4] sm:$0xff]
    %v2639 = vld [vmem:[#allocation6 + $0x7dc] sm:$0xf]
    %v2640 = vld [vmem:[#allocation6 + $0x7e0] sm:$0xff]
    %v2641 = vld [vmem:[#allocation6 + $0x7e8] sm:$0xff]
    %v2642 = vld [vmem:[#allocation6 + $0x7f0] sm:$0xff]
    %v2643 = vld [vmem:[#allocation6 + $0x7f8] sm:$0xff]
    %v2644 = vld [vmem:[#allocation6 + $0x800] sm:$0xf]
    %v2645 = vld [vmem:[#allocation6 + $0x804] sm:$0xff]
    %v2646 = vld [vmem:[#allocation6 + $0x80c] sm:$0xff]
    %v2647 = vld [vmem:[#allocation6 + $0x814] sm:$0xff]
    %v2648 = vld [vmem:[#allocation6 + $0x81c] sm:$0xff]
    %v2649 = vld [vmem:[#allocation6 + $0x824] sm:$0xf]
    %v2650 = vld [vmem:[#allocation6 + $0x828] sm:$0xff]
    %v2651 = vld [vmem:[#allocation6 + $0x830] sm:$0xff]
    %v2652 = vld [vmem:[#allocation6 + $0x838] sm:$0xff]
    %v2653 = vld [vmem:[#allocation6 + $0x840] sm:$0xff]
    %v2654 = vld [vmem:[#allocation6 + $0x848] sm:$0xf]
    %v2655 = vld [vmem:[#allocation6 + $0x84c] sm:$0xff]
    %v2656 = vld [vmem:[#allocation6 + $0x854] sm:$0xff]
    %v2657 = vld [vmem:[#allocation6 + $0x85c] sm:$0xff]
    %v2658 = vld [vmem:[#allocation6 + $0x864] sm:$0xff]
    %v2659 = vld [vmem:[#allocation6 + $0x86c] sm:$0xf]
    %v2660 = vld [vmem:[#allocation6 + $0x870] sm:$0xff]
    %v2661 = vld [vmem:[#allocation6 + $0x878] sm:$0xff]
    %v2662 = vld [vmem:[#allocation6 + $0x880] sm:$0xff]
    %v2663 = vld [vmem:[#allocation6 + $0x888] sm:$0xff]
    %v2664 = vld [vmem:[#allocation6 + $0x890] sm:$0xf]
    %v2665 = vld [vmem:[#allocation6 + $0x894] sm:$0xff]
    %v2666 = vld [vmem:[#allocation6 + $0x89c] sm:$0xff]
    %v2667 = vld [vmem:[#allocation6 + $0x8a4] sm:$0xff]
    %v2668 = vld [vmem:[#allocation6 + $0x8ac] sm:$0xff]
    %v2669 = vld [vmem:[#allocation6 + $0x8b4] sm:$0xf]
    %v2670 = vld [vmem:[#allocation6 + $0x8b8] sm:$0xff]
    %v2671 = vld [vmem:[#allocation6 + $0x8c0] sm:$0xff]
    %v2672 = vld [vmem:[#allocation6 + $0x8c8] sm:$0xff]
    %v2673 = vld [vmem:[#allocation6 + $0x8d0] sm:$0xff]
    %v2674 = vld [vmem:[#allocation6 + $0x8d8] sm:$0xf]
    %v2675 = vld [vmem:[#allocation6 + $0x8dc] sm:$0xff]
    %v2676 = vld [vmem:[#allocation6 + $0x8e4] sm:$0xff]
    %v2677 = vld [vmem:[#allocation6 + $0x8ec] sm:$0xff]
    %v2678 = vld [vmem:[#allocation6 + $0x8f4] sm:$0xff]
    %v2679 = vld [vmem:[#allocation6 + $0x8fc] sm:$0xf]
    %v2680 = vld [vmem:[#allocation7] sm:$0xff]
    %v2681 = vld [vmem:[#allocation7 + $0x8] sm:$0x1]
    %v2684 = vlaneseq
    %v2685 = vshrl.u32 %v2684, 7
    %v2686 = vsub.s32 0, %v2685
    %v2687 = vrot.slane %v2680, %v2686
    %v2688 = vlaneseq
    %v2689 = vshrl.u32 %v2688, 7
    %v2690 = vsub.s32 1, %v2689
    %v2691 = vrot.slane %v2680, %v2690
    %v2692 = vlaneseq
    %v2693 = vshrl.u32 %v2692, 7
    %v2694 = vsub.s32 2, %v2693
    %v2695 = vrot.slane %v2680, %v2694
    %v2696 = vlaneseq
    %v2697 = vshrl.u32 %v2696, 7
    %v2698 = vsub.s32 3, %v2697
    %v2699 = vrot.slane %v2680, %v2698
    %v2700 = vlaneseq
    %v2701 = vshrl.u32 %v2700, 7
    %v2702 = vsub.s32 4, %v2701
    %v2703 = vrot.slane %v2680, %v2702
    %v2704 = vlaneseq
    %v2705 = vshrl.u32 %v2704, 7
    %v2706 = vsub.s32 5, %v2705
    %v2707 = vrot.slane %v2680, %v2706
    %v2708 = vlaneseq
    %v2709 = vshrl.u32 %v2708, 7
    %v2710 = vsub.s32 6, %v2709
    %v2711 = vrot.slane %v2680, %v2710
    %v2712 = vlaneseq
    %v2713 = vshrl.u32 %v2712, 7
    %v2714 = vsub.s32 7, %v2713
    %v2715 = vrot.slane %v2680, %v2714
    %v2716 = vlaneseq
    %v2717 = vshrl.u32 %v2716, 7
    %v2718 = vsub.s32 0, %v2717
    %v2719 = vrot.slane %v2681, %v2718
    %v3049 = vunpack.c.l.b16 %v2360
    %v3050 = vunpack.c.h.b16 %v2360
    %v3051 = vunpack.c.l.b16 %v2361
    %v3052 = vunpack.c.h.b16 %v2361
    %v3053 = vunpack.c.l.b16 %v2362
    %v3054 = vunpack.c.h.b16 %v2362
    %v3055 = vunpack.c.l.b16 %v2363
    %v3056 = vunpack.c.h.b16 %v2363
    %v3057 = vunpack.c.l.b16 %v2364
    %v3058 = vunpack.c.l.b16 %v2365
    %v3059 = vunpack.c.h.b16 %v2365
    %v3060 = vunpack.c.l.b16 %v2366
    %v3061 = vunpack.c.h.b16 %v2366
    %v3062 = vunpack.c.l.b16 %v2367
    %v3063 = vunpack.c.h.b16 %v2367
    %v3064 = vunpack.c.l.b16 %v2368
    %v3065 = vunpack.c.h.b16 %v2368
    %v3066 = vunpack.c.l.b16 %v2369
    %v3067 = vunpack.c.l.b16 %v2370
    %v3068 = vunpack.c.h.b16 %v2370
    %v3069 = vunpack.c.l.b16 %v2371
    %v3070 = vunpack.c.h.b16 %v2371
    %v3071 = vunpack.c.l.b16 %v2372
    %v3072 = vunpack.c.h.b16 %v2372
    %v3073 = vunpack.c.l.b16 %v2373
    %v3074 = vunpack.c.h.b16 %v2373
    %v3075 = vunpack.c.l.b16 %v2374
    %v3076 = vunpack.c.l.b16 %v2375
    %v3077 = vunpack.c.h.b16 %v2375
    %v3078 = vunpack.c.l.b16 %v2376
    %v3079 = vunpack.c.h.b16 %v2376
    %v3080 = vunpack.c.l.b16 %v2377
    %v3081 = vunpack.c.h.b16 %v2377
    %v3082 = vunpack.c.l.b16 %v2378
    %v3083 = vunpack.c.h.b16 %v2378
    %v3084 = vunpack.c.l.b16 %v2379
    %v3085 = vunpack.c.l.b16 %v2380
    %v3086 = vunpack.c.h.b16 %v2380
    %v3087 = vunpack.c.l.b16 %v2381
    %v3088 = vunpack.c.h.b16 %v2381
    %v3089 = vunpack.c.l.b16 %v2382
    %v3090 = vunpack.c.h.b16 %v2382
    %v3091 = vunpack.c.l.b16 %v2383
    %v3092 = vunpack.c.h.b16 %v2383
    %v3093 = vunpack.c.l.b16 %v2384
    %v3094 = vunpack.c.l.b16 %v2385
    %v3095 = vunpack.c.h.b16 %v2385
    %v3096 = vunpack.c.l.b16 %v2386
    %v3097 = vunpack.c.h.b16 %v2386
    %v3098 = vunpack.c.l.b16 %v2387
    %v3099 = vunpack.c.h.b16 %v2387
    %v3100 = vunpack.c.l.b16 %v2388
    %v3101 = vunpack.c.h.b16 %v2388
    %v3102 = vunpack.c.l.b16 %v2389
    %v3103 = vunpack.c.l.b16 %v2390
    %v3104 = vunpack.c.h.b16 %v2390
    %v3105 = vunpack.c.l.b16 %v2391
    %v3106 = vunpack.c.h.b16 %v2391
    %v3107 = vunpack.c.l.b16 %v2392
    %v3108 = vunpack.c.h.b16 %v2392
    %v3109 = vunpack.c.l.b16 %v2393
    %v3110 = vunpack.c.h.b16 %v2393
    %v3111 = vunpack.c.l.b16 %v2394
    %v3112 = vunpack.c.l.b16 %v2395
    %v3113 = vunpack.c.h.b16 %v2395
    %v3114 = vunpack.c.l.b16 %v2396
    %v3115 = vunpack.c.h.b16 %v2396
    %v3116 = vunpack.c.l.b16 %v2397
    %v3117 = vunpack.c.h.b16 %v2397
    %v3118 = vunpack.c.l.b16 %v2398
    %v3119 = vunpack.c.h.b16 %v2398
    %v3120 = vunpack.c.l.b16 %v2399
    %v3121 = vunpack.c.l.b16 %v2400
    %v3122 = vunpack.c.h.b16 %v2400
    %v3123 = vunpack.c.l.b16 %v2401
    %v3124 = vunpack.c.h.b16 %v2401
    %v3125 = vunpack.c.l.b16 %v2402
    %v3126 = vunpack.c.h.b16 %v2402
    %v3127 = vunpack.c.l.b16 %v2403
    %v3128 = vunpack.c.h.b16 %v2403
    %v3129 = vunpack.c.l.b16 %v2404
    %v3130 = vunpack.c.l.b16 %v2405
    %v3131 = vunpack.c.h.b16 %v2405
    %v3132 = vunpack.c.l.b16 %v2406
    %v3133 = vunpack.c.h.b16 %v2406
    %v3134 = vunpack.c.l.b16 %v2407
    %v3135 = vunpack.c.h.b16 %v2407
    %v3136 = vunpack.c.l.b16 %v2408
    %v3137 = vunpack.c.h.b16 %v2408
    %v3138 = vunpack.c.l.b16 %v2409
    %v3139 = vunpack.c.l.b16 %v2410
    %v3140 = vunpack.c.h.b16 %v2410
    %v3141 = vunpack.c.l.b16 %v2411
    %v3142 = vunpack.c.h.b16 %v2411
    %v3143 = vunpack.c.l.b16 %v2412
    %v3144 = vunpack.c.h.b16 %v2412
    %v3145 = vunpack.c.l.b16 %v2413
    %v3146 = vunpack.c.h.b16 %v2413
    %v3147 = vunpack.c.l.b16 %v2414
    %v3148 = vunpack.c.l.b16 %v2415
    %v3149 = vunpack.c.h.b16 %v2415
    %v3150 = vunpack.c.l.b16 %v2416
    %v3151 = vunpack.c.h.b16 %v2416
    %v3152 = vunpack.c.l.b16 %v2417
    %v3153 = vunpack.c.h.b16 %v2417
    %v3154 = vunpack.c.l.b16 %v2418
    %v3155 = vunpack.c.h.b16 %v2418
    %v3156 = vunpack.c.l.b16 %v2419
    %v3157 = vunpack.c.l.b16 %v2420
    %v3158 = vunpack.c.h.b16 %v2420
    %v3159 = vunpack.c.l.b16 %v2421
    %v3160 = vunpack.c.h.b16 %v2421
    %v3161 = vunpack.c.l.b16 %v2422
    %v3162 = vunpack.c.h.b16 %v2422
    %v3163 = vunpack.c.l.b16 %v2423
    %v3164 = vunpack.c.h.b16 %v2423
    %v3165 = vunpack.c.l.b16 %v2424
    %v3166 = vunpack.c.l.b16 %v2425
    %v3167 = vunpack.c.h.b16 %v2425
    %v3168 = vunpack.c.l.b16 %v2426
    %v3169 = vunpack.c.h.b16 %v2426
    %v3170 = vunpack.c.l.b16 %v2427
    %v3171 = vunpack.c.h.b16 %v2427
    %v3172 = vunpack.c.l.b16 %v2428
    %v3173 = vunpack.c.h.b16 %v2428
    %v3174 = vunpack.c.l.b16 %v2429
    %v3175 = vunpack.c.l.b16 %v2430
    %v3176 = vunpack.c.h.b16 %v2430
    %v3177 = vunpack.c.l.b16 %v2431
    %v3178 = vunpack.c.h.b16 %v2431
    %v3179 = vunpack.c.l.b16 %v2432
    %v3180 = vunpack.c.h.b16 %v2432
    %v3181 = vunpack.c.l.b16 %v2433
    %v3182 = vunpack.c.h.b16 %v2433
    %v3183 = vunpack.c.l.b16 %v2434
    %v3184 = vunpack.c.l.b16 %v2435
    %v3185 = vunpack.c.h.b16 %v2435
    %v3186 = vunpack.c.l.b16 %v2436
    %v3187 = vunpack.c.h.b16 %v2436
    %v3188 = vunpack.c.l.b16 %v2437
    %v3189 = vunpack.c.h.b16 %v2437
    %v3190 = vunpack.c.l.b16 %v2438
    %v3191 = vunpack.c.h.b16 %v2438
    %v3192 = vunpack.c.l.b16 %v2439
    %v3193 = vunpack.c.l.b16 %v2440
    %v3194 = vunpack.c.h.b16 %v2440
    %v3195 = vunpack.c.l.b16 %v2441
    %v3196 = vunpack.c.h.b16 %v2441
    %v3197 = vunpack.c.l.b16 %v2442
    %v3198 = vunpack.c.h.b16 %v2442
    %v3199 = vunpack.c.l.b16 %v2443
    %v3200 = vunpack.c.h.b16 %v2443
    %v3201 = vunpack.c.l.b16 %v2444
    %v3202 = vunpack.c.l.b16 %v2445
    %v3203 = vunpack.c.h.b16 %v2445
    %v3204 = vunpack.c.l.b16 %v2446
    %v3205 = vunpack.c.h.b16 %v2446
    %v3206 = vunpack.c.l.b16 %v2447
    %v3207 = vunpack.c.h.b16 %v2447
    %v3208 = vunpack.c.l.b16 %v2448
    %v3209 = vunpack.c.h.b16 %v2448
    %v3210 = vunpack.c.l.b16 %v2449
    %v3211 = vunpack.c.l.b16 %v2450
    %v3212 = vunpack.c.h.b16 %v2450
    %v3213 = vunpack.c.l.b16 %v2451
    %v3214 = vunpack.c.h.b16 %v2451
    %v3215 = vunpack.c.l.b16 %v2452
    %v3216 = vunpack.c.h.b16 %v2452
    %v3217 = vunpack.c.l.b16 %v2453
    %v3218 = vunpack.c.h.b16 %v2453
    %v3219 = vunpack.c.l.b16 %v2454
    %v3220 = vunpack.c.l.b16 %v2455
    %v3221 = vunpack.c.h.b16 %v2455
    %v3222 = vunpack.c.l.b16 %v2456
    %v3223 = vunpack.c.h.b16 %v2456
    %v3224 = vunpack.c.l.b16 %v2457
    %v3225 = vunpack.c.h.b16 %v2457
    %v3226 = vunpack.c.l.b16 %v2458
    %v3227 = vunpack.c.h.b16 %v2458
    %v3228 = vunpack.c.l.b16 %v2459
    %v3229 = vunpack.c.l.b16 %v2460
    %v3230 = vunpack.c.h.b16 %v2460
    %v3231 = vunpack.c.l.b16 %v2461
    %v3232 = vunpack.c.h.b16 %v2461
    %v3233 = vunpack.c.l.b16 %v2462
    %v3234 = vunpack.c.h.b16 %v2462
    %v3235 = vunpack.c.l.b16 %v2463
    %v3236 = vunpack.c.h.b16 %v2463
    %v3237 = vunpack.c.l.b16 %v2464
    %v3238 = vunpack.c.l.b16 %v2465
    %v3239 = vunpack.c.h.b16 %v2465
    %v3240 = vunpack.c.l.b16 %v2466
    %v3241 = vunpack.c.h.b16 %v2466
    %v3242 = vunpack.c.l.b16 %v2467
    %v3243 = vunpack.c.h.b16 %v2467
    %v3244 = vunpack.c.l.b16 %v2468
    %v3245 = vunpack.c.h.b16 %v2468
    %v3246 = vunpack.c.l.b16 %v2469
    %v3247 = vunpack.c.l.b16 %v2470
    %v3248 = vunpack.c.h.b16 %v2470
    %v3249 = vunpack.c.l.b16 %v2471
    %v3250 = vunpack.c.h.b16 %v2471
    %v3251 = vunpack.c.l.b16 %v2472
    %v3252 = vunpack.c.h.b16 %v2472
    %v3253 = vunpack.c.l.b16 %v2473
    %v3254 = vunpack.c.h.b16 %v2473
    %v3255 = vunpack.c.l.b16 %v2474
    %v3256 = vunpack.c.l.b16 %v2475
    %v3257 = vunpack.c.h.b16 %v2475
    %v3258 = vunpack.c.l.b16 %v2476
    %v3259 = vunpack.c.h.b16 %v2476
    %v3260 = vunpack.c.l.b16 %v2477
    %v3261 = vunpack.c.h.b16 %v2477
    %v3262 = vunpack.c.l.b16 %v2478
    %v3263 = vunpack.c.h.b16 %v2478
    %v3264 = vunpack.c.l.b16 %v2479
    %v3265 = vunpack.c.l.b16 %v2480
    %v3266 = vunpack.c.h.b16 %v2480
    %v3267 = vunpack.c.l.b16 %v2481
    %v3268 = vunpack.c.h.b16 %v2481
    %v3269 = vunpack.c.l.b16 %v2482
    %v3270 = vunpack.c.h.b16 %v2482
    %v3271 = vunpack.c.l.b16 %v2483
    %v3272 = vunpack.c.h.b16 %v2483
    %v3273 = vunpack.c.l.b16 %v2484
    %v3274 = vunpack.c.l.b16 %v2485
    %v3275 = vunpack.c.h.b16 %v2485
    %v3276 = vunpack.c.l.b16 %v2486
    %v3277 = vunpack.c.h.b16 %v2486
    %v3278 = vunpack.c.l.b16 %v2487
    %v3279 = vunpack.c.h.b16 %v2487
    %v3280 = vunpack.c.l.b16 %v2488
    %v3281 = vunpack.c.h.b16 %v2488
    %v3282 = vunpack.c.l.b16 %v2489
    %v3283 = vunpack.c.l.b16 %v2490
    %v3284 = vunpack.c.h.b16 %v2490
    %v3285 = vunpack.c.l.b16 %v2491
    %v3286 = vunpack.c.h.b16 %v2491
    %v3287 = vunpack.c.l.b16 %v2492
    %v3288 = vunpack.c.h.b16 %v2492
    %v3289 = vunpack.c.l.b16 %v2493
    %v3290 = vunpack.c.h.b16 %v2493
    %v3291 = vunpack.c.l.b16 %v2494
    %v3292 = vunpack.c.l.b16 %v2495
    %v3293 = vunpack.c.h.b16 %v2495
    %v3294 = vunpack.c.l.b16 %v2496
    %v3295 = vunpack.c.h.b16 %v2496
    %v3296 = vunpack.c.l.b16 %v2497
    %v3297 = vunpack.c.h.b16 %v2497
    %v3298 = vunpack.c.l.b16 %v2498
    %v3299 = vunpack.c.h.b16 %v2498
    %v3300 = vunpack.c.l.b16 %v2499
    %v3301 = vunpack.c.l.b16 %v2500
    %v3302 = vunpack.c.h.b16 %v2500
    %v3303 = vunpack.c.l.b16 %v2501
    %v3304 = vunpack.c.h.b16 %v2501
    %v3305 = vunpack.c.l.b16 %v2502
    %v3306 = vunpack.c.h.b16 %v2502
    %v3307 = vunpack.c.l.b16 %v2503
    %v3308 = vunpack.c.h.b16 %v2503
    %v3309 = vunpack.c.l.b16 %v2504
    %v3310 = vunpack.c.l.b16 %v2505
    %v3311 = vunpack.c.h.b16 %v2505
    %v3312 = vunpack.c.l.b16 %v2506
    %v3313 = vunpack.c.h.b16 %v2506
    %v3314 = vunpack.c.l.b16 %v2507
    %v3315 = vunpack.c.h.b16 %v2507
    %v3316 = vunpack.c.l.b16 %v2508
    %v3317 = vunpack.c.h.b16 %v2508
    %v3318 = vunpack.c.l.b16 %v2509
    %v3319 = vunpack.c.l.b16 %v2510
    %v3320 = vunpack.c.h.b16 %v2510
    %v3321 = vunpack.c.l.b16 %v2511
    %v3322 = vunpack.c.h.b16 %v2511
    %v3323 = vunpack.c.l.b16 %v2512
    %v3324 = vunpack.c.h.b16 %v2512
    %v3325 = vunpack.c.l.b16 %v2513
    %v3326 = vunpack.c.h.b16 %v2513
    %v3327 = vunpack.c.l.b16 %v2514
    %v3328 = vunpack.c.l.b16 %v2515
    %v3329 = vunpack.c.h.b16 %v2515
    %v3330 = vunpack.c.l.b16 %v2516
    %v3331 = vunpack.c.h.b16 %v2516
    %v3332 = vunpack.c.l.b16 %v2517
    %v3333 = vunpack.c.h.b16 %v2517
    %v3334 = vunpack.c.l.b16 %v2518
    %v3335 = vunpack.c.h.b16 %v2518
    %v3336 = vunpack.c.l.b16 %v2519
    %v3337 = vunpack.c.l.b16 %v2520
    %v3338 = vunpack.c.h.b16 %v2520
    %v3339 = vunpack.c.l.b16 %v2521
    %v3340 = vunpack.c.h.b16 %v2521
    %v3341 = vunpack.c.l.b16 %v2522
    %v3342 = vunpack.c.h.b16 %v2522
    %v3343 = vunpack.c.l.b16 %v2523
    %v3344 = vunpack.c.h.b16 %v2523
    %v3345 = vunpack.c.l.b16 %v2524
    %v3346 = vunpack.c.l.b16 %v2525
    %v3347 = vunpack.c.h.b16 %v2525
    %v3348 = vunpack.c.l.b16 %v2526
    %v3349 = vunpack.c.h.b16 %v2526
    %v3350 = vunpack.c.l.b16 %v2527
    %v3351 = vunpack.c.h.b16 %v2527
    %v3352 = vunpack.c.l.b16 %v2528
    %v3353 = vunpack.c.h.b16 %v2528
    %v3354 = vunpack.c.l.b16 %v2529
    %v3355 = vunpack.c.l.b16 %v2530
    %v3356 = vunpack.c.h.b16 %v2530
    %v3357 = vunpack.c.l.b16 %v2531
    %v3358 = vunpack.c.h.b16 %v2531
    %v3359 = vunpack.c.l.b16 %v2532
    %v3360 = vunpack.c.h.b16 %v2532
    %v3361 = vunpack.c.l.b16 %v2533
    %v3362 = vunpack.c.h.b16 %v2533
    %v3363 = vunpack.c.l.b16 %v2534
    %v3364 = vunpack.c.l.b16 %v2535
    %v3365 = vunpack.c.h.b16 %v2535
    %v3366 = vunpack.c.l.b16 %v2536
    %v3367 = vunpack.c.h.b16 %v2536
    %v3368 = vunpack.c.l.b16 %v2537
    %v3369 = vunpack.c.h.b16 %v2537
    %v3370 = vunpack.c.l.b16 %v2538
    %v3371 = vunpack.c.h.b16 %v2538
    %v3372 = vunpack.c.l.b16 %v2539
    %v3373 = vunpack.c.l.b16 %v2540
    %v3374 = vunpack.c.h.b16 %v2540
    %v3375 = vunpack.c.l.b16 %v2541
    %v3376 = vunpack.c.h.b16 %v2541
    %v3377 = vunpack.c.l.b16 %v2542
    %v3378 = vunpack.c.h.b16 %v2542
    %v3379 = vunpack.c.l.b16 %v2543
    %v3380 = vunpack.c.h.b16 %v2543
    %v3381 = vunpack.c.l.b16 %v2544
    %v3382 = vunpack.c.l.b16 %v2545
    %v3383 = vunpack.c.h.b16 %v2545
    %v3384 = vunpack.c.l.b16 %v2546
    %v3385 = vunpack.c.h.b16 %v2546
    %v3386 = vunpack.c.l.b16 %v2547
    %v3387 = vunpack.c.h.b16 %v2547
    %v3388 = vunpack.c.l.b16 %v2548
    %v3389 = vunpack.c.h.b16 %v2548
    %v3390 = vunpack.c.l.b16 %v2549
    %v3391 = vunpack.c.l.b16 %v2550
    %v3392 = vunpack.c.h.b16 %v2550
    %v3393 = vunpack.c.l.b16 %v2551
    %v3394 = vunpack.c.h.b16 %v2551
    %v3395 = vunpack.c.l.b16 %v2552
    %v3396 = vunpack.c.h.b16 %v2552
    %v3397 = vunpack.c.l.b16 %v2553
    %v3398 = vunpack.c.h.b16 %v2553
    %v3399 = vunpack.c.l.b16 %v2554
    %v3400 = vunpack.c.l.b16 %v2555
    %v3401 = vunpack.c.h.b16 %v2555
    %v3402 = vunpack.c.l.b16 %v2556
    %v3403 = vunpack.c.h.b16 %v2556
    %v3404 = vunpack.c.l.b16 %v2557
    %v3405 = vunpack.c.h.b16 %v2557
    %v3406 = vunpack.c.l.b16 %v2558
    %v3407 = vunpack.c.h.b16 %v2558
    %v3408 = vunpack.c.l.b16 %v2559
    %v3409 = vunpack.c.l.b16 %v2560
    %v3410 = vunpack.c.h.b16 %v2560
    %v3411 = vunpack.c.l.b16 %v2561
    %v3412 = vunpack.c.h.b16 %v2561
    %v3413 = vunpack.c.l.b16 %v2562
    %v3414 = vunpack.c.h.b16 %v2562
    %v3415 = vunpack.c.l.b16 %v2563
    %v3416 = vunpack.c.h.b16 %v2563
    %v3417 = vunpack.c.l.b16 %v2564
    %v3418 = vunpack.c.l.b16 %v2565
    %v3419 = vunpack.c.h.b16 %v2565
    %v3420 = vunpack.c.l.b16 %v2566
    %v3421 = vunpack.c.h.b16 %v2566
    %v3422 = vunpack.c.l.b16 %v2567
    %v3423 = vunpack.c.h.b16 %v2567
    %v3424 = vunpack.c.l.b16 %v2568
    %v3425 = vunpack.c.h.b16 %v2568
    %v3426 = vunpack.c.l.b16 %v2569
    %v3427 = vunpack.c.l.b16 %v2570
    %v3428 = vunpack.c.h.b16 %v2570
    %v3429 = vunpack.c.l.b16 %v2571
    %v3430 = vunpack.c.h.b16 %v2571
    %v3431 = vunpack.c.l.b16 %v2572
    %v3432 = vunpack.c.h.b16 %v2572
    %v3433 = vunpack.c.l.b16 %v2573
    %v3434 = vunpack.c.h.b16 %v2573
    %v3435 = vunpack.c.l.b16 %v2574
    %v3436 = vunpack.c.l.b16 %v2575
    %v3437 = vunpack.c.h.b16 %v2575
    %v3438 = vunpack.c.l.b16 %v2576
    %v3439 = vunpack.c.h.b16 %v2576
    %v3440 = vunpack.c.l.b16 %v2577
    %v3441 = vunpack.c.h.b16 %v2577
    %v3442 = vunpack.c.l.b16 %v2578
    %v3443 = vunpack.c.h.b16 %v2578
    %v3444 = vunpack.c.l.b16 %v2579
    %v3445 = vunpack.c.l.b16 %v2580
    %v3446 = vunpack.c.h.b16 %v2580
    %v3447 = vunpack.c.l.b16 %v2581
    %v3448 = vunpack.c.h.b16 %v2581
    %v3449 = vunpack.c.l.b16 %v2582
    %v3450 = vunpack.c.h.b16 %v2582
    %v3451 = vunpack.c.l.b16 %v2583
    %v3452 = vunpack.c.h.b16 %v2583
    %v3453 = vunpack.c.l.b16 %v2584
    %v3454 = vunpack.c.l.b16 %v2585
    %v3455 = vunpack.c.h.b16 %v2585
    %v3456 = vunpack.c.l.b16 %v2586
    %v3457 = vunpack.c.h.b16 %v2586
    %v3458 = vunpack.c.l.b16 %v2587
    %v3459 = vunpack.c.h.b16 %v2587
    %v3460 = vunpack.c.l.b16 %v2588
    %v3461 = vunpack.c.h.b16 %v2588
    %v3462 = vunpack.c.l.b16 %v2589
    %v3463 = vunpack.c.l.b16 %v2590
    %v3464 = vunpack.c.h.b16 %v2590
    %v3465 = vunpack.c.l.b16 %v2591
    %v3466 = vunpack.c.h.b16 %v2591
    %v3467 = vunpack.c.l.b16 %v2592
    %v3468 = vunpack.c.h.b16 %v2592
    %v3469 = vunpack.c.l.b16 %v2593
    %v3470 = vunpack.c.h.b16 %v2593
    %v3471 = vunpack.c.l.b16 %v2594
    %v3472 = vunpack.c.l.b16 %v2595
    %v3473 = vunpack.c.h.b16 %v2595
    %v3474 = vunpack.c.l.b16 %v2596
    %v3475 = vunpack.c.h.b16 %v2596
    %v3476 = vunpack.c.l.b16 %v2597
    %v3477 = vunpack.c.h.b16 %v2597
    %v3478 = vunpack.c.l.b16 %v2598
    %v3479 = vunpack.c.h.b16 %v2598
    %v3480 = vunpack.c.l.b16 %v2599
    %v3481 = vunpack.c.l.b16 %v2600
    %v3482 = vunpack.c.h.b16 %v2600
    %v3483 = vunpack.c.l.b16 %v2601
    %v3484 = vunpack.c.h.b16 %v2601
    %v3485 = vunpack.c.l.b16 %v2602
    %v3486 = vunpack.c.h.b16 %v2602
    %v3487 = vunpack.c.l.b16 %v2603
    %v3488 = vunpack.c.h.b16 %v2603
    %v3489 = vunpack.c.l.b16 %v2604
    %v3490 = vunpack.c.l.b16 %v2605
    %v3491 = vunpack.c.h.b16 %v2605
    %v3492 = vunpack.c.l.b16 %v2606
    %v3493 = vunpack.c.h.b16 %v2606
    %v3494 = vunpack.c.l.b16 %v2607
    %v3495 = vunpack.c.h.b16 %v2607
    %v3496 = vunpack.c.l.b16 %v2608
    %v3497 = vunpack.c.h.b16 %v2608
    %v3498 = vunpack.c.l.b16 %v2609
    %v3499 = vunpack.c.l.b16 %v2610
    %v3500 = vunpack.c.h.b16 %v2610
    %v3501 = vunpack.c.l.b16 %v2611
    %v3502 = vunpack.c.h.b16 %v2611
    %v3503 = vunpack.c.l.b16 %v2612
    %v3504 = vunpack.c.h.b16 %v2612
    %v3505 = vunpack.c.l.b16 %v2613
    %v3506 = vunpack.c.h.b16 %v2613
    %v3507 = vunpack.c.l.b16 %v2614
    %v3508 = vunpack.c.l.b16 %v2615
    %v3509 = vunpack.c.h.b16 %v2615
    %v3510 = vunpack.c.l.b16 %v2616
    %v3511 = vunpack.c.h.b16 %v2616
    %v3512 = vunpack.c.l.b16 %v2617
    %v3513 = vunpack.c.h.b16 %v2617
    %v3514 = vunpack.c.l.b16 %v2618
    %v3515 = vunpack.c.h.b16 %v2618
    %v3516 = vunpack.c.l.b16 %v2619
    %v3517 = vunpack.c.l.b16 %v2620
    %v3518 = vunpack.c.h.b16 %v2620
    %v3519 = vunpack.c.l.b16 %v2621
    %v3520 = vunpack.c.h.b16 %v2621
    %v3521 = vunpack.c.l.b16 %v2622
    %v3522 = vunpack.c.h.b16 %v2622
    %v3523 = vunpack.c.l.b16 %v2623
    %v3524 = vunpack.c.h.b16 %v2623
    %v3525 = vunpack.c.l.b16 %v2624
    %v3526 = vunpack.c.l.b16 %v2625
    %v3527 = vunpack.c.h.b16 %v2625
    %v3528 = vunpack.c.l.b16 %v2626
    %v3529 = vunpack.c.h.b16 %v2626
    %v3530 = vunpack.c.l.b16 %v2627
    %v3531 = vunpack.c.h.b16 %v2627
    %v3532 = vunpack.c.l.b16 %v2628
    %v3533 = vunpack.c.h.b16 %v2628
    %v3534 = vunpack.c.l.b16 %v2629
    %v3535 = vunpack.c.l.b16 %v2630
    %v3536 = vunpack.c.h.b16 %v2630
    %v3537 = vunpack.c.l.b16 %v2631
    %v3538 = vunpack.c.h.b16 %v2631
    %v3539 = vunpack.c.l.b16 %v2632
    %v3540 = vunpack.c.h.b16 %v2632
    %v3541 = vunpack.c.l.b16 %v2633
    %v3542 = vunpack.c.h.b16 %v2633
    %v3543 = vunpack.c.l.b16 %v2634
    %v3544 = vunpack.c.l.b16 %v2635
    %v3545 = vunpack.c.h.b16 %v2635
    %v3546 = vunpack.c.l.b16 %v2636
    %v3547 = vunpack.c.h.b16 %v2636
    %v3548 = vunpack.c.l.b16 %v2637
    %v3549 = vunpack.c.h.b16 %v2637
    %v3550 = vunpack.c.l.b16 %v2638
    %v3551 = vunpack.c.h.b16 %v2638
    %v3552 = vunpack.c.l.b16 %v2639
    %v3553 = vunpack.c.l.b16 %v2640
    %v3554 = vunpack.c.h.b16 %v2640
    %v3555 = vunpack.c.l.b16 %v2641
    %v3556 = vunpack.c.h.b16 %v2641
    %v3557 = vunpack.c.l.b16 %v2642
    %v3558 = vunpack.c.h.b16 %v2642
    %v3559 = vunpack.c.l.b16 %v2643
    %v3560 = vunpack.c.h.b16 %v2643
    %v3561 = vunpack.c.l.b16 %v2644
    %v3562 = vunpack.c.l.b16 %v2645
    %v3563 = vunpack.c.h.b16 %v2645
    %v3564 = vunpack.c.l.b16 %v2646
    %v3565 = vunpack.c.h.b16 %v2646
    %v3566 = vunpack.c.l.b16 %v2647
    %v3567 = vunpack.c.h.b16 %v2647
    %v3568 = vunpack.c.l.b16 %v2648
    %v3569 = vunpack.c.h.b16 %v2648
    %v3570 = vunpack.c.l.b16 %v2649
    %v3571 = vunpack.c.l.b16 %v2650
    %v3572 = vunpack.c.h.b16 %v2650
    %v3573 = vunpack.c.l.b16 %v2651
    %v3574 = vunpack.c.h.b16 %v2651
    %v3575 = vunpack.c.l.b16 %v2652
    %v3576 = vunpack.c.h.b16 %v2652
    %v3577 = vunpack.c.l.b16 %v2653
    %v3578 = vunpack.c.h.b16 %v2653
    %v3579 = vunpack.c.l.b16 %v2654
    %v3580 = vunpack.c.l.b16 %v2655
    %v3581 = vunpack.c.h.b16 %v2655
    %v3582 = vunpack.c.l.b16 %v2656
    %v3583 = vunpack.c.h.b16 %v2656
    %v3584 = vunpack.c.l.b16 %v2657
    %v3585 = vunpack.c.h.b16 %v2657
    %v3586 = vunpack.c.l.b16 %v2658
    %v3587 = vunpack.c.h.b16 %v2658
    %v3588 = vunpack.c.l.b16 %v2659
    %v3589 = vunpack.c.l.b16 %v2660
    %v3590 = vunpack.c.h.b16 %v2660
    %v3591 = vunpack.c.l.b16 %v2661
    %v3592 = vunpack.c.h.b16 %v2661
    %v3593 = vunpack.c.l.b16 %v2662
    %v3594 = vunpack.c.h.b16 %v2662
    %v3595 = vunpack.c.l.b16 %v2663
    %v3596 = vunpack.c.h.b16 %v2663
    %v3597 = vunpack.c.l.b16 %v2664
    %v3598 = vunpack.c.l.b16 %v2665
    %v3599 = vunpack.c.h.b16 %v2665
    %v3600 = vunpack.c.l.b16 %v2666
    %v3601 = vunpack.c.h.b16 %v2666
    %v3602 = vunpack.c.l.b16 %v2667
    %v3603 = vunpack.c.h.b16 %v2667
    %v3604 = vunpack.c.l.b16 %v2668
    %v3605 = vunpack.c.h.b16 %v2668
    %v3606 = vunpack.c.l.b16 %v2669
    %v3607 = vunpack.c.l.b16 %v2670
    %v3608 = vunpack.c.h.b16 %v2670
    %v3609 = vunpack.c.l.b16 %v2671
    %v3610 = vunpack.c.h.b16 %v2671
    %v3611 = vunpack.c.l.b16 %v2672
    %v3612 = vunpack.c.h.b16 %v2672
    %v3613 = vunpack.c.l.b16 %v2673
    %v3614 = vunpack.c.h.b16 %v2673
    %v3615 = vunpack.c.l.b16 %v2674
    %v3616 = vunpack.c.l.b16 %v2675
    %v3617 = vunpack.c.h.b16 %v2675
    %v3618 = vunpack.c.l.b16 %v2676
    %v3619 = vunpack.c.h.b16 %v2676
    %v3620 = vunpack.c.l.b16 %v2677
    %v3621 = vunpack.c.h.b16 %v2677
    %v3622 = vunpack.c.l.b16 %v2678
    %v3623 = vunpack.c.h.b16 %v2678
    %v3624 = vunpack.c.l.b16 %v2679
    %v3625 = vpack.c.b16 %v3058, %v3049
    %v3626 = vpack.c.b16 %v3059, %v3050
    %v3627 = vpack.c.b16 %v3060, %v3051
    %v3628 = vpack.c.b16 %v3061, %v3052
    %v3629 = vpack.c.b16 %v3062, %v3053
    %v3630 = vpack.c.b16 %v3063, %v3054
    %v3631 = vpack.c.b16 %v3064, %v3055
    %v3632 = vpack.c.b16 %v3065, %v3056
    %v3633 = vpack.c.b16 %v3066, %v3057
    %v3634 = vpack.c.b16 %v3076, %v3067
    %v3635 = vpack.c.b16 %v3077, %v3068
    %v3636 = vpack.c.b16 %v3078, %v3069
    %v3637 = vpack.c.b16 %v3079, %v3070
    %v3638 = vpack.c.b16 %v3080, %v3071
    %v3639 = vpack.c.b16 %v3081, %v3072
    %v3640 = vpack.c.b16 %v3082, %v3073
    %v3641 = vpack.c.b16 %v3083, %v3074
    %v3642 = vpack.c.b16 %v3084, %v3075
    %v3643 = vpack.c.b16 %v3094, %v3085
    %v3644 = vpack.c.b16 %v3095, %v3086
    %v3645 = vpack.c.b16 %v3096, %v3087
    %v3646 = vpack.c.b16 %v3097, %v3088
    %v3647 = vpack.c.b16 %v3098, %v3089
    %v3648 = vpack.c.b16 %v3099, %v3090
    %v3649 = vpack.c.b16 %v3100, %v3091
    %v3650 = vpack.c.b16 %v3101, %v3092
    %v3651 = vpack.c.b16 %v3102, %v3093
    %v3652 = vpack.c.b16 %v3112, %v3103
    %v3653 = vpack.c.b16 %v3113, %v3104
    %v3654 = vpack.c.b16 %v3114, %v3105
    %v3655 = vpack.c.b16 %v3115, %v3106
    %v3656 = vpack.c.b16 %v3116, %v3107
    %v3657 = vpack.c.b16 %v3117, %v3108
    %v3658 = vpack.c.b16 %v3118, %v3109
    %v3659 = vpack.c.b16 %v3119, %v3110
    %v3660 = vpack.c.b16 %v3120, %v3111
    %v3661 = vpack.c.b16 %v3130, %v3121
    %v3662 = vpack.c.b16 %v3131, %v3122
    %v3663 = vpack.c.b16 %v3132, %v3123
    %v3664 = vpack.c.b16 %v3133, %v3124
    %v3665 = vpack.c.b16 %v3134, %v3125
    %v3666 = vpack.c.b16 %v3135, %v3126
    %v3667 = vpack.c.b16 %v3136, %v3127
    %v3668 = vpack.c.b16 %v3137, %v3128
    %v3669 = vpack.c.b16 %v3138, %v3129
    %v3670 = vpack.c.b16 %v3148, %v3139
    %v3671 = vpack.c.b16 %v3149, %v3140
    %v3672 = vpack.c.b16 %v3150, %v3141
    %v3673 = vpack.c.b16 %v3151, %v3142
    %v3674 = vpack.c.b16 %v3152, %v3143
    %v3675 = vpack.c.b16 %v3153, %v3144
    %v3676 = vpack.c.b16 %v3154, %v3145
    %v3677 = vpack.c.b16 %v3155, %v3146
    %v3678 = vpack.c.b16 %v3156, %v3147
    %v3679 = vpack.c.b16 %v3166, %v3157
    %v3680 = vpack.c.b16 %v3167, %v3158
    %v3681 = vpack.c.b16 %v3168, %v3159
    %v3682 = vpack.c.b16 %v3169, %v3160
    %v3683 = vpack.c.b16 %v3170, %v3161
    %v3684 = vpack.c.b16 %v3171, %v3162
    %v3685 = vpack.c.b16 %v3172, %v3163
    %v3686 = vpack.c.b16 %v3173, %v3164
    %v3687 = vpack.c.b16 %v3174, %v3165
    %v3688 = vpack.c.b16 %v3184, %v3175
    %v3689 = vpack.c.b16 %v3185, %v3176
    %v3690 = vpack.c.b16 %v3186, %v3177
    %v3691 = vpack.c.b16 %v3187, %v3178
    %v3692 = vpack.c.b16 %v3188, %v3179
    %v3693 = vpack.c.b16 %v3189, %v3180
    %v3694 = vpack.c.b16 %v3190, %v3181
    %v3695 = vpack.c.b16 %v3191, %v3182
    %v3696 = vpack.c.b16 %v3192, %v3183
    %v3697 = vpack.c.b16 %v3202, %v3193
    %v3698 = vpack.c.b16 %v3203, %v3194
    %v3699 = vpack.c.b16 %v3204, %v3195
    %v3700 = vpack.c.b16 %v3205, %v3196
    %v3701 = vpack.c.b16 %v3206, %v3197
    %v3702 = vpack.c.b16 %v3207, %v3198
    %v3703 = vpack.c.b16 %v3208, %v3199
    %v3704 = vpack.c.b16 %v3209, %v3200
    %v3705 = vpack.c.b16 %v3210, %v3201
    %v3706 = vpack.c.b16 %v3220, %v3211
    %v3707 = vpack.c.b16 %v3221, %v3212
    %v3708 = vpack.c.b16 %v3222, %v3213
    %v3709 = vpack.c.b16 %v3223, %v3214
    %v3710 = vpack.c.b16 %v3224, %v3215
    %v3711 = vpack.c.b16 %v3225, %v3216
    %v3712 = vpack.c.b16 %v3226, %v3217
    %v3713 = vpack.c.b16 %v3227, %v3218
    %v3714 = vpack.c.b16 %v3228, %v3219
    %v3715 = vpack.c.b16 %v3238, %v3229
    %v3716 = vpack.c.b16 %v3239, %v3230
    %v3717 = vpack.c.b16 %v3240, %v3231
    %v3718 = vpack.c.b16 %v3241, %v3232
    %v3719 = vpack.c.b16 %v3242, %v3233
    %v3720 = vpack.c.b16 %v3243, %v3234
    %v3721 = vpack.c.b16 %v3244, %v3235
    %v3722 = vpack.c.b16 %v3245, %v3236
    %v3723 = vpack.c.b16 %v3246, %v3237
    %v3724 = vpack.c.b16 %v3256, %v3247
    %v3725 = vpack.c.b16 %v3257, %v3248
    %v3726 = vpack.c.b16 %v3258, %v3249
    %v3727 = vpack.c.b16 %v3259, %v3250
    %v3728 = vpack.c.b16 %v3260, %v3251
    %v3729 = vpack.c.b16 %v3261, %v3252
    %v3730 = vpack.c.b16 %v3262, %v3253
    %v3731 = vpack.c.b16 %v3263, %v3254
    %v3732 = vpack.c.b16 %v3264, %v3255
    %v3733 = vpack.c.b16 %v3274, %v3265
    %v3734 = vpack.c.b16 %v3275, %v3266
    %v3735 = vpack.c.b16 %v3276, %v3267
    %v3736 = vpack.c.b16 %v3277, %v3268
    %v3737 = vpack.c.b16 %v3278, %v3269
    %v3738 = vpack.c.b16 %v3279, %v3270
    %v3739 = vpack.c.b16 %v3280, %v3271
    %v3740 = vpack.c.b16 %v3281, %v3272
    %v3741 = vpack.c.b16 %v3282, %v3273
    %v3742 = vpack.c.b16 %v3292, %v3283
    %v3743 = vpack.c.b16 %v3293, %v3284
    %v3744 = vpack.c.b16 %v3294, %v3285
    %v3745 = vpack.c.b16 %v3295, %v3286
    %v3746 = vpack.c.b16 %v3296, %v3287
    %v3747 = vpack.c.b16 %v3297, %v3288
    %v3748 = vpack.c.b16 %v3298, %v3289
    %v3749 = vpack.c.b16 %v3299, %v3290
    %v3750 = vpack.c.b16 %v3300, %v3291
    %v3751 = vpack.c.b16 %v3310, %v3301
    %v3752 = vpack.c.b16 %v3311, %v3302
    %v3753 = vpack.c.b16 %v3312, %v3303
    %v3754 = vpack.c.b16 %v3313, %v3304
    %v3755 = vpack.c.b16 %v3314, %v3305
    %v3756 = vpack.c.b16 %v3315, %v3306
    %v3757 = vpack.c.b16 %v3316, %v3307
    %v3758 = vpack.c.b16 %v3317, %v3308
    %v3759 = vpack.c.b16 %v3318, %v3309
    %v3760 = vpack.c.b16 %v3328, %v3319
    %v3761 = vpack.c.b16 %v3329, %v3320
    %v3762 = vpack.c.b16 %v3330, %v3321
    %v3763 = vpack.c.b16 %v3331, %v3322
    %v3764 = vpack.c.b16 %v3332, %v3323
    %v3765 = vpack.c.b16 %v3333, %v3324
    %v3766 = vpack.c.b16 %v3334, %v3325
    %v3767 = vpack.c.b16 %v3335, %v3326
    %v3768 = vpack.c.b16 %v3336, %v3327
    %v3769 = vpack.c.b16 %v3346, %v3337
    %v3770 = vpack.c.b16 %v3347, %v3338
    %v3771 = vpack.c.b16 %v3348, %v3339
    %v3772 = vpack.c.b16 %v3349, %v3340
    %v3773 = vpack.c.b16 %v3350, %v3341
    %v3774 = vpack.c.b16 %v3351, %v3342
    %v3775 = vpack.c.b16 %v3352, %v3343
    %v3776 = vpack.c.b16 %v3353, %v3344
    %v3777 = vpack.c.b16 %v3354, %v3345
    %v3778 = vpack.c.b16 %v3364, %v3355
    %v3779 = vpack.c.b16 %v3365, %v3356
    %v3780 = vpack.c.b16 %v3366, %v3357
    %v3781 = vpack.c.b16 %v3367, %v3358
    %v3782 = vpack.c.b16 %v3368, %v3359
    %v3783 = vpack.c.b16 %v3369, %v3360
    %v3784 = vpack.c.b16 %v3370, %v3361
    %v3785 = vpack.c.b16 %v3371, %v3362
    %v3786 = vpack.c.b16 %v3372, %v3363
    %v3787 = vpack.c.b16 %v3382, %v3373
    %v3788 = vpack.c.b16 %v3383, %v3374
    %v3789 = vpack.c.b16 %v3384, %v3375
    %v3790 = vpack.c.b16 %v3385, %v3376
    %v3791 = vpack.c.b16 %v3386, %v3377
    %v3792 = vpack.c.b16 %v3387, %v3378
    %v3793 = vpack.c.b16 %v3388, %v3379
    %v3794 = vpack.c.b16 %v3389, %v3380
    %v3795 = vpack.c.b16 %v3390, %v3381
    %v3796 = vpack.c.b16 %v3400, %v3391
    %v3797 = vpack.c.b16 %v3401, %v3392
    %v3798 = vpack.c.b16 %v3402, %v3393
    %v3799 = vpack.c.b16 %v3403, %v3394
    %v3800 = vpack.c.b16 %v3404, %v3395
    %v3801 = vpack.c.b16 %v3405, %v3396
    %v3802 = vpack.c.b16 %v3406, %v3397
    %v3803 = vpack.c.b16 %v3407, %v3398
    %v3804 = vpack.c.b16 %v3408, %v3399
    %v3805 = vpack.c.b16 %v3418, %v3409
    %v3806 = vpack.c.b16 %v3419, %v3410
    %v3807 = vpack.c.b16 %v3420, %v3411
    %v3808 = vpack.c.b16 %v3421, %v3412
    %v3809 = vpack.c.b16 %v3422, %v3413
    %v3810 = vpack.c.b16 %v3423, %v3414
    %v3811 = vpack.c.b16 %v3424, %v3415
    %v3812 = vpack.c.b16 %v3425, %v3416
    %v3813 = vpack.c.b16 %v3426, %v3417
    %v3814 = vpack.c.b16 %v3436, %v3427
    %v3815 = vpack.c.b16 %v3437, %v3428
    %v3816 = vpack.c.b16 %v3438, %v3429
    %v3817 = vpack.c.b16 %v3439, %v3430
    %v3818 = vpack.c.b16 %v3440, %v3431
    %v3819 = vpack.c.b16 %v3441, %v3432
    %v3820 = vpack.c.b16 %v3442, %v3433
    %v3821 = vpack.c.b16 %v3443, %v3434
    %v3822 = vpack.c.b16 %v3444, %v3435
    %v3823 = vpack.c.b16 %v3454, %v3445
    %v3824 = vpack.c.b16 %v3455, %v3446
    %v3825 = vpack.c.b16 %v3456, %v3447
    %v3826 = vpack.c.b16 %v3457, %v3448
    %v3827 = vpack.c.b16 %v3458, %v3449
    %v3828 = vpack.c.b16 %v3459, %v3450
    %v3829 = vpack.c.b16 %v3460, %v3451
    %v3830 = vpack.c.b16 %v3461, %v3452
    %v3831 = vpack.c.b16 %v3462, %v3453
    %v3832 = vpack.c.b16 %v3472, %v3463
    %v3833 = vpack.c.b16 %v3473, %v3464
    %v3834 = vpack.c.b16 %v3474, %v3465
    %v3835 = vpack.c.b16 %v3475, %v3466
    %v3836 = vpack.c.b16 %v3476, %v3467
    %v3837 = vpack.c.b16 %v3477, %v3468
    %v3838 = vpack.c.b16 %v3478, %v3469
    %v3839 = vpack.c.b16 %v3479, %v3470
    %v3840 = vpack.c.b16 %v3480, %v3471
    %v3841 = vpack.c.b16 %v3490, %v3481
    %v3842 = vpack.c.b16 %v3491, %v3482
    %v3843 = vpack.c.b16 %v3492, %v3483
    %v3844 = vpack.c.b16 %v3493, %v3484
    %v3845 = vpack.c.b16 %v3494, %v3485
    %v3846 = vpack.c.b16 %v3495, %v3486
    %v3847 = vpack.c.b16 %v3496, %v3487
    %v3848 = vpack.c.b16 %v3497, %v3488
    %v3849 = vpack.c.b16 %v3498, %v3489
    %v3850 = vpack.c.b16 %v3508, %v3499
    %v3851 = vpack.c.b16 %v3509, %v3500
    %v3852 = vpack.c.b16 %v3510, %v3501
    %v3853 = vpack.c.b16 %v3511, %v3502
    %v3854 = vpack.c.b16 %v3512, %v3503
    %v3855 = vpack.c.b16 %v3513, %v3504
    %v3856 = vpack.c.b16 %v3514, %v3505
    %v3857 = vpack.c.b16 %v3515, %v3506
    %v3858 = vpack.c.b16 %v3516, %v3507
    %v3859 = vpack.c.b16 %v3526, %v3517
    %v3860 = vpack.c.b16 %v3527, %v3518
    %v3861 = vpack.c.b16 %v3528, %v3519
    %v3862 = vpack.c.b16 %v3529, %v3520
    %v3863 = vpack.c.b16 %v3530, %v3521
    %v3864 = vpack.c.b16 %v3531, %v3522
    %v3865 = vpack.c.b16 %v3532, %v3523
    %v3866 = vpack.c.b16 %v3533, %v3524
    %v3867 = vpack.c.b16 %v3534, %v3525
    %v3868 = vpack.c.b16 %v3544, %v3535
    %v3869 = vpack.c.b16 %v3545, %v3536
    %v3870 = vpack.c.b16 %v3546, %v3537
    %v3871 = vpack.c.b16 %v3547, %v3538
    %v3872 = vpack.c.b16 %v3548, %v3539
    %v3873 = vpack.c.b16 %v3549, %v3540
    %v3874 = vpack.c.b16 %v3550, %v3541
    %v3875 = vpack.c.b16 %v3551, %v3542
    %v3876 = vpack.c.b16 %v3552, %v3543
    %v3877 = vpack.c.b16 %v3562, %v3553
    %v3878 = vpack.c.b16 %v3563, %v3554
    %v3879 = vpack.c.b16 %v3564, %v3555
    %v3880 = vpack.c.b16 %v3565, %v3556
    %v3881 = vpack.c.b16 %v3566, %v3557
    %v3882 = vpack.c.b16 %v3567, %v3558
    %v3883 = vpack.c.b16 %v3568, %v3559
    %v3884 = vpack.c.b16 %v3569, %v3560
    %v3885 = vpack.c.b16 %v3570, %v3561
    %v3886 = vpack.c.b16 %v3580, %v3571
    %v3887 = vpack.c.b16 %v3581, %v3572
    %v3888 = vpack.c.b16 %v3582, %v3573
    %v3889 = vpack.c.b16 %v3583, %v3574
    %v3890 = vpack.c.b16 %v3584, %v3575
    %v3891 = vpack.c.b16 %v3585, %v3576
    %v3892 = vpack.c.b16 %v3586, %v3577
    %v3893 = vpack.c.b16 %v3587, %v3578
    %v3894 = vpack.c.b16 %v3588, %v3579
    %v3895 = vpack.c.b16 %v3598, %v3589
    %v3896 = vpack.c.b16 %v3599, %v3590
    %v3897 = vpack.c.b16 %v3600, %v3591
    %v3898 = vpack.c.b16 %v3601, %v3592
    %v3899 = vpack.c.b16 %v3602, %v3593
    %v3900 = vpack.c.b16 %v3603, %v3594
    %v3901 = vpack.c.b16 %v3604, %v3595
    %v3902 = vpack.c.b16 %v3605, %v3596
    %v3903 = vpack.c.b16 %v3606, %v3597
    %v3904 = vpack.c.b16 %v3616, %v3607
    %v3905 = vpack.c.b16 %v3617, %v3608
    %v3906 = vpack.c.b16 %v3618, %v3609
    %v3907 = vpack.c.b16 %v3619, %v3610
    %v3908 = vpack.c.b16 %v3620, %v3611
    %v3909 = vpack.c.b16 %v3621, %v3612
    %v3910 = vpack.c.b16 %v3622, %v3613
    %v3911 = vpack.c.b16 %v3623, %v3614
    %v3912 = vpack.c.b16 %v3624, %v3615
    %4201 = vmatprep.subr.bf16.mxu0 %v3626
    %4202 = vmatpush1.bf16.msra.mxu0 %v3625
    %4203 = vmatprep.subr.bf16.mxu0 %v3635
    %4204 = vmatpush1.bf16.msra.mxu0 %v3634
    %4205 = vmatprep.subr.bf16.mxu0 %v3644
    %4206 = vmatpush1.bf16.msra.mxu0 %v3643
    %4207 = vmatprep.subr.bf16.mxu0 %v3653
    %4208 = vmatpush1.bf16.msra.mxu0 %v3652
    %4209 = vmatprep.subr.bf16.mxu0 %v3662
    %4210 = vmatpush1.bf16.msra.mxu0 %v3661
    %4211 = vmatprep.subr.bf16.mxu0 %v3671
    %4212 = vmatpush1.bf16.msra.mxu0 %v3670
    %4213 = vmatprep.subr.bf16.mxu0 %v3680
    %4214 = vmatpush1.bf16.msra.mxu0 %v3679
    %4215 = vmatprep.subr.bf16.mxu0 %v3689
    %4216 = vmatpush1.bf16.msra.mxu0 %v3688
    %4217 = vmatprep.subr.bf16.mxu0 %v3698
    %4218 = vmatpush1.bf16.msra.mxu0 %v3697
    %4219 = vmatprep.subr.bf16.mxu0 %v3707
    %4220 = vmatpush1.bf16.msra.mxu0 %v3706
    %4221 = vmatprep.subr.bf16.mxu0 %v3716
    %4222 = vmatpush1.bf16.msra.mxu0 %v3715
    %4223 = vmatprep.subr.bf16.mxu0 %v3725
    %4224 = vmatpush1.bf16.msra.mxu0 %v3724
    %4225 = vmatprep.subr.bf16.mxu0 %v3734
    %4226 = vmatpush1.bf16.msra.mxu0 %v3733
    %4227 = vmatprep.subr.bf16.mxu0 %v3743
    %4228 = vmatpush1.bf16.msra.mxu0 %v3742
    %4229 = vmatprep.subr.bf16.mxu0 %v3752
    %4230 = vmatpush1.bf16.msra.mxu0 %v3751
    %4231 = vmatprep.subr.bf16.mxu0 %v3761
    %4232 = vmatpush1.bf16.msra.mxu0 %v3760
    %4233 = vmatprep.mubr.bf16.mxu0 %v2357
    %4234 = vmatmul.mubr.bf16.gmra.mrb[0].mxu0 %v2356
    %v4235 = vpop.f32.mrb[0].mxu0
    %v4236 = vadd.f32 %v2687, %v4235
    %v4237 = vpop.f32.mrb[0].mxu0
    %v4238 = vadd.f32 %v2691, %v4237
    %v4239 = vpop.f32.mrb[0].mxu0
    %v4240 = vadd.f32 %v2687, %v4239
    %v4241 = vpop.f32.mrb[0].mxu0
    %v4242 = vadd.f32 %v2691, %v4241
    %4243 = vdwg.mxu0
    %4244 = vmatprep.subr.bf16.mxu0 %v3770
    %4245 = vmatpush1.bf16.msra.mxu0 %v3769
    %4246 = vmatprep.subr.bf16.mxu0 %v3779
    %4247 = vmatpush1.bf16.msra.mxu0 %v3778
    %4248 = vmatprep.subr.bf16.mxu0 %v3788
    %4249 = vmatpush1.bf16.msra.mxu0 %v3787
    %4250 = vmatprep.subr.bf16.mxu0 %v3797
    %4251 = vmatpush1.bf16.msra.mxu0 %v3796
    %4252 = vmatprep.subr.bf16.mxu0 %v3806
    %4253 = vmatpush1.bf16.msra.mxu0 %v3805
    %4254 = vmatprep.subr.bf16.mxu0 %v3815
    %4255 = vmatpush1.bf16.msra.mxu0 %v3814
    %4256 = vmatprep.subr.bf16.mxu0 %v3824
    %4257 = vmatpush1.bf16.msra.mxu0 %v3823
    %4258 = vmatprep.subr.bf16.mxu0 %v3833
    %4259 = vmatpush1.bf16.msra.mxu0 %v3832
    %4260 = vmatprep.subr.bf16.mxu0 %v3842
    %4261 = vmatpush1.bf16.msra.mxu0 %v3841
    %4262 = vmatprep.subr.bf16.mxu0 %v3851
    %4263 = vmatpush1.bf16.msra.mxu0 %v3850
    %4264 = vmatprep.subr.bf16.mxu0 %v3860
    %4265 = vmatpush1.bf16.msra.mxu0 %v3859
    %4266 = vmatprep.subr.bf16.mxu0 %v3869
    %4267 = vmatpush1.bf16.msra.mxu0 %v3868
    %4268 = vmatprep.subr.bf16.mxu0 %v3878
    %4269 = vmatpush1.bf16.msra.mxu0 %v3877
    %4270 = vmatprep.subr.bf16.mxu0 %v3887
    %4271 = vmatpush1.bf16.msra.mxu0 %v3886
    %4272 = vmatprep.subr.bf16.mxu0 %v3896
    %4273 = vmatpush1.bf16.msra.mxu0 %v3895
    %4274 = vmatprep.subr.bf16.mxu0 %v3905
    %4275 = vmatpush1.bf16.msra.mxu0 %v3904
    %4276 = vmatprep.mubr.bf16.mxu0 %v2359
    %4277 = vmatmul.mubr.bf16.gmra.mrb[0].mxu0 %v2358
    %v4278 = vpop.f32.mrb[0].mxu0
    %v4279 = vadd.f32 %v4236, %v4278
    %v4280 = vpop.f32.mrb[0].mxu0
    %v4281 = vadd.f32 %v4238, %v4280
    %v4282 = vpop.f32.mrb[0].mxu0
    %v4283 = vadd.f32 %v4240, %v4282
    %v4284 = vpop.f32.mrb[0].mxu0
    %v4285 = vadd.f32 %v4242, %v4284
    %4286 = vdwg.mxu0
    %4287 = vmatprep.subr.bf16.mxu0 %v3628
    %4288 = vmatpush1.bf16.msra.mxu0 %v3627
    %4289 = vmatprep.subr.bf16.mxu0 %v3637
    %4290 = vmatpush1.bf16.msra.mxu0 %v3636
    %4291 = vmatprep.subr.bf16.mxu0 %v3646
    %4292 = vmatpush1.bf16.msra.mxu0 %v3645
    %4293 = vmatprep.subr.bf16.mxu0 %v3655
    %4294 = vmatpush1.bf16.msra.mxu0 %v3654
    %4295 = vmatprep.subr.bf16.mxu0 %v3664
    %4296 = vmatpush1.bf16.msra.mxu0 %v3663
    %4297 = vmatprep.subr.bf16.mxu0 %v3673
    %4298 = vmatpush1.bf16.msra.mxu0 %v3672
    %4299 = vmatprep.subr.bf16.mxu0 %v3682
    %4300 = vmatpush1.bf16.msra.mxu0 %v3681
    %4301 = vmatprep.subr.bf16.mxu0 %v3691
    %4302 = vmatpush1.bf16.msra.mxu0 %v3690
    %4303 = vmatprep.subr.bf16.mxu0 %v3700
    %4304 = vmatpush1.bf16.msra.mxu0 %v3699
    %4305 = vmatprep.subr.bf16.mxu0 %v3709
    %4306 = vmatpush1.bf16.msra.mxu0 %v3708
    %4307 = vmatprep.subr.bf16.mxu0 %v3718
    %4308 = vmatpush1.bf16.msra.mxu0 %v3717
    %4309 = vmatprep.subr.bf16.mxu0 %v3727
    %4310 = vmatpush1.bf16.msra.mxu0 %v3726
    %4311 = vmatprep.subr.bf16.mxu0 %v3736
    %4312 = vmatpush1.bf16.msra.mxu0 %v3735
    %4313 = vmatprep.subr.bf16.mxu0 %v3745
    %4314 = vmatpush1.bf16.msra.mxu0 %v3744
    %4315 = vmatprep.subr.bf16.mxu0 %v3754
    %4316 = vmatpush1.bf16.msra.mxu0 %v3753
    %4317 = vmatprep.subr.bf16.mxu0 %v3763
    %4318 = vmatpush1.bf16.msra.mxu0 %v3762
    %4319 = vmatprep.mubr.bf16.mxu0 %v2357
    %4320 = vmatmul.mubr.bf16.gmra.mrb[0].mxu0 %v2356
    %v4321 = vpop.f32.mrb[0].mxu0
    %v4322 = vadd.f32 %v2695, %v4321
    %v4323 = vpop.f32.mrb[0].mxu0
    %v4324 = vadd.f32 %v2699, %v4323
    %v4325 = vpop.f32.mrb[0].mxu0
    %v4326 = vadd.f32 %v2695, %v4325
    %v4327 = vpop.f32.mrb[0].mxu0
    %v4328 = vadd.f32 %v2699, %v4327
    %4329 = vdwg.mxu0
    %4330 = vmatprep.subr.bf16.mxu0 %v3772
    %4331 = vmatpush1.bf16.msra.mxu0 %v3771
    %4332 = vmatprep.subr.bf16.mxu0 %v3781
    %4333 = vmatpush1.bf16.msra.mxu0 %v3780
    %4334 = vmatprep.subr.bf16.mxu0 %v3790
    %4335 = vmatpush1.bf16.msra.mxu0 %v3789
    %4336 = vmatprep.subr.bf16.mxu0 %v3799
    %4337 = vmatpush1.bf16.msra.mxu0 %v3798
    %4338 = vmatprep.subr.bf16.mxu0 %v3808
    %4339 = vmatpush1.bf16.msra.mxu0 %v3807
    %4340 = vmatprep.subr.bf16.mxu0 %v3817
    %4341 = vmatpush1.bf16.msra.mxu0 %v3816
    %4342 = vmatprep.subr.bf16.mxu0 %v3826
    %4343 = vmatpush1.bf16.msra.mxu0 %v3825
    %4344 = vmatprep.subr.bf16.mxu0 %v3835
    %4345 = vmatpush1.bf16.msra.mxu0 %v3834
    %4346 = vmatprep.subr.bf16.mxu0 %v3844
    %4347 = vmatpush1.bf16.msra.mxu0 %v3843
    %4348 = vmatprep.subr.bf16.mxu0 %v3853
    %4349 = vmatpush1.bf16.msra.mxu0 %v3852
    %4350 = vmatprep.subr.bf16.mxu0 %v3862
    %4351 = vmatpush1.bf16.msra.mxu0 %v3861
    %4352 = vmatprep.subr.bf16.mxu0 %v3871
    %4353 = vmatpush1.bf16.msra.mxu0 %v3870
    %4354 = vmatprep.subr.bf16.mxu0 %v3880
    %4355 = vmatpush1.bf16.msra.mxu0 %v3879
    %4356 = vmatprep.subr.bf16.mxu0 %v3889
    %4357 = vmatpush1.bf16.msra.mxu0 %v3888
    %4358 = vmatprep.subr.bf16.mxu0 %v3898
    %4359 = vmatpush1.bf16.msra.mxu0 %v3897
    %4360 = vmatprep.subr.bf16.mxu0 %v3907
    %4361 = vmatpush1.bf16.msra.mxu0 %v3906
    %4362 = vmatprep.mubr.bf16.mxu0 %v2359
    %4363 = vmatmul.mubr.bf16.gmra.mrb[0].mxu0 %v2358
    %v4364 = vpop.f32.mrb[0].mxu0
    %v4365 = vadd.f32 %v4322, %v4364
    %v4366 = vpop.f32.mrb[0].mxu0
    %v4367 = vadd.f32 %v4324, %v4366
    %v4368 = vpop.f32.mrb[0].mxu0
    %v4369 = vadd.f32 %v4326, %v4368
    %v4370 = vpop.f32.mrb[0].mxu0
    %v4371 = vadd.f32 %v4328, %v4370
    %4372 = vdwg.mxu0
    %4373 = vmatprep.subr.bf16.mxu0 %v3630
    %4374 = vmatpush1.bf16.msra.mxu0 %v3629
    %4375 = vmatprep.subr.bf16.mxu0 %v3639
    %4376 = vmatpush1.bf16.msra.mxu0 %v3638
    %4377 = vmatprep.subr.bf16.mxu0 %v3648
    %4378 = vmatpush1.bf16.msra.mxu0 %v3647
    %4379 = vmatprep.subr.bf16.mxu0 %v3657
    %4380 = vmatpush1.bf16.msra.mxu0 %v3656
    %4381 = vmatprep.subr.bf16.mxu0 %v3666
    %4382 = vmatpush1.bf16.msra.mxu0 %v3665
    %4383 = vmatprep.subr.bf16.mxu0 %v3675
    %4384 = vmatpush1.bf16.msra.mxu0 %v3674
    %4385 = vmatprep.subr.bf16.mxu0 %v3684
    %4386 = vmatpush1.bf16.msra.mxu0 %v3683
    %4387 = vmatprep.subr.bf16.mxu0 %v3693
    %4388 = vmatpush1.bf16.msra.mxu0 %v3692
    %4389 = vmatprep.subr.bf16.mxu0 %v3702
    %4390 = vmatpush1.bf16.msra.mxu0 %v3701
    %4391 = vmatprep.subr.bf16.mxu0 %v3711
    %4392 = vmatpush1.bf16.msra.mxu0 %v3710
    %4393 = vmatprep.subr.bf16.mxu0 %v3720
    %4394 = vmatpush1.bf16.msra.mxu0 %v3719
    %4395 = vmatprep.subr.bf16.mxu0 %v3729
    %4396 = vmatpush1.bf16.msra.mxu0 %v3728
    %4397 = vmatprep.subr.bf16.mxu0 %v3738
    %4398 = vmatpush1.bf16.msra.mxu0 %v3737
    %4399 = vmatprep.subr.bf16.mxu0 %v3747
    %4400 = vmatpush1.bf16.msra.mxu0 %v3746
    %4401 = vmatprep.subr.bf16.mxu0 %v3756
    %4402 = vmatpush1.bf16.msra.mxu0 %v3755
    %4403 = vmatprep.subr.bf16.mxu0 %v3765
    %4404 = vmatpush1.bf16.msra.mxu0 %v3764
    %4405 = vmatprep.mubr.bf16.mxu0 %v2357
    %4406 = vmatmul.mubr.bf16.gmra.mrb[0].mxu0 %v2356
    %v4407 = vpop.f32.mrb[0].mxu0
    %v4408 = vadd.f32 %v2703, %v4407
    %v4409 = vpop.f32.mrb[0].mxu0
    %v4410 = vadd.f32 %v2707, %v4409
    %v4411 = vpop.f32.mrb[0].mxu0
    %v4412 = vadd.f32 %v2703, %v4411
    %v4413 = vpop.f32.mrb[0].mxu0
    %v4414 = vadd.f32 %v2707, %v4413
    %4415 = vdwg.mxu0
    %4416 = vmatprep.subr.bf16.mxu0 %v3774
    %4417 = vmatpush1.bf16.msra.mxu0 %v3773
    %4418 = vmatprep.subr.bf16.mxu0 %v3783
    %4419 = vmatpush1.bf16.msra.mxu0 %v3782
    %4420 = vmatprep.subr.bf16.mxu0 %v3792
    %4421 = vmatpush1.bf16.msra.mxu0 %v3791
    %4422 = vmatprep.subr.bf16.mxu0 %v3801
    %4423 = vmatpush1.bf16.msra.mxu0 %v3800
    %4424 = vmatprep.subr.bf16.mxu0 %v3810
    %4425 = vmatpush1.bf16.msra.mxu0 %v3809
    %4426 = vmatprep.subr.bf16.mxu0 %v3819
    %4427 = vmatpush1.bf16.msra.mxu0 %v3818
    %4428 = vmatprep.subr.bf16.mxu0 %v3828
    %4429 = vmatpush1.bf16.msra.mxu0 %v3827
    %4430 = vmatprep.subr.bf16.mxu0 %v3837
    %4431 = vmatpush1.bf16.msra.mxu0 %v3836
    %4432 = vmatprep.subr.bf16.mxu0 %v3846
    %4433 = vmatpush1.bf16.msra.mxu0 %v3845
    %4434 = vmatprep.subr.bf16.mxu0 %v3855
    %4435 = vmatpush1.bf16.msra.mxu0 %v3854
    %4436 = vmatprep.subr.bf16.mxu0 %v3864
    %4437 = vmatpush1.bf16.msra.mxu0 %v3863
    %4438 = vmatprep.subr.bf16.mxu0 %v3873
    %4439 = vmatpush1.bf16.msra.mxu0 %v3872
    %4440 = vmatprep.subr.bf16.mxu0 %v3882
    %4441 = vmatpush1.bf16.msra.mxu0 %v3881
    %4442 = vmatprep.subr.bf16.mxu0 %v3891
    %4443 = vmatpush1.bf16.msra.mxu0 %v3890
    %4444 = vmatprep.subr.bf16.mxu0 %v3900
    %4445 = vmatpush1.bf16.msra.mxu0 %v3899
    %4446 = vmatprep.subr.bf16.mxu0 %v3909
    %4447 = vmatpush1.bf16.msra.mxu0 %v3908
    %4448 = vmatprep.mubr.bf16.mxu0 %v2359
    %4449 = vmatmul.mubr.bf16.gmra.mrb[0].mxu0 %v2358
    %v4450 = vpop.f32.mrb[0].mxu0
    %v4451 = vadd.f32 %v4408, %v4450
    %v4452 = vpop.f32.mrb[0].mxu0
    %v4453 = vadd.f32 %v4410, %v4452
    %v4454 = vpop.f32.mrb[0].mxu0
    %v4455 = vadd.f32 %v4412, %v4454
    %v4456 = vpop.f32.mrb[0].mxu0
    %v4457 = vadd.f32 %v4414, %v4456
    %4458 = vdwg.mxu0
    %4459 = vmatprep.subr.bf16.mxu0 %v3632
    %4460 = vmatpush1.bf16.msra.mxu0 %v3631
    %4461 = vmatprep.subr.bf16.mxu0 %v3641
    %4462 = vmatpush1.bf16.msra.mxu0 %v3640
    %4463 = vmatprep.subr.bf16.mxu0 %v3650
    %4464 = vmatpush1.bf16.msra.mxu0 %v3649
    %4465 = vmatprep.subr.bf16.mxu0 %v3659
    %4466 = vmatpush1.bf16.msra.mxu0 %v3658
    %4467 = vmatprep.subr.bf16.mxu0 %v3668
    %4468 = vmatpush1.bf16.msra.mxu0 %v3667
    %4469 = vmatprep.subr.bf16.mxu0 %v3677
    %4470 = vmatpush1.bf16.msra.mxu0 %v3676
    %4471 = vmatprep.subr.bf16.mxu0 %v3686
    %4472 = vmatpush1.bf16.msra.mxu0 %v3685
    %4473 = vmatprep.subr.bf16.mxu0 %v3695
    %4474 = vmatpush1.bf16.msra.mxu0 %v3694
    %4475 = vmatprep.subr.bf16.mxu0 %v3704
    %4476 = vmatpush1.bf16.msra.mxu0 %v3703
    %4477 = vmatprep.subr.bf16.mxu0 %v3713
    %4478 = vmatpush1.bf16.msra.mxu0 %v3712
    %4479 = vmatprep.subr.bf16.mxu0 %v3722
    %4480 = vmatpush1.bf16.msra.mxu0 %v3721
    %4481 = vmatprep.subr.bf16.mxu0 %v3731
    %4482 = vmatpush1.bf16.msra.mxu0 %v3730
    %4483 = vmatprep.subr.bf16.mxu0 %v3740
    %4484 = vmatpush1.bf16.msra.mxu0 %v3739
    %4485 = vmatprep.subr.bf16.mxu0 %v3749
    %4486 = vmatpush1.bf16.msra.mxu0 %v3748
    %4487 = vmatprep.subr.bf16.mxu0 %v3758
    %4488 = vmatpush1.bf16.msra.mxu0 %v3757
    %4489 = vmatprep.subr.bf16.mxu0 %v3767
    %4490 = vmatpush1.bf16.msra.mxu0 %v3766
    %4491 = vmatprep.mubr.bf16.mxu0 %v2357
    %4492 = vmatmul.mubr.bf16.gmra.mrb[0].mxu0 %v2356
    %v4493 = vpop.f32.mrb[0].mxu0
    %v4494 = vadd.f32 %v2711, %v4493
    %v4495 = vpop.f32.mrb[0].mxu0
    %v4496 = vadd.f32 %v2715, %v4495
    %v4497 = vpop.f32.mrb[0].mxu0
    %v4498 = vadd.f32 %v2711, %v4497
    %v4499 = vpop.f32.mrb[0].mxu0
    %v4500 = vadd.f32 %v2715, %v4499
    %4501 = vdwg.mxu0
    %4502 = vmatprep.subr.bf16.mxu0 %v3776
    %4503 = vmatpush1.bf16.msra.mxu0 %v3775
    %4504 = vmatprep.subr.bf16.mxu0 %v3785
    %4505 = vmatpush1.bf16.msra.mxu0 %v3784
    %4506 = vmatprep.subr.bf16.mxu0 %v3794
    %4507 = vmatpush1.bf16.msra.mxu0 %v3793
    %4508 = vmatprep.subr.bf16.mxu0 %v3803
    %4509 = vmatpush1.bf16.msra.mxu0 %v3802
    %4510 = vmatprep.subr.bf16.mxu0 %v3812
    %4511 = vmatpush1.bf16.msra.mxu0 %v3811
    %4512 = vmatprep.subr.bf16.mxu0 %v3821
    %4513 = vmatpush1.bf16.msra.mxu0 %v3820
    %4514 = vmatprep.subr.bf16.mxu0 %v3830
    %4515 = vmatpush1.bf16.msra.mxu0 %v3829
    %4516 = vmatprep.subr.bf16.mxu0 %v3839
    %4517 = vmatpush1.bf16.msra.mxu0 %v3838
    %4518 = vmatprep.subr.bf16.mxu0 %v3848
    %4519 = vmatpush1.bf16.msra.mxu0 %v3847
    %4520 = vmatprep.subr.bf16.mxu0 %v3857
    %4521 = vmatpush1.bf16.msra.mxu0 %v3856
    %4522 = vmatprep.subr.bf16.mxu0 %v3866
    %4523 = vmatpush1.bf16.msra.mxu0 %v3865
    %4524 = vmatprep.subr.bf16.mxu0 %v3875
    %4525 = vmatpush1.bf16.msra.mxu0 %v3874
    %4526 = vmatprep.subr.bf16.mxu0 %v3884
    %4527 = vmatpush1.bf16.msra.mxu0 %v3883
    %4528 = vmatprep.subr.bf16.mxu0 %v3893
    %4529 = vmatpush1.bf16.msra.mxu0 %v3892
    %4530 = vmatprep.subr.bf16.mxu0 %v3902
    %4531 = vmatpush1.bf16.msra.mxu0 %v3901
    %4532 = vmatprep.subr.bf16.mxu0 %v3911
    %4533 = vmatpush1.bf16.msra.mxu0 %v3910
    %4534 = vmatprep.mubr.bf16.mxu0 %v2359
    %4535 = vmatmul.mubr.bf16.gmra.mrb[0].mxu0 %v2358
    %v4536 = vpop.f32.mrb[0].mxu0
    %v4537 = vadd.f32 %v4494, %v4536
    %v4538 = vpop.f32.mrb[0].mxu0
    %v4539 = vadd.f32 %v4496, %v4538
    %v4540 = vpop.f32.mrb[0].mxu0
    %v4541 = vadd.f32 %v4498, %v4540
    %v4542 = vpop.f32.mrb[0].mxu0
    %v4543 = vadd.f32 %v4500, %v4542
    %4544 = vdwg.mxu0
    %4545 = vmatprep.subr.bf16.mxu0 0
    %4546 = vmatpush1.bf16.msra.mxu0 %v3633
    %4547 = vmatprep.subr.bf16.mxu0 0
    %4548 = vmatpush1.bf16.msra.mxu0 %v3642
    %4549 = vmatprep.subr.bf16.mxu0 0
    %4550 = vmatpush1.bf16.msra.mxu0 %v3651
    %4551 = vmatprep.subr.bf16.mxu0 0
    %4552 = vmatpush1.bf16.msra.mxu0 %v3660
    %4553 = vmatprep.subr.bf16.mxu0 0
    %4554 = vmatpush1.bf16.msra.mxu0 %v3669
    %4555 = vmatprep.subr.bf16.mxu0 0
    %4556 = vmatpush1.bf16.msra.mxu0 %v3678
    %4557 = vmatprep.subr.bf16.mxu0 0
    %4558 = vmatpush1.bf16.msra.mxu0 %v3687
    %4559 = vmatprep.subr.bf16.mxu0 0
    %4560 = vmatpush1.bf16.msra.mxu0 %v3696
    %4561 = vmatprep.subr.bf16.mxu0 0
    %4562 = vmatpush1.bf16.msra.mxu0 %v3705
    %4563 = vmatprep.subr.bf16.mxu0 0
    %4564 = vmatpush1.bf16.msra.mxu0 %v3714
    %4565 = vmatprep.subr.bf16.mxu0 0
    %4566 = vmatpush1.bf16.msra.mxu0 %v3723
    %4567 = vmatprep.subr.bf16.mxu0 0
    %4568 = vmatpush1.bf16.msra.mxu0 %v3732
    %4569 = vmatprep.subr.bf16.mxu0 0
    %4570 = vmatpush1.bf16.msra.mxu0 %v3741
    %4571 = vmatprep.subr.bf16.mxu0 0
    %4572 = vmatpush1.bf16.msra.mxu0 %v3750
    %4573 = vmatprep.subr.bf16.mxu0 0
    %4574 = vmatpush1.bf16.msra.mxu0 %v3759
    %4575 = vmatprep.subr.bf16.mxu0 0
    %4576 = vmatpush1.bf16.msra.mxu0 %v3768
    %4577 = vmatprep.mubr.bf16.mxu0 %v2357
    %4578 = vmatmul.mubr.bf16.gmra.mrb[0].mxu0 %v2356
    %v4579 = vpop.f32.mrb[0].mxu0
    %v4580 = vadd.f32 %v2719, %v4579
    %v4581 = vpop.f32.mrb[0].mxu0
    %v4582 = vpop.f32.mrb[0].mxu0
    %v4583 = vadd.f32 %v2719, %v4582
    %v4584 = vpop.f32.mrb[0].mxu0
    %4585 = vdwg.mxu0
    %4586 = vmatprep.subr.bf16.mxu0 0
    %4587 = vmatpush1.bf16.msra.mxu0 %v3777
    %4588 = vmatprep.subr.bf16.mxu0 0
    %4589 = vmatpush1.bf16.msra.mxu0 %v3786
    %4590 = vmatprep.subr.bf16.mxu0 0
    %4591 = vmatpush1.bf16.msra.mxu0 %v3795
    %4592 = vmatprep.subr.bf16.mxu0 0
    %4593 = vmatpush1.bf16.msra.mxu0 %v3804
    %4594 = vmatprep.subr.bf16.mxu0 0
    %4595 = vmatpush1.bf16.msra.mxu0 %v3813
    %4596 = vmatprep.subr.bf16.mxu0 0
    %4597 = vmatpush1.bf16.msra.mxu0 %v3822
    %4598 = vmatprep.subr.bf16.mxu0 0
    %4599 = vmatpush1.bf16.msra.mxu0 %v3831
    %4600 = vmatprep.subr.bf16.mxu0 0
    %4601 = vmatpush1.bf16.msra.mxu0 %v3840
    %4602 = vmatprep.subr.bf16.mxu0 0
    %4603 = vmatpush1.bf16.msra.mxu0 %v3849
    %4604 = vmatprep.subr.bf16.mxu0 0
    %4605 = vmatpush1.bf16.msra.mxu0 %v3858
    %4606 = vmatprep.subr.bf16.mxu0 0
    %4607 = vmatpush1.bf16.msra.mxu0 %v3867
    %4608 = vmatprep.subr.bf16.mxu0 0
    %4609 = vmatpush1.bf16.msra.mxu0 %v3876
    %4610 = vmatprep.subr.bf16.mxu0 0
    %4611 = vmatpush1.bf16.msra.mxu0 %v3885
    %4612 = vmatprep.subr.bf16.mxu0 0
    %4613 = vmatpush1.bf16.msra.mxu0 %v3894
    %4614 = vmatprep.subr.bf16.mxu0 0
    %4615 = vmatpush1.bf16.msra.mxu0 %v3903
    %4616 = vmatprep.subr.bf16.mxu0 0
    %4617 = vmatpush1.bf16.msra.mxu0 %v3912
    %4618 = vmatprep.mubr.bf16.mxu0 %v2359
    %4619 = vmatmul.mubr.bf16.gmra.mrb[0].mxu0 %v2358
    %v4620 = vpop.f32.mrb[0].mxu0
    %v4621 = vadd.f32 %v4580, %v4620
    %v4622 = vpop.f32.mrb[0].mxu0
    %v4623 = vpop.f32.mrb[0].mxu0
    %v4624 = vadd.f32 %v4583, %v4623
    %v4625 = vpop.f32.mrb[0].mxu0
    %4626 = vdwg.mxu0
    %v4627 = vxor.u32 %v4279, 2147483648
    %v4628 = vxor.u32 %v4281, 2147483648
    %v4629 = vxor.u32 %v4365, 2147483648
    %v4630 = vxor.u32 %v4367, 2147483648
    %v4631 = vxor.u32 %v4451, 2147483648
    %v4632 = vxor.u32 %v4453, 2147483648
    %v4633 = vxor.u32 %v4537, 2147483648
    %v4634 = vxor.u32 %v4539, 2147483648
    %v4635 = vxor.u32 %v4621, 2147483648
    %v4636 = vxor.u32 %v4283, 2147483648
    %v4637 = vxor.u32 %v4285, 2147483648
    %v4638 = vxor.u32 %v4369, 2147483648
    %v4639 = vxor.u32 %v4371, 2147483648
    %v4640 = vxor.u32 %v4455, 2147483648
    %v4641 = vxor.u32 %v4457, 2147483648
    %v4642 = vxor.u32 %v4541, 2147483648
    %v4643 = vxor.u32 %v4543, 2147483648
    %v4644 = vxor.u32 %v4624, 2147483648
    %v4645 = vmul.f32 %v4627, 1.442695
    %v4646 = vpow.pop %v4645
    %v4647 = vmul.f32 %v4628, 1.442695
    %v4648 = vpow.pop %v4647
    %v4649 = vmul.f32 %v4629, 1.442695
    %v4650 = vpow.pop %v4649
    %v4651 = vmul.f32 %v4630, 1.442695
    %v4652 = vpow.pop %v4651
    %v4653 = vmul.f32 %v4631, 1.442695
    %v4654 = vpow.pop %v4653
    %v4655 = vmul.f32 %v4632, 1.442695
    %v4656 = vpow.pop %v4655
    %v4657 = vmul.f32 %v4633, 1.442695
    %v4658 = vpow.pop %v4657
    %v4659 = vmul.f32 %v4634, 1.442695
    %v4660 = vpow.pop %v4659
    %v4661 = vmul.f32 %v4635, 1.442695
    %v4662 = vpow.pop %v4661
    %v4663 = vmul.f32 %v4636, 1.442695
    %v4664 = vpow.pop %v4663
    %v4665 = vmul.f32 %v4637, 1.442695
    %v4666 = vpow.pop %v4665
    %v4667 = vmul.f32 %v4638, 1.442695
    %v4668 = vpow.pop %v4667
    %v4669 = vmul.f32 %v4639, 1.442695
    %v4670 = vpow.pop %v4669
    %v4671 = vmul.f32 %v4640, 1.442695
    %v4672 = vpow.pop %v4671
    %v4673 = vmul.f32 %v4641, 1.442695
    %v4674 = vpow.pop %v4673
    %v4675 = vmul.f32 %v4642, 1.442695
    %v4676 = vpow.pop %v4675
    %v4677 = vmul.f32 %v4643, 1.442695
    %v4678 = vpow.pop %v4677
    %v4679 = vmul.f32 %v4644, 1.442695
    %v4680 = vpow.pop %v4679
    %v4681 = vadd.f32 %v4646, 1.0
    %v4682 = vadd.f32 %v4648, 1.0
    %v4683 = vadd.f32 %v4650, 1.0
    %v4684 = vadd.f32 %v4652, 1.0
    %v4685 = vadd.f32 %v4654, 1.0
    %v4686 = vadd.f32 %v4656, 1.0
    %v4687 = vadd.f32 %v4658, 1.0
    %v4688 = vadd.f32 %v4660, 1.0
    %v4689 = vadd.f32 %v4662, 1.0
    %v4690 = vadd.f32 %v4664, 1.0
    %v4691 = vadd.f32 %v4666, 1.0
    %v4692 = vadd.f32 %v4668, 1.0
    %v4693 = vadd.f32 %v4670, 1.0
    %v4694 = vadd.f32 %v4672, 1.0
    %v4695 = vadd.f32 %v4674, 1.0
    %v4696 = vadd.f32 %v4676, 1.0
    %v4697 = vadd.f32 %v4678, 1.0
    %v4698 = vadd.f32 %v4680, 1.0
    %v4699 = vrcp.pop %v4681
    %v4700 = vmul.f32 1.0, %v4699
    %v4701 = vrcp.pop %v4682
    %v4702 = vmul.f32 1.0, %v4701
    %v4703 = vrcp.pop %v4683
    %v4704 = vmul.f32 1.0, %v4703
    %v4705 = vrcp.pop %v4684
    %v4706 = vmul.f32 1.0, %v4705
    %v4707 = vrcp.pop %v4685
    %v4708 = vmul.f32 1.0, %v4707
    %v4709 = vrcp.pop %v4686
    %v4710 = vmul.f32 1.0, %v4709
    %v4711 = vrcp.pop %v4687
    %v4712 = vmul.f32 1.0, %v4711
    %v4713 = vrcp.pop %v4688
    %v4714 = vmul.f32 1.0, %v4713
    %v4715 = vrcp.pop %v4689
    %v4716 = vmul.f32 1.0, %v4715
    %v4717 = vrcp.pop %v4690
    %v4718 = vmul.f32 1.0, %v4717
    %v4719 = vrcp.pop %v4691
    %v4720 = vmul.f32 1.0, %v4719
    %v4721 = vrcp.pop %v4692
    %v4722 = vmul.f32 1.0, %v4721
    %v4723 = vrcp.pop %v4693
    %v4724 = vmul.f32 1.0, %v4723
    %v4725 = vrcp.pop %v4694
    %v4726 = vmul.f32 1.0, %v4725
    %v4727 = vrcp.pop %v4695
    %v4728 = vmul.f32 1.0, %v4727
    %v4729 = vrcp.pop %v4696
    %v4730 = vmul.f32 1.0, %v4729
    %v4731 = vrcp.pop %v4697
    %v4732 = vmul.f32 1.0, %v4731
    %v4733 = vrcp.pop %v4698
    %v4734 = vmul.f32 1.0, %v4733
    %v4735 = vpack.c.bf16 %v4718, %v4700
    %v4736 = vpack.c.bf16 %v4720, %v4702
    %v4737 = vpack.c.bf16 %v4722, %v4704
    %v4738 = vpack.c.bf16 %v4724, %v4706
    %v4739 = vpack.c.bf16 %v4726, %v4708
    %v4740 = vpack.c.bf16 %v4728, %v4710
    %v4741 = vpack.c.bf16 %v4730, %v4712
    %v4742 = vpack.c.bf16 %v4732, %v4714
    %v4743 = vpack.c.bf16 %v4734, %v4716
    %v4753 = vunpack.c.l.b16 %v4735
    %v4754 = vunpack.c.l.b16 %v4736
    %v4755 = vunpack.c.l.b16 %v4737
    %v4756 = vunpack.c.l.b16 %v4738
    %v4757 = vunpack.c.l.b16 %v4739
    %v4758 = vunpack.c.l.b16 %v4740
    %v4759 = vunpack.c.l.b16 %v4741
    %v4760 = vunpack.c.l.b16 %v4742
    %v4761 = vunpack.c.l.b16 %v4743
    %v4762 = vunpack.c.h.b16 %v4735
    %v4763 = vunpack.c.h.b16 %v4736
    %v4764 = vunpack.c.h.b16 %v4737
    %v4765 = vunpack.c.h.b16 %v4738
    %v4766 = vunpack.c.h.b16 %v4739
    %v4767 = vunpack.c.h.b16 %v4740
    %v4768 = vunpack.c.h.b16 %v4741
    %v4769 = vunpack.c.h.b16 %v4742
    %v4770 = vunpack.c.h.b16 %v4743
    %v4771 = vpack.c.b16 %v4754, %v4753
    %v4772 = vpack.c.b16 %v4756, %v4755
    %v4773 = vpack.c.b16 %v4758, %v4757
    %v4774 = vpack.c.b16 %v4760, %v4759
    %v4775 = vpack.c.b16 %v4761, %v4761
    %v4776 = vpack.c.b16 %v4763, %v4762
    %v4777 = vpack.c.b16 %v4765, %v4764
    %v4778 = vpack.c.b16 %v4767, %v4766
    %v4779 = vpack.c.b16 %v4769, %v4768
    %v4780 = vpack.c.b16 %v4770, %v4770
    %4791 = vst [vmem:[%s5] sm:$0xff] %v4771
    %4792 = vst [vmem:[%s5 + $0x8] sm:$0xff] %v4772
    %4793 = vst [vmem:[%s5 + $0x10] sm:$0xff] %v4773
    %4794 = vst [vmem:[%s5 + $0x18] sm:$0xff] %v4774
    %4795 = vst [vmem:[%s5 + $0x20] sm:$0xf] %v4775
    %4796 = vst [vmem:[%s5 + $0x24] sm:$0xff] %v4776
    %4797 = vst [vmem:[%s5 + $0x2c] sm:$0xff] %v4777
    %4798 = vst [vmem:[%s5 + $0x34] sm:$0xff] %v4778
    %4799 = vst [vmem:[%s5 + $0x3c] sm:$0xff] %v4779
    %4800 = vst [vmem:[%s5 + $0x44] sm:$0xf] %v4780
    // Predicated region
    $region38: #{net_forward.1} parent=1 // pred_check
      _
    $region39: #{net_forward.1} parent=1 // pred_check_branch
      %4802 = sbr.rel (0) target = $region41
    $region40: #{net_forward.1} parent=1 // pred_region
      _
    $region41: #{net_forward.1} parent=1 // pred_fallthru
      _
    // Predicated region
    $region42: #{net_forward.1} parent=1 // pred_check
      _
    $region43: #{net_forward.1} parent=1 // pred_check_branch
      %4804 = sbr.rel (0) target = $region45
    $region44: #{net_forward.1} parent=1 // pred_region
      _
    $region45: #{net_forward.1} parent=1 // pred_fallthru
      _
    %4805 = vsyncpa [#allocation3], 1
    %4806 = vsyncpa [#allocation5], 1
    %4807 = vsyncpa [#allocation8], 1

</llo_original>
